<compile_context>
chip_gen: v7x
topology: tpu7x:2x2x1
jax: 0.10.0
libtpu: 0.0.40
codegen_flags: <defaults>
</compile_context>

<pallas_src>
import functools

import numpy as np
import jax
import jax.numpy as jnp
from jax.experimental import pallas as pl
from jax.experimental.pallas import tpu as pltpu

LEAKY_SLOPE = 0.01   # InPlaceABNSync default activation: leaky_relu, slope 0.01
BN_EPS = 1e-5
VMEM_LIMIT = 32 * 1024 * 1024   # explicit scoped-VMEM limit (v5e default is 16 MiB)


def _round_up(x, m):
    return ((x + m - 1) // m) * m


# ----------------------------------------------------------------------------
# Kernel A:  Y = leaky_relu( X @ W + b )     (conv1 1x1 + folded BN + ABN act)
# ----------------------------------------------------------------------------
def _conv1x1_bn_lrelu_kernel(x_ref, w_ref, b_ref, o_ref):
    acc = jnp.dot(x_ref[...], w_ref[...], preferred_element_type=jnp.float32)
    y = acc + b_ref[...]
    o_ref[...] = jnp.where(y >= 0.0, y, LEAKY_SLOPE * y).astype(o_ref.dtype)


def conv1x1_bn_lrelu(x2d, w_bf16, bias_f32, *, out_dtype=jnp.bfloat16):
    """Row-tiled 1x1-conv + folded-BN + leaky_relu (kernel A)."""
    m, k = x2d.shape
    cout = w_bf16.shape[1]
    tile_m = min(512, _round_up(m, 8))
    m_pad = _round_up(m, tile_m)
    x2d_p = x2d.astype(jnp.bfloat16)
    if m_pad != m:
        x2d_p = jnp.pad(x2d_p, ((0, m_pad - m), (0, 0)))
    cost = pl.CostEstimate(
        flops=int(2 * m_pad * k * cout),
        transcendentals=0,
        bytes_accessed=int(2 * m_pad * k + 2 * k * cout + 4 * cout + 2 * m_pad * cout),
    )
    out = pl.pallas_call(
        _conv1x1_bn_lrelu_kernel,
        out_shape=jax.ShapeDtypeStruct((m_pad, cout), out_dtype),
        grid_spec=pltpu.PrefetchScalarGridSpec(
            num_scalar_prefetch=0,
            grid=(m_pad // tile_m,),
            in_specs=[
                pl.BlockSpec((tile_m, k), lambda i: (i, 0)),   # X row tile
                pl.BlockSpec((k, cout), lambda i: (0, 0)),     # W (resident)
                pl.BlockSpec((1, cout), lambda i: (0, 0)),     # bias (resident)
            ],
            out_specs=pl.BlockSpec((tile_m, cout), lambda i: (i, 0)),
        ),
        compiler_params=pltpu.CompilerParams(
            dimension_semantics=("parallel",),
            vmem_limit_bytes=VMEM_LIMIT,
        ),
        cost_estimate=cost,
    )(x2d_p, w_bf16, bias_f32)
    return out[:m]


# ----------------------------------------------------------------------------
# Kernel B: fused bilinear upsample + decoder tail for one (batch, row-band).
#   xt   = bilinear_up(f1)[tile]            (built in VMEM, never in HBM)
#   h2   = lrelu(xl @ W2 + b2)                               (conv2, 256->48)
#   h3a  = lrelu(xt @ W3a_top + h2 @ W3a_bot + b3a)          (concat + conv3[0])
#   x    = lrelu(h3a @ W3b + b3b)                            (conv3[1])
#   seg  = x @ W4 + b4                                       (conv4, bias)
# ----------------------------------------------------------------------------
def _decoder_fused_kernel(f1_ref, cx_ref, xl_ref,
                          w2_ref, b2_ref,
                          w3a_t_ref, w3a_b_ref, b3a_ref,
                          w3b_ref, b3b_ref,
                          w4_ref, b4_ref,
                          x_out_ref, seg_out_ref,
                          xt_scr,
                          *, tile_h, w_pad, wt, ht, scale_y):
    t = pl.program_id(1)                       # row-band index within the batch
    cx = cx_ref[...]                           # (w_pad, wt) f32 x-interp matrix

    # --- fused bilinear upsample (align_corners=True) of the conv1 output ---
    # For each output image row: lerp the two contributing low-res rows (VPU),
    # then expand along width with a small f32 MXU matmul; store into the
    # per-tile VMEM scratch that feeds the channel matmuls below.
    for iy in range(tile_h):                   # static unroll (tile_h is small)
        y = t * tile_h + iy
        yf = y.astype(jnp.float32) * scale_y
        y0f = jnp.floor(yf)
        fy = yf - y0f
        y0 = jnp.clip(y0f.astype(jnp.int32), 0, ht - 1)
        y1 = jnp.minimum(y0 + 1, ht - 1)
        s0 = y0 * wt
        s1 = y1 * wt
        if wt % 8 == 0:
            s0 = pl.multiple_of(s0, 8)
            s1 = pl.multiple_of(s1, 8)
        top = f1_ref[pl.ds(s0, wt), :].astype(jnp.float32)    # (wt, C1)
        bot = f1_ref[pl.ds(s1, wt), :].astype(jnp.float32)
        row = top + fy * (bot - top)                           # y-lerp, f32
        row_up = jnp.dot(cx, row, preferred_element_type=jnp.float32)  # (w_pad, C1)
        xt_scr[iy * w_pad:(iy + 1) * w_pad, :] = row_up.astype(xt_scr.dtype)

    xt = xt_scr[...]                           # (TILE_M, C1) bf16
    xl = xl_ref[...]                           # (TILE_M, CL) bf16

    # conv2 on the low-level features (C2 = 48 on purpose NOT padded to 128)
    a2 = jnp.dot(xl, w2_ref[...], preferred_element_type=jnp.float32) + b2_ref[...]
    h2 = jnp.where(a2 >= 0.0, a2, LEAKY_SLOPE * a2)

    # conv3 first 1x1, with the channel concat folded into a split-K sum
    a3 = jnp.dot(xt, w3a_t_ref[...], preferred_element_type=jnp.float32)
    a3 = a3 + jnp.dot(h2.astype(w3a_b_ref.dtype), w3a_b_ref[...],
                      preferred_element_type=jnp.float32)
    a3 = a3 + b3a_ref[...]
    h3a = jnp.where(a3 >= 0.0, a3, LEAKY_SLOPE * a3)

    # conv3 second 1x1
    a3b = jnp.dot(h3a.astype(w3b_ref.dtype), w3b_ref[...],
                  preferred_element_type=jnp.float32) + b3b_ref[...]
    h3b = jnp.where(a3b >= 0.0, a3b, LEAKY_SLOPE * a3b)
    x_out_ref[...] = h3b.astype(x_out_ref.dtype)

    # conv4: seg logits (bias, no activation); Cout padded to 128 lanes
    seg = jnp.dot(h3b.astype(w4_ref.dtype), w4_ref[...],
                  preferred_element_type=jnp.float32) + b4_ref[...]
    seg_out_ref[...] = seg.astype(seg_out_ref.dtype)


# ----------------------------------------------------------------------------
# Host-side interpolation tables (static, built from shapes only)
# ----------------------------------------------------------------------------
def _axis_lerp_table(out_size, in_size, out_pad):
    if out_size > 1 and in_size > 1:
        src = np.arange(out_pad, dtype=np.float64) * ((in_size - 1) / (out_size - 1))
    else:
        src = np.zeros((out_pad,), dtype=np.float64)
    src = np.clip(src, 0.0, in_size - 1)
    i0 = np.clip(np.floor(src).astype(np.int64), 0, in_size - 1)
    i1 = np.minimum(i0 + 1, in_size - 1)
    f = src - i0
    return i0, i1, f


def _build_cx_matrix(w, wt, w_pad):
    """Dense (w_pad, wt) align_corners=True x-interpolation matrix."""
    x0, x1, fx = _axis_lerp_table(w, wt, w_pad)
    cx = np.zeros((w_pad, wt), dtype=np.float32)
    rows = np.arange(w_pad)
    cx[rows, x0] += (1.0 - fx)
    cx[rows, x1] += fx
    return jnp.asarray(cx)


# ----------------------------------------------------------------------------
# Bilinear upsample in plain JAX (reference only; the kernel fuses its own)
# ----------------------------------------------------------------------------
def bilinear_resize_align_corners(x_nhwc, out_h, out_w):
    n, in_h, in_w, c = x_nhwc.shape
    xf = x_nhwc.astype(jnp.float32)

    def axis_coords(out_size, in_size):
        if out_size > 1 and in_size > 1:
            src = jnp.arange(out_size, dtype=jnp.float32) * ((in_size - 1) / (out_size - 1))
        else:
            src = jnp.zeros((out_size,), jnp.float32)
        i0 = jnp.clip(jnp.floor(src).astype(jnp.int32), 0, in_size - 1)
        i1 = jnp.minimum(i0 + 1, in_size - 1)
        f = src - i0.astype(jnp.float32)
        return i0, i1, f

    y0, y1, fy = axis_coords(out_h, in_h)
    x0, x1, fx = axis_coords(out_w, in_w)
    rows = (jnp.take(xf, y0, axis=1) * (1.0 - fy)[None, :, None, None]
            + jnp.take(xf, y1, axis=1) * fy[None, :, None, None])
    out = (jnp.take(rows, x0, axis=2) * (1.0 - fx)[None, None, :, None]
           + jnp.take(rows, x1, axis=2) * fx[None, None, :, None])
    return out


# ----------------------------------------------------------------------------
# Parameter initialization (deterministic, synthetic).  BN scale folded into
# the weights (bf16); biases kept in f32.
# ----------------------------------------------------------------------------
def _folded_bn(key, c):
    k0, k1, k2, k3 = jax.random.split(key, 4)
    gamma = 1.0 + 0.1 * jax.random.normal(k0, (c,), jnp.float32)
    beta = 0.05 * jax.random.normal(k1, (c,), jnp.float32)
    mean = 0.1 * jax.random.normal(k2, (c,), jnp.float32)
    var = jnp.abs(jax.random.normal(k3, (c,), jnp.float32)) + 0.5
    scale = gamma / jnp.sqrt(var + BN_EPS)
    bias = beta - mean * scale
    return scale, bias


def init_decoder_params(key, num_classes):
    ks = jax.random.split(key, 10)
    p = {}

    def conv_bn(kw, kb, cin, cout):
        w = 0.05 * jax.random.normal(kw, (cin, cout), jnp.float32)
        s, b = _folded_bn(kb, cout)
        return (w * s[None, :]).astype(jnp.bfloat16), b.reshape(1, cout).astype(jnp.float32)

    p["w1"], p["b1"] = conv_bn(ks[0], ks[1], 512, 256)      # conv1: 512 -> 256
    p["w2"], p["b2"] = conv_bn(ks[2], ks[3], 256, 48)       # conv2: 256 -> 48
    w3a, p["b3a"] = conv_bn(ks[4], ks[5], 304, 256)         # conv3[0]: 304 -> 256
    p["w3a_top"] = w3a[:256]   # multiplies the upsampled conv1(xt) part of the concat
    p["w3a_bot"] = w3a[256:]   # multiplies the conv2(xl) part (48 channels)
    p["w3b"], p["b3b"] = conv_bn(ks[6], ks[7], 256, 256)    # conv3[1]: 256 -> 256
    # conv4: 256 -> num_classes, bias, no BN / activation; pad Cout to 128 lanes
    c4p = _round_up(num_classes, 128)
    w4 = 0.05 * jax.random.normal(ks[8], (256, num_classes), jnp.float32)
    b4 = 0.05 * jax.random.normal(ks[9], (num_classes,), jnp.float32)
    p["w4"] = jnp.zeros((256, c4p), jnp.bfloat16).at[:, :num_classes].set(
        w4.astype(jnp.bfloat16))
    p["b4"] = jnp.zeros((1, c4p), jnp.float32).at[0, :num_classes].set(b4)
    return p


# ----------------------------------------------------------------------------
# Forward pass (mirrors Decoder_Module.forward):  returns (seg, x)
# ----------------------------------------------------------------------------
@functools.partial(jax.jit, static_argnames=("num_classes",))
def decoder_forward(xt_nchw, xl_nchw, params, *, num_classes):
    xt = jnp.transpose(xt_nchw, (0, 2, 3, 1))   # NCHW -> NHWC
    xl = jnp.transpose(xl_nchw, (0, 2, 3, 1))
    n, ht, wt, ct = xt.shape
    _, h, w, cl = xl.shape
    c1 = params["w1"].shape[1]     # 256
    c2 = params["w2"].shape[1]     # 48
    c3 = params["w3b"].shape[1]    # 256
    c4p = params["w4"].shape[1]    # num_classes padded to 128 lanes

    # --- kernel A: conv1 + folded BN + leaky_relu at xt's low resolution -----
    f1 = conv1x1_bn_lrelu(xt.reshape(n * ht * wt, ct), params["w1"], params["b1"])
    f1 = f1.reshape(n, ht * wt, c1)             # bf16, stays low-res in HBM

    # --- tiling for the fused decoder-tail kernel ----------------------------
    w_pad = _round_up(w, 8)
    tile_h = min(h, 32, max(1, 1024 // w_pad))  # target ~1k-row tiles, whole rows
    while tile_h > 1 and _round_up(h, tile_h) // tile_h < 2:
        tile_h //= 2                            # keep >= 2 row-band steps (v7x: 2 TCs)
    h_pad = _round_up(h, tile_h)
    n_ytiles = h_pad // tile_h
    tile_m = tile_h * w_pad

    xl_p = jnp.pad(xl.astype(jnp.bfloat16),
                   ((0, 0), (0, h_pad - h), (0, w_pad - w), (0, 0)))
    xl2d = xl_p.reshape(n * h_pad * w_pad, cl)

    cx = _build_cx_matrix(w, wt, w_pad)                      # (w_pad, wt) f32
    scale_y = float(ht - 1) / float(h - 1) if (h > 1 and ht > 1) else 0.0

    m_total = n * h_pad * w_pad
    per_row_flops = 2 * (c1 * c3 + cl * c2 + c2 * c3 + c3 * c3 + c3 * c4p)
    interp_flops = n * h_pad * (4 * wt * c1 + 2 * w_pad * wt * c1)
    cost = pl.CostEstimate(
        flops=int(m_total * per_row_flops + interp_flops),
        transcendentals=0,
        bytes_accessed=int(2 * (n * ht * wt * c1 + m_total * cl
                                + m_total * c3 + m_total * c4p)
                           + 2 * (c1 * c3 + cl * c2 + c2 * c3 + c3 * c3 + c3 * c4p)),
    )

    kernel = functools.partial(_decoder_fused_kernel,
                               tile_h=tile_h, w_pad=w_pad, wt=wt, ht=ht,
                               scale_y=scale_y)

    x_out, seg_out = pl.pallas_call(
        kernel,
        out_shape=(jax.ShapeDtypeStruct((m_total, c3), jnp.bfloat16),
                   jax.ShapeDtypeStruct((m_total, c4p), jnp.bfloat16)),
        grid_spec=pltpu.PrefetchScalarGridSpec(
            num_scalar_prefetch=0,
            grid=(n, n_ytiles),
            in_specs=[
                # low-res conv1 output: per-batch resident block (re-DMA'd only
                # when the batch index changes) -- the upsample is done in VMEM.
                pl.BlockSpec((None, ht * wt, c1), lambda b, t: (b, 0, 0)),
                pl.BlockSpec((w_pad, wt), lambda b, t: (0, 0)),              # Cx
                pl.BlockSpec((tile_m, cl), lambda b, t: (b * n_ytiles + t, 0)),  # xl tile
                pl.BlockSpec((cl, c2), lambda b, t: (0, 0)),                 # W2
                pl.BlockSpec((1, c2), lambda b, t: (0, 0)),                  # b2
                pl.BlockSpec((c1, c3), lambda b, t: (0, 0)),                 # W3a_top
                pl.BlockSpec((c2, c3), lambda b, t: (0, 0)),                 # W3a_bot
                pl.BlockSpec((1, c3), lambda b, t: (0, 0)),                  # b3a
                pl.BlockSpec((c3, c3), lambda b, t: (0, 0)),                 # W3b
                pl.BlockSpec((1, c3), lambda b, t: (0, 0)),                  # b3b
                pl.BlockSpec((c3, c4p), lambda b, t: (0, 0)),                # W4 (padded)
                pl.BlockSpec((1, c4p), lambda b, t: (0, 0)),                 # b4 (padded)
            ],
            out_specs=[
                pl.BlockSpec((tile_m, c3), lambda b, t: (b * n_ytiles + t, 0)),
                pl.BlockSpec((tile_m, c4p), lambda b, t: (b * n_ytiles + t, 0)),
            ],
            scratch_shapes=[pltpu.VMEM((tile_m, c1), jnp.bfloat16)],  # xt tile
        ),
        compiler_params=pltpu.CompilerParams(
            dimension_semantics=("parallel", "parallel"),
            vmem_limit_bytes=VMEM_LIMIT,
        ),
        cost_estimate=cost,
    )(f1, cx, xl2d,
      params["w2"], params["b2"],
      params["w3a_top"], params["w3a_bot"], params["b3a"],
      params["w3b"], params["b3b"],
      params["w4"], params["b4"])

    x_feat = x_out.reshape(n, h_pad, w_pad, c3)[:, :h, :w, :]
    seg = seg_out.reshape(n, h_pad, w_pad, c4p)[:, :h, :w, :num_classes]
    # NOTE: NCHW is returned to match the PyTorch module; at production scale
    # prefer keeping NHWC (saves two full HBM passes in the consumer).
    return (jnp.transpose(seg, (0, 3, 1, 2)).astype(jnp.float32),
            jnp.transpose(x_feat, (0, 3, 1, 2)).astype(jnp.float32))


# ----------------------------------------------------------------------------
# Pure-JAX f32 reference (same folded params) for a correctness sanity check.
# ----------------------------------------------------------------------------
def _reference_forward(xt_nchw, xl_nchw, params, num_classes):
    def lrelu(v):
        return jnp.where(v >= 0.0, v, LEAKY_SLOPE * v)

    xt = jnp.transpose(xt_nchw, (0, 2, 3, 1)).astype(jnp.float32)
    xl = jnp.transpose(xl_nchw, (0, 2, 3, 1)).astype(jnp.float32)
    n, ht, wt, ct = xt.shape
    _, h, w, cl = xl.shape

    f1 = lrelu(xt.reshape(-1, ct) @ params["w1"].astype(jnp.float32) + params["b1"])
    f1 = f1.reshape(n, ht, wt, -1)
    xt_up = bilinear_resize_align_corners(f1, h, w).reshape(n * h * w, -1)

    h2 = lrelu(xl.reshape(-1, cl) @ params["w2"].astype(jnp.float32) + params["b2"])
    a3 = (xt_up @ params["w3a_top"].astype(jnp.float32)
          + h2 @ params["w3a_bot"].astype(jnp.float32) + params["b3a"])
    h3a = lrelu(a3)
    h3b = lrelu(h3a @ params["w3b"].astype(jnp.float32) + params["b3b"])
    seg = (h3b @ params["w4"].astype(jnp.float32) + params["b4"])[:, :num_classes]

    x_feat = h3b.reshape(n, h, w, -1)
    seg = seg.reshape(n, h, w, num_classes)
    return jnp.transpose(seg, (0, 3, 1, 2)), jnp.transpose(x_feat, (0, 3, 1, 2))


if __name__ == "__main__":
    # Channel counts are fixed by the module (xt: 512, xl: 256); spatial kept small.
    num_classes = 7
    batch = 2
    ht, wt = 8, 8        # xt (high-level features, low resolution)
    h, w = 16, 16        # xl (low-level features, target resolution)

    key = jax.random.PRNGKey(0)
    kxt, kxl, kp = jax.random.split(key, 3)
    xt = jax.random.normal(kxt, (batch, 512, ht, wt), jnp.float32)   # NCHW like PyTorch
    xl = jax.random.normal(kxl, (batch, 256, h, w), jnp.float32)
    params = init_decoder_params(kp, num_classes)

    seg, x_feat = decoder_forward(xt, xl, params, num_classes=num_classes)
    seg, x_feat = jax.block_until_ready((seg, x_feat))

    assert seg.shape == (batch, num_classes, h, w), seg.shape
    assert x_feat.shape == (batch, 256, h, w), x_feat.shape
    assert bool(jnp.all(jnp.isfinite(seg))) and bool(jnp.all(jnp.isfinite(x_feat)))

    # Loose-tolerance check against the f32 reference (bf16 MXU operands / outputs).
    seg_ref, x_ref = _reference_forward(xt, xl, params, num_classes)
    err = max(float(jnp.max(jnp.abs(seg - seg_ref))),
              float(jnp.max(jnp.abs(x_feat - x_ref))))
    assert err < 0.25, f"max abs error vs reference: {err}"

    # TODO(synk): InPlaceABNSync train-mode batch statistics / cross-replica sync
    # are not modeled; inference semantics only (folded BN + leaky_relu(0.01)).
    print("KERNEL_OK")
</pallas_src>

<mosaic_0001>
module attributes {stable_mosaic.version = 11 : i64} {
  func.func @_conv1x1_bn_lrelu_kernel(%arg0: i32, %arg1: memref<128x512xbf16, #tpu.memory_space<vmem>>, %arg2: memref<512x256xbf16, #tpu.memory_space<vmem>>, %arg3: memref<1x256xf32, #tpu.memory_space<vmem>>, %arg4: memref<128x256xbf16, #tpu.memory_space<vmem>>) attributes {dimension_semantics = [#tpu.dimension_semantics<parallel>], iteration_bounds = array<i64: 1>, scalar_prefetch = 0 : i64, scratch_operands = 0 : i64, tpu.core_type = #tpu.core_type<tc>, window_params = [{transform_indices = @transform_0, window_bounds = array<i64: 128, 512>}, {pipeline_mode = #tpu.pipeline_mode<synchronous>, transform_indices = @transform_1, window_bounds = array<i64: 512, 256>}, {pipeline_mode = #tpu.pipeline_mode<synchronous>, transform_indices = @transform_2, window_bounds = array<i64: 1, 256>}, {transform_indices = @transform_3, window_bounds = array<i64: 128, 256>}]} {
    %c0 = arith.constant 0 : index
    %c0_0 = arith.constant 0 : index
    %0 = vector.load %arg1[%c0, %c0_0] : memref<128x512xbf16, #tpu.memory_space<vmem>>, vector<128x512xbf16>
    %c0_1 = arith.constant 0 : index
    %c0_2 = arith.constant 0 : index
    %1 = vector.load %arg2[%c0_1, %c0_2] : memref<512x256xbf16, #tpu.memory_space<vmem>>, vector<512x256xbf16>
    %cst = arith.constant dense<0.000000e+00> : vector<128x256xf32>
    %2 = tpu.matmul %0, %1, %cst {dimension_numbers = #tpu.dot_dimension_numbers<[1], [0], [0], [1], [0, 0, 1, 1], [], []>} : vector<128x512xbf16>, vector<512x256xbf16>, vector<128x256xf32> -> vector<128x256xf32>
    %c0_3 = arith.constant 0 : index
    %c0_4 = arith.constant 0 : index
    %3 = vector.load %arg3[%c0_3, %c0_4] : memref<1x256xf32, #tpu.memory_space<vmem>>, vector<1x256xf32>
    %4 = vector.broadcast %3 : vector<1x256xf32> to vector<128x256xf32>
    %5 = arith.addf %2, %4 : vector<128x256xf32>
    %cst_5 = arith.constant 0.000000e+00 : f32
    %6 = vector.broadcast %cst_5 : f32 to vector<128x256xf32>
    %7 = arith.cmpf oge, %5, %6 : vector<128x256xf32>
    %cst_6 = arith.constant 0.00999999977 : f32
    %8 = vector.broadcast %cst_6 : f32 to vector<128x256xf32>
    %9 = arith.mulf %8, %5 : vector<128x256xf32>
    %10 = arith.select %7, %5, %9 : vector<128x256xi1>, vector<128x256xf32>
    %11 = arith.truncf %10 : vector<128x256xf32> to vector<128x256xbf16>
    %c0_7 = arith.constant 0 : index
    %c0_8 = arith.constant 0 : index
    %12 = vector.load %arg4[%c0_7, %c0_8] : memref<128x256xbf16, #tpu.memory_space<vmem>>, vector<128x256xbf16>
    tpu.vector_store %arg4[%c0_7, %c0_8], %11 {strides = array<i32>} : memref<128x256xbf16, #tpu.memory_space<vmem>>, vector<128x256xbf16>,
    return
  }
  func.func @transform_0(%arg0: i32) -> (i32, i32) {
    %c0_i32 = arith.constant 0 : i32
    %c0_i32_0 = arith.constant 0 : i32
    return %arg0, %c0_i32 : i32, i32
  }
  func.func @transform_1(%arg0: i32) -> (i32, i32) {
    %c0_i32 = arith.constant 0 : i32
    %c0_i32_0 = arith.constant 0 : i32
    %c0_i32_1 = arith.constant 0 : i32
    return %c0_i32, %c0_i32_0 : i32, i32
  }
  func.func @transform_2(%arg0: i32) -> (i32, i32) {
    %c0_i32 = arith.constant 0 : i32
    %c0_i32_0 = arith.constant 0 : i32
    %c0_i32_1 = arith.constant 0 : i32
    return %c0_i32, %c0_i32_0 : i32, i32
  }
  func.func @transform_3(%arg0: i32) -> (i32, i32) {
    %c0_i32 = arith.constant 0 : i32
    %c0_i32_0 = arith.constant 0 : i32
    return %arg0, %c0_i32 : i32, i32
  }
}

module attributes {stable_mosaic.version = 11 : i64} {
  func.func @_decoder_fused_kernel(%arg0: i32, %arg1: i32, %arg2: memref<1x64x256xbf16, #tpu.memory_space<vmem>>, %arg3: memref<16x8xf32, #tpu.memory_space<vmem>>, %arg4: memref<128x256xbf16, #tpu.memory_space<vmem>>, %arg5: memref<256x48xbf16, #tpu.memory_space<vmem>>, %arg6: memref<1x48xf32, #tpu.memory_space<vmem>>, %arg7: memref<256x256xbf16, #tpu.memory_space<vmem>>, %arg8: memref<48x256xbf16, #tpu.memory_space<vmem>>, %arg9: memref<1x256xf32, #tpu.memory_space<vmem>>, %arg10: memref<256x256xbf16, #tpu.memory_space<vmem>>, %arg11: memref<1x256xf32, #tpu.memory_space<vmem>>, %arg12: memref<256x128xbf16, #tpu.memory_space<vmem>>, %arg13: memref<1x128xf32, #tpu.memory_space<vmem>>, %arg14: memref<128x256xbf16, #tpu.memory_space<vmem>>, %arg15: memref<128x128xbf16, #tpu.memory_space<vmem>>, %arg16: memref<128x256xbf16, #tpu.memory_space<vmem>>) attributes {dimension_semantics = [#tpu.dimension_semantics<parallel>, #tpu.dimension_semantics<parallel>], iteration_bounds = array<i64: 2, 2>, scalar_prefetch = 0 : i64, scratch_operands = 1 : i64, tpu.core_type = #tpu.core_type<tc>, window_params = [{transform_indices = @transform_0, window_bounds = array<i64: 1, 64, 256>}, {pipeline_mode = #tpu.pipeline_mode<synchronous>, transform_indices = @transform_1, window_bounds = array<i64: 16, 8>}, {transform_indices = @transform_2, window_bounds = array<i64: 128, 256>}, {pipeline_mode = #tpu.pipeline_mode<synchronous>, transform_indices = @transform_3, window_bounds = array<i64: 256, 48>}, {pipeline_mode = #tpu.pipeline_mode<synchronous>, transform_indices = @transform_4, window_bounds = array<i64: 1, 48>}, {pipeline_mode = #tpu.pipeline_mode<synchronous>, transform_indices = @transform_5, window_bounds = array<i64: 256, 256>}, {pipeline_mode = #tpu.pipeline_mode<synchronous>, transform_indices = @transform_6, window_bounds = array<i64: 48, 256>}, {pipeline_mode = #tpu.pipeline_mode<synchronous>, transform_indices = @transform_7, window_bounds = array<i64: 1, 256>}, {pipeline_mode = #tpu.pipeline_mode<synchronous>, transform_indices = @transform_8, window_bounds = array<i64: 256, 256>}, {pipeline_mode = #tpu.pipeline_mode<synchronous>, transform_indices = @transform_9, window_bounds = array<i64: 1, 256>}, {pipeline_mode = #tpu.pipeline_mode<synchronous>, transform_indices = @transform_10, window_bounds = array<i64: 256, 128>}, {pipeline_mode = #tpu.pipeline_mode<synchronous>, transform_indices = @transform_11, window_bounds = array<i64: 1, 128>}, {transform_indices = @transform_12, window_bounds = array<i64: 128, 256>}, {transform_indices = @transform_13, window_bounds = array<i64: 128, 128>}]} {
    %c0 = arith.constant 0 : index
    %c0_0 = arith.constant 0 : index
    %0 = vector.load %arg3[%c0, %c0_0] : memref<16x8xf32, #tpu.memory_space<vmem>>, vector<16x8xf32>
    %c8_i32 = arith.constant 8 : i32
    %1 = arith.muli %arg1, %c8_i32 : i32
    %c0_i32 = arith.constant 0 : i32
    %2 = arith.addi %1, %c0_i32 : i32
    %3 = arith.sitofp %2 : i32 to f32
    %cst = arith.constant 0.466666669 : f32
    %4 = arith.mulf %3, %cst : f32
    %5 = math.floor %4 : f32
    %6 = arith.subf %4, %5 : f32
    %7 = arith.fptosi %5 : f32 to i32
    %c0_i32_1 = arith.constant 0 : i32
    %c7_i32 = arith.constant 7 : i32
    %8 = arith.maxsi %c0_i32_1, %7 : i32
    %9 = arith.minsi %c7_i32, %8 : i32
    %c1_i32 = arith.constant 1 : i32
    %10 = arith.addi %9, %c1_i32 : i32
    %c7_i32_2 = arith.constant 7 : i32
    %11 = arith.minsi %10, %c7_i32_2 : i32
    %c8_i32_3 = arith.constant 8 : i32
    %12 = arith.muli %9, %c8_i32_3 : i32
    %c8_i32_4 = arith.constant 8 : i32
    %13 = arith.muli %11, %c8_i32_4 : i32
    %14 = tpu.assume_multiple %12, 8 : i32
    %15 = tpu.assume_multiple %13, 8 : i32
    %c0_5 = arith.constant 0 : index
    %16 = arith.index_cast %14 : i32 to index
    %c0_6 = arith.constant 0 : index
    %17 = vector.load %arg2[%c0_5, %16, %c0_6] : memref<1x64x256xbf16, #tpu.memory_space<vmem>>, vector<1x8x256xbf16>
    %18 = vector.shape_cast %17 : vector<1x8x256xbf16> to vector<8x256xbf16>
    %19 = arith.extf %18 : vector<8x256xbf16> to vector<8x256xf32>
    %c0_7 = arith.constant 0 : index
    %20 = arith.index_cast %15 : i32 to index
    %c0_8 = arith.constant 0 : index
    %21 = vector.load %arg2[%c0_7, %20, %c0_8] : memref<1x64x256xbf16, #tpu.memory_space<vmem>>, vector<1x8x256xbf16>
    %22 = vector.shape_cast %21 : vector<1x8x256xbf16> to vector<8x256xbf16>
    %23 = arith.extf %22 : vector<8x256xbf16> to vector<8x256xf32>
    %24 = arith.subf %23, %19 : vector<8x256xf32>
    %25 = vector.broadcast %6 : f32 to vector<8x256xf32>
    %26 = arith.mulf %25, %24 : vector<8x256xf32>
    %27 = arith.addf %19, %26 : vector<8x256xf32>
    %cst_9 = arith.constant dense<0.000000e+00> : vector<16x256xf32>
    %28 = tpu.matmul %0, %27, %cst_9 {dimension_numbers = #tpu.dot_dimension_numbers<[1], [0], [0], [1], [0, 0, 1, 1], [], []>} : vector<16x8xf32>, vector<8x256xf32>, vector<16x256xf32> -> vector<16x256xf32>
    %29 = arith.truncf %28 : vector<16x256xf32> to vector<16x256xbf16>
    %c0_10 = arith.constant 0 : index
    %c0_11 = arith.constant 0 : index
    %30 = vector.load %arg16[%c0_10, %c0_11] : memref<128x256xbf16, #tpu.memory_space<vmem>>, vector<16x256xbf16>
    tpu.vector_store %arg16[%c0_10, %c0_11], %29 {strides = array<i32>} : memref<128x256xbf16, #tpu.memory_space<vmem>>, vector<16x256xbf16>,
    %c8_i32_12 = arith.constant 8 : i32
    %31 = arith.muli %arg1, %c8_i32_12 : i32
    %c1_i32_13 = arith.constant 1 : i32
    %32 = arith.addi %31, %c1_i32_13 : i32
    %33 = arith.sitofp %32 : i32 to f32
    %cst_14 = arith.constant 0.466666669 : f32
    %34 = arith.mulf %33, %cst_14 : f32
    %35 = math.floor %34 : f32
    %36 = arith.subf %34, %35 : f32
    %37 = arith.fptosi %35 : f32 to i32
    %c0_i32_15 = arith.constant 0 : i32
    %c7_i32_16 = arith.constant 7 : i32
    %38 = arith.maxsi %c0_i32_15, %37 : i32
    %39 = arith.minsi %c7_i32_16, %38 : i32
    %c1_i32_17 = arith.constant 1 : i32
    %40 = arith.addi %39, %c1_i32_17 : i32
    %c7_i32_18 = arith.constant 7 : i32
    %41 = arith.minsi %40, %c7_i32_18 : i32
    %c8_i32_19 = arith.constant 8 : i32
    %42 = arith.muli %39, %c8_i32_19 : i32
    %c8_i32_20 = arith.constant 8 : i32
    %43 = arith.muli %41, %c8_i32_20 : i32
    %44 = tpu.assume_multiple %42, 8 : i32
    %45 = tpu.assume_multiple %43, 8 : i32
    %c0_21 = arith.constant 0 : index
    %46 = arith.index_cast %44 : i32 to index
    %c0_22 = arith.constant 0 : index
    %47 = vector.load %arg2[%c0_21, %46, %c0_22] : memref<1x64x256xbf16, #tpu.memory_space<vmem>>, vector<1x8x256xbf16>
    %48 = vector.shape_cast %47 : vector<1x8x256xbf16> to vector<8x256xbf16>
    %49 = arith.extf %48 : vector<8x256xbf16> to vector<8x256xf32>
    %c0_23 = arith.constant 0 : index
    %50 = arith.index_cast %45 : i32 to index
    %c0_24 = arith.constant 0 : index
    %51 = vector.load %arg2[%c0_23, %50, %c0_24] : memref<1x64x256xbf16, #tpu.memory_space<vmem>>, vector<1x8x256xbf16>
    %52 = vector.shape_cast %51 : vector<1x8x256xbf16> to vector<8x256xbf16>
    %53 = arith.extf %52 : vector<8x256xbf16> to vector<8x256xf32>
    %54 = arith.subf %53, %49 : vector<8x256xf32>
    %55 = vector.broadcast %36 : f32 to vector<8x256xf32>
    %56 = arith.mulf %55, %54 : vector<8x256xf32>
    %57 = arith.addf %49, %56 : vector<8x256xf32>
    %cst_25 = arith.constant dense<0.000000e+00> : vector<16x256xf32>
    %58 = tpu.matmul %0, %57, %cst_25 {dimension_numbers = #tpu.dot_dimension_numbers<[1], [0], [0], [1], [0, 0, 1, 1], [], []>} : vector<16x8xf32>, vector<8x256xf32>, vector<16x256xf32> -> vector<16x256xf32>
    %59 = arith.truncf %58 : vector<16x256xf32> to vector<16x256xbf16>
    %c16 = arith.constant 16 : index
    %c0_26 = arith.constant 0 : index
    %60 = vector.load %arg16[%c16, %c0_26] : memref<128x256xbf16, #tpu.memory_space<vmem>>, vector<16x256xbf16>
    tpu.vector_store %arg16[%c16, %c0_26], %59 {strides = array<i32>} : memref<128x256xbf16, #tpu.memory_space<vmem>>, vector<16x256xbf16>,
    %c8_i32_27 = arith.constant 8 : i32
    %61 = arith.muli %arg1, %c8_i32_27 : i32
    %c2_i32 = arith.constant 2 : i32
    %62 = arith.addi %61, %c2_i32 : i32
    %63 = arith.sitofp %62 : i32 to f32
    %cst_28 = arith.constant 0.466666669 : f32
    %64 = arith.mulf %63, %cst_28 : f32
    %65 = math.floor %64 : f32
    %66 = arith.subf %64, %65 : f32
    %67 = arith.fptosi %65 : f32 to i32
    %c0_i32_29 = arith.constant 0 : i32
    %c7_i32_30 = arith.constant 7 : i32
    %68 = arith.maxsi %c0_i32_29, %67 : i32
    %69 = arith.minsi %c7_i32_30, %68 : i32
    %c1_i32_31 = arith.constant 1 : i32
    %70 = arith.addi %69, %c1_i32_31 : i32
    %c7_i32_32 = arith.constant 7 : i32
    %71 = arith.minsi %70, %c7_i32_32 : i32
    %c8_i32_33 = arith.constant 8 : i32
    %72 = arith.muli %69, %c8_i32_33 : i32
    %c8_i32_34 = arith.constant 8 : i32
    %73 = arith.muli %71, %c8_i32_34 : i32
    %74 = tpu.assume_multiple %72, 8 : i32
    %75 = tpu.assume_multiple %73, 8 : i32
    %c0_35 = arith.constant 0 : index
    %76 = arith.index_cast %74 : i32 to index
    %c0_36 = arith.constant 0 : index
    %77 = vector.load %arg2[%c0_35, %76, %c0_36] : memref<1x64x256xbf16, #tpu.memory_space<vmem>>, vector<1x8x256xbf16>
    %78 = vector.shape_cast %77 : vector<1x8x256xbf16> to vector<8x256xbf16>
    %79 = arith.extf %78 : vector<8x256xbf16> to vector<8x256xf32>
    %c0_37 = arith.constant 0 : index
    %80 = arith.index_cast %75 : i32 to index
    %c0_38 = arith.constant 0 : index
    %81 = vector.load %arg2[%c0_37, %80, %c0_38] : memref<1x64x256xbf16, #tpu.memory_space<vmem>>, vector<1x8x256xbf16>
    %82 = vector.shape_cast %81 : vector<1x8x256xbf16> to vector<8x256xbf16>
    %83 = arith.extf %82 : vector<8x256xbf16> to vector<8x256xf32>
    %84 = arith.subf %83, %79 : vector<8x256xf32>
    %85 = vector.broadcast %66 : f32 to vector<8x256xf32>
    %86 = arith.mulf %85, %84 : vector<8x256xf32>
    %87 = arith.addf %79, %86 : vector<8x256xf32>
    %cst_39 = arith.constant dense<0.000000e+00> : vector<16x256xf32>
    %88 = tpu.matmul %0, %87, %cst_39 {dimension_numbers = #tpu.dot_dimension_numbers<[1], [0], [0], [1], [0, 0, 1, 1], [], []>} : vector<16x8xf32>, vector<8x256xf32>, vector<16x256xf32> -> vector<16x256xf32>
    %89 = arith.truncf %88 : vector<16x256xf32> to vector<16x256xbf16>
    %c32 = arith.constant 32 : index
    %c0_40 = arith.constant 0 : index
    %90 = vector.load %arg16[%c32, %c0_40] : memref<128x256xbf16, #tpu.memory_space<vmem>>, vector<16x256xbf16>
    tpu.vector_store %arg16[%c32, %c0_40], %89 {strides = array<i32>} : memref<128x256xbf16, #tpu.memory_space<vmem>>, vector<16x256xbf16>,
    %c8_i32_41 = arith.constant 8 : i32
    %91 = arith.muli %arg1, %c8_i32_41 : i32
    %c3_i32 = arith.constant 3 : i32
    %92 = arith.addi %91, %c3_i32 : i32
    %93 = arith.sitofp %92 : i32 to f32
    %cst_42 = arith.constant 0.466666669 : f32
    %94 = arith.mulf %93, %cst_42 : f32
    %95 = math.floor %94 : f32
    %96 = arith.subf %94, %95 : f32
    %97 = arith.fptosi %95 : f32 to i32
    %c0_i32_43 = arith.constant 0 : i32
    %c7_i32_44 = arith.constant 7 : i32
    %98 = arith.maxsi %c0_i32_43, %97 : i32
    %99 = arith.minsi %c7_i32_44, %98 : i32
    %c1_i32_45 = arith.constant 1 : i32
    %100 = arith.addi %99, %c1_i32_45 : i32
    %c7_i32_46 = arith.constant 7 : i32
    %101 = arith.minsi %100, %c7_i32_46 : i32
    %c8_i32_47 = arith.constant 8 : i32
    %102 = arith.muli %99, %c8_i32_47 : i32
    %c8_i32_48 = arith.constant 8 : i32
    %103 = arith.muli %101, %c8_i32_48 : i32
    %104 = tpu.assume_multiple %102, 8 : i32
    %105 = tpu.assume_multiple %103, 8 : i32
    %c0_49 = arith.constant 0 : index
    %106 = arith.index_cast %104 : i32 to index
    %c0_50 = arith.constant 0 : index
    %107 = vector.load %arg2[%c0_49, %106, %c0_50] : memref<1x64x256xbf16, #tpu.memory_space<vmem>>, vector<1x8x256xbf16>
    %108 = vector.shape_cast %107 : vector<1x8x256xbf16> to vector<8x256xbf16>
    %109 = arith.extf %108 : vector<8x256xbf16> to vector<8x256xf32>
    %c0_51 = arith.constant 0 : index
    %110 = arith.index_cast %105 : i32 to index
    %c0_52 = arith.constant 0 : index
    %111 = vector.load %arg2[%c0_51, %110, %c0_52] : memref<1x64x256xbf16, #tpu.memory_space<vmem>>, vector<1x8x256xbf16>
    %112 = vector.shape_cast %111 : vector<1x8x256xbf16> to vector<8x256xbf16>
    %113 = arith.extf %112 : vector<8x256xbf16> to vector<8x256xf32>
    %114 = arith.subf %113, %109 : vector<8x256xf32>
    %115 = vector.broadcast %96 : f32 to vector<8x256xf32>
    %116 = arith.mulf %115, %114 : vector<8x256xf32>
    %117 = arith.addf %109, %116 : vector<8x256xf32>
    %cst_53 = arith.constant dense<0.000000e+00> : vector<16x256xf32>
    %118 = tpu.matmul %0, %117, %cst_53 {dimension_numbers = #tpu.dot_dimension_numbers<[1], [0], [0], [1], [0, 0, 1, 1], [], []>} : vector<16x8xf32>, vector<8x256xf32>, vector<16x256xf32> -> vector<16x256xf32>
    %119 = arith.truncf %118 : vector<16x256xf32> to vector<16x256xbf16>
    %c48 = arith.constant 48 : index
    %c0_54 = arith.constant 0 : index
    %120 = vector.load %arg16[%c48, %c0_54] : memref<128x256xbf16, #tpu.memory_space<vmem>>, vector<16x256xbf16>
    tpu.vector_store %arg16[%c48, %c0_54], %119 {strides = array<i32>} : memref<128x256xbf16, #tpu.memory_space<vmem>>, vector<16x256xbf16>,
    %c8_i32_55 = arith.constant 8 : i32
    %121 = arith.muli %arg1, %c8_i32_55 : i32
    %c4_i32 = arith.constant 4 : i32
    %122 = arith.addi %121, %c4_i32 : i32
    %123 = arith.sitofp %122 : i32 to f32
    %cst_56 = arith.constant 0.466666669 : f32
    %124 = arith.mulf %123, %cst_56 : f32
    %125 = math.floor %124 : f32
    %126 = arith.subf %124, %125 : f32
    %127 = arith.fptosi %125 : f32 to i32
    %c0_i32_57 = arith.constant 0 : i32
    %c7_i32_58 = arith.constant 7 : i32
    %128 = arith.maxsi %c0_i32_57, %127 : i32
    %129 = arith.minsi %c7_i32_58, %128 : i32
    %c1_i32_59 = arith.constant 1 : i32
    %130 = arith.addi %129, %c1_i32_59 : i32
    %c7_i32_60 = arith.constant 7 : i32
    %131 = arith.minsi %130, %c7_i32_60 : i32
    %c8_i32_61 = arith.constant 8 : i32
    %132 = arith.muli %129, %c8_i32_61 : i32
    %c8_i32_62 = arith.constant 8 : i32
    %133 = arith.muli %131, %c8_i32_62 : i32
    %134 = tpu.assume_multiple %132, 8 : i32
    %135 = tpu.assume_multiple %133, 8 : i32
    %c0_63 = arith.constant 0 : index
    %136 = arith.index_cast %134 : i32 to index
    %c0_64 = arith.constant 0 : index
    %137 = vector.load %arg2[%c0_63, %136, %c0_64] : memref<1x64x256xbf16, #tpu.memory_space<vmem>>, vector<1x8x256xbf16>
    %138 = vector.shape_cast %137 : vector<1x8x256xbf16> to vector<8x256xbf16>
    %139 = arith.extf %138 : vector<8x256xbf16> to vector<8x256xf32>
    %c0_65 = arith.constant 0 : index
    %140 = arith.index_cast %135 : i32 to index
    %c0_66 = arith.constant 0 : index
    %141 = vector.load %arg2[%c0_65, %140, %c0_66] : memref<1x64x256xbf16, #tpu.memory_space<vmem>>, vector<1x8x256xbf16>
    %142 = vector.shape_cast %141 : vector<1x8x256xbf16> to vector<8x256xbf16>
    %143 = arith.extf %142 : vector<8x256xbf16> to vector<8x256xf32>
    %144 = arith.subf %143, %139 : vector<8x256xf32>
    %145 = vector.broadcast %126 : f32 to vector<8x256xf32>
    %146 = arith.mulf %145, %144 : vector<8x256xf32>
    %147 = arith.addf %139, %146 : vector<8x256xf32>
    %cst_67 = arith.constant dense<0.000000e+00> : vector<16x256xf32>
    %148 = tpu.matmul %0, %147, %cst_67 {dimension_numbers = #tpu.dot_dimension_numbers<[1], [0], [0], [1], [0, 0, 1, 1], [], []>} : vector<16x8xf32>, vector<8x256xf32>, vector<16x256xf32> -> vector<16x256xf32>
    %149 = arith.truncf %148 : vector<16x256xf32> to vector<16x256xbf16>
    %c64 = arith.constant 64 : index
    %c0_68 = arith.constant 0 : index
    %150 = vector.load %arg16[%c64, %c0_68] : memref<128x256xbf16, #tpu.memory_space<vmem>>, vector<16x256xbf16>
    tpu.vector_store %arg16[%c64, %c0_68], %149 {strides = array<i32>} : memref<128x256xbf16, #tpu.memory_space<vmem>>, vector<16x256xbf16>,
    %c8_i32_69 = arith.constant 8 : i32
    %151 = arith.muli %arg1, %c8_i32_69 : i32
    %c5_i32 = arith.constant 5 : i32
    %152 = arith.addi %151, %c5_i32 : i32
    %153 = arith.sitofp %152 : i32 to f32
    %cst_70 = arith.constant 0.466666669 : f32
    %154 = arith.mulf %153, %cst_70 : f32
    %155 = math.floor %154 : f32
    %156 = arith.subf %154, %155 : f32
    %157 = arith.fptosi %155 : f32 to i32
    %c0_i32_71 = arith.constant 0 : i32
    %c7_i32_72 = arith.constant 7 : i32
    %158 = arith.maxsi %c0_i32_71, %157 : i32
    %159 = arith.minsi %c7_i32_72, %158 : i32
    %c1_i32_73 = arith.constant 1 : i32
    %160 = arith.addi %159, %c1_i32_73 : i32
    %c7_i32_74 = arith.constant 7 : i32
    %161 = arith.minsi %160, %c7_i32_74 : i32
    %c8_i32_75 = arith.constant 8 : i32
    %162 = arith.muli %159, %c8_i32_75 : i32
    %c8_i32_76 = arith.constant 8 : i32
    %163 = arith.muli %161, %c8_i32_76 : i32
    %164 = tpu.assume_multiple %162, 8 : i32
    %165 = tpu.assume_multiple %163, 8 : i32
    %c0_77 = arith.constant 0 : index
    %166 = arith.index_cast %164 : i32 to index
    %c0_78 = arith.constant 0 : index
    %167 = vector.load %arg2[%c0_77, %166, %c0_78] : memref<1x64x256xbf16, #tpu.memory_space<vmem>>, vector<1x8x256xbf16>
    %168 = vector.shape_cast %167 : vector<1x8x256xbf16> to vector<8x256xbf16>
    %169 = arith.extf %168 : vector<8x256xbf16> to vector<8x256xf32>
    %c0_79 = arith.constant 0 : index
    %170 = arith.index_cast %165 : i32 to index
    %c0_80 = arith.constant 0 : index
    %171 = vector.load %arg2[%c0_79, %170, %c0_80] : memref<1x64x256xbf16, #tpu.memory_space<vmem>>, vector<1x8x256xbf16>
    %172 = vector.shape_cast %171 : vector<1x8x256xbf16> to vector<8x256xbf16>
    %173 = arith.extf %172 : vector<8x256xbf16> to vector<8x256xf32>
    %174 = arith.subf %173, %169 : vector<8x256xf32>
    %175 = vector.broadcast %156 : f32 to vector<8x256xf32>
    %176 = arith.mulf %175, %174 : vector<8x256xf32>
    %177 = arith.addf %169, %176 : vector<8x256xf32>
    %cst_81 = arith.constant dense<0.000000e+00> : vector<16x256xf32>
    %178 = tpu.matmul %0, %177, %cst_81 {dimension_numbers = #tpu.dot_dimension_numbers<[1], [0], [0], [1], [0, 0, 1, 1], [], []>} : vector<16x8xf32>, vector<8x256xf32>, vector<16x256xf32> -> vector<16x256xf32>
    %179 = arith.truncf %178 : vector<16x256xf32> to vector<16x256xbf16>
    %c80 = arith.constant 80 : index
    %c0_82 = arith.constant 0 : index
    %180 = vector.load %arg16[%c80, %c0_82] : memref<128x256xbf16, #tpu.memory_space<vmem>>, vector<16x256xbf16>
    tpu.vector_store %arg16[%c80, %c0_82], %179 {strides = array<i32>} : memref<128x256xbf16, #tpu.memory_space<vmem>>, vector<16x256xbf16>,
    %c8_i32_83 = arith.constant 8 : i32
    %181 = arith.muli %arg1, %c8_i32_83 : i32
    %c6_i32 = arith.constant 6 : i32
    %182 = arith.addi %181, %c6_i32 : i32
    %183 = arith.sitofp %182 : i32 to f32
    %cst_84 = arith.constant 0.466666669 : f32
    %184 = arith.mulf %183, %cst_84 : f32
    %185 = math.floor %184 : f32
    %186 = arith.subf %184, %185 : f32
    %187 = arith.fptosi %185 : f32 to i32
    %c0_i32_85 = arith.constant 0 : i32
    %c7_i32_86 = arith.constant 7 : i32
    %188 = arith.maxsi %c0_i32_85, %187 : i32
    %189 = arith.minsi %c7_i32_86, %188 : i32
    %c1_i32_87 = arith.constant 1 : i32
    %190 = arith.addi %189, %c1_i32_87 : i32
    %c7_i32_88 = arith.constant 7 : i32
    %191 = arith.minsi %190, %c7_i32_88 : i32
    %c8_i32_89 = arith.constant 8 : i32
    %192 = arith.muli %189, %c8_i32_89 : i32
    %c8_i32_90 = arith.constant 8 : i32
    %193 = arith.muli %191, %c8_i32_90 : i32
    %194 = tpu.assume_multiple %192, 8 : i32
    %195 = tpu.assume_multiple %193, 8 : i32
    %c0_91 = arith.constant 0 : index
    %196 = arith.index_cast %194 : i32 to index
    %c0_92 = arith.constant 0 : index
    %197 = vector.load %arg2[%c0_91, %196, %c0_92] : memref<1x64x256xbf16, #tpu.memory_space<vmem>>, vector<1x8x256xbf16>
    %198 = vector.shape_cast %197 : vector<1x8x256xbf16> to vector<8x256xbf16>
    %199 = arith.extf %198 : vector<8x256xbf16> to vector<8x256xf32>
    %c0_93 = arith.constant 0 : index
    %200 = arith.index_cast %195 : i32 to index
    %c0_94 = arith.constant 0 : index
    %201 = vector.load %arg2[%c0_93, %200, %c0_94] : memref<1x64x256xbf16, #tpu.memory_space<vmem>>, vector<1x8x256xbf16>
    %202 = vector.shape_cast %201 : vector<1x8x256xbf16> to vector<8x256xbf16>
    %203 = arith.extf %202 : vector<8x256xbf16> to vector<8x256xf32>
    %204 = arith.subf %203, %199 : vector<8x256xf32>
    %205 = vector.broadcast %186 : f32 to vector<8x256xf32>
    %206 = arith.mulf %205, %204 : vector<8x256xf32>
    %207 = arith.addf %199, %206 : vector<8x256xf32>
    %cst_95 = arith.constant dense<0.000000e+00> : vector<16x256xf32>
    %208 = tpu.matmul %0, %207, %cst_95 {dimension_numbers = #tpu.dot_dimension_numbers<[1], [0], [0], [1], [0, 0, 1, 1], [], []>} : vector<16x8xf32>, vector<8x256xf32>, vector<16x256xf32> -> vector<16x256xf32>
    %209 = arith.truncf %208 : vector<16x256xf32> to vector<16x256xbf16>
    %c96 = arith.constant 96 : index
    %c0_96 = arith.constant 0 : index
    %210 = vector.load %arg16[%c96, %c0_96] : memref<128x256xbf16, #tpu.memory_space<vmem>>, vector<16x256xbf16>
    tpu.vector_store %arg16[%c96, %c0_96], %209 {strides = array<i32>} : memref<128x256xbf16, #tpu.memory_space<vmem>>, vector<16x256xbf16>,
    %c8_i32_97 = arith.constant 8 : i32
    %211 = arith.muli %arg1, %c8_i32_97 : i32
    %c7_i32_98 = arith.constant 7 : i32
    %212 = arith.addi %211, %c7_i32_98 : i32
    %213 = arith.sitofp %212 : i32 to f32
    %cst_99 = arith.constant 0.466666669 : f32
    %214 = arith.mulf %213, %cst_99 : f32
    %215 = math.floor %214 : f32
    %216 = arith.subf %214, %215 : f32
    %217 = arith.fptosi %215 : f32 to i32
    %c0_i32_100 = arith.constant 0 : i32
    %c7_i32_101 = arith.constant 7 : i32
    %218 = arith.maxsi %c0_i32_100, %217 : i32
    %219 = arith.minsi %c7_i32_101, %218 : i32
    %c1_i32_102 = arith.constant 1 : i32
    %220 = arith.addi %219, %c1_i32_102 : i32
    %c7_i32_103 = arith.constant 7 : i32
    %221 = arith.minsi %220, %c7_i32_103 : i32
    %c8_i32_104 = arith.constant 8 : i32
    %222 = arith.muli %219, %c8_i32_104 : i32
    %c8_i32_105 = arith.constant 8 : i32
    %223 = arith.muli %221, %c8_i32_105 : i32
    %224 = tpu.assume_multiple %222, 8 : i32
    %225 = tpu.assume_multiple %223, 8 : i32
    %c0_106 = arith.constant 0 : index
    %226 = arith.index_cast %224 : i32 to index
    %c0_107 = arith.constant 0 : index
    %227 = vector.load %arg2[%c0_106, %226, %c0_107] : memref<1x64x256xbf16, #tpu.memory_space<vmem>>, vector<1x8x256xbf16>
    %228 = vector.shape_cast %227 : vector<1x8x256xbf16> to vector<8x256xbf16>
    %229 = arith.extf %228 : vector<8x256xbf16> to vector<8x256xf32>
    %c0_108 = arith.constant 0 : index
    %230 = arith.index_cast %225 : i32 to index
    %c0_109 = arith.constant 0 : index
    %231 = vector.load %arg2[%c0_108, %230, %c0_109] : memref<1x64x256xbf16, #tpu.memory_space<vmem>>, vector<1x8x256xbf16>
    %232 = vector.shape_cast %231 : vector<1x8x256xbf16> to vector<8x256xbf16>
    %233 = arith.extf %232 : vector<8x256xbf16> to vector<8x256xf32>
    %234 = arith.subf %233, %229 : vector<8x256xf32>
    %235 = vector.broadcast %216 : f32 to vector<8x256xf32>
    %236 = arith.mulf %235, %234 : vector<8x256xf32>
    %237 = arith.addf %229, %236 : vector<8x256xf32>
    %cst_110 = arith.constant dense<0.000000e+00> : vector<16x256xf32>
    %238 = tpu.matmul %0, %237, %cst_110 {dimension_numbers = #tpu.dot_dimension_numbers<[1], [0], [0], [1], [0, 0, 1, 1], [], []>} : vector<16x8xf32>, vector<8x256xf32>, vector<16x256xf32> -> vector<16x256xf32>
    %239 = arith.truncf %238 : vector<16x256xf32> to vector<16x256xbf16>
    %c112 = arith.constant 112 : index
    %c0_111 = arith.constant 0 : index
    %240 = vector.load %arg16[%c112, %c0_111] : memref<128x256xbf16, #tpu.memory_space<vmem>>, vector<16x256xbf16>
    tpu.vector_store %arg16[%c112, %c0_111], %239 {strides = array<i32>} : memref<128x256xbf16, #tpu.memory_space<vmem>>, vector<16x256xbf16>,
    %c0_112 = arith.constant 0 : index
    %c0_113 = arith.constant 0 : index
    %241 = vector.load %arg16[%c0_112, %c0_113] : memref<128x256xbf16, #tpu.memory_space<vmem>>, vector<128x256xbf16>
    %c0_114 = arith.constant 0 : index
    %c0_115 = arith.constant 0 : index
    %242 = vector.load %arg4[%c0_114, %c0_115] : memref<128x256xbf16, #tpu.memory_space<vmem>>, vector<128x256xbf16>
    %c0_116 = arith.constant 0 : index
    %c0_117 = arith.constant 0 : index
    %243 = vector.load %arg5[%c0_116, %c0_117] : memref<256x48xbf16, #tpu.memory_space<vmem>>, vector<256x48xbf16>
    %cst_118 = arith.constant dense<0.000000e+00> : vector<128x48xf32>
    %244 = tpu.matmul %242, %243, %cst_118 {dimension_numbers = #tpu.dot_dimension_numbers<[1], [0], [0], [1], [0, 0, 1, 1], [], []>} : vector<128x256xbf16>, vector<256x48xbf16>, vector<128x48xf32> -> vector<128x48xf32>
    %c0_119 = arith.constant 0 : index
    %c0_120 = arith.constant 0 : index
    %245 = vector.load %arg6[%c0_119, %c0_120] : memref<1x48xf32, #tpu.memory_space<vmem>>, vector<1x48xf32>
    %246 = vector.broadcast %245 : vector<1x48xf32> to vector<128x48xf32>
    %247 = arith.addf %244, %246 : vector<128x48xf32>
    %cst_121 = arith.constant 0.000000e+00 : f32
    %248 = vector.broadcast %cst_121 : f32 to vector<128x48xf32>
    %249 = arith.cmpf oge, %247, %248 : vector<128x48xf32>
    %cst_122 = arith.constant 0.00999999977 : f32
    %250 = vector.broadcast %cst_122 : f32 to vector<128x48xf32>
    %251 = arith.mulf %250, %247 : vector<128x48xf32>
    %252 = arith.select %249, %247, %251 : vector<128x48xi1>, vector<128x48xf32>
    %c0_123 = arith.constant 0 : index
    %c0_124 = arith.constant 0 : index
    %253 = vector.load %arg7[%c0_123, %c0_124] : memref<256x256xbf16, #tpu.memory_space<vmem>>, vector<256x256xbf16>
    %cst_125 = arith.constant dense<0.000000e+00> : vector<128x256xf32>
    %254 = tpu.matmul %241, %253, %cst_125 {dimension_numbers = #tpu.dot_dimension_numbers<[1], [0], [0], [1], [0, 0, 1, 1], [], []>} : vector<128x256xbf16>, vector<256x256xbf16>, vector<128x256xf32> -> vector<128x256xf32>
    %255 = arith.truncf %252 : vector<128x48xf32> to vector<128x48xbf16>
    %c0_126 = arith.constant 0 : index
    %c0_127 = arith.constant 0 : index
    %256 = vector.load %arg8[%c0_126, %c0_127] : memref<48x256xbf16, #tpu.memory_space<vmem>>, vector<48x256xbf16>
    %cst_128 = arith.constant dense<0.000000e+00> : vector<128x256xf32>
    %257 = tpu.matmul %255, %256, %cst_128 {dimension_numbers = #tpu.dot_dimension_numbers<[1], [0], [0], [1], [0, 0, 1, 1], [], []>} : vector<128x48xbf16>, vector<48x256xbf16>, vector<128x256xf32> -> vector<128x256xf32>
    %258 = arith.addf %254, %257 : vector<128x256xf32>
    %c0_129 = arith.constant 0 : index
    %c0_130 = arith.constant 0 : index
    %259 = vector.load %arg9[%c0_129, %c0_130] : memref<1x256xf32, #tpu.memory_space<vmem>>, vector<1x256xf32>
    %260 = vector.broadcast %259 : vector<1x256xf32> to vector<128x256xf32>
    %261 = arith.addf %258, %260 : vector<128x256xf32>
    %cst_131 = arith.constant 0.000000e+00 : f32
    %262 = vector.broadcast %cst_131 : f32 to vector<128x256xf32>
    %263 = arith.cmpf oge, %261, %262 : vector<128x256xf32>
    %cst_132 = arith.constant 0.00999999977 : f32
    %264 = vector.broadcast %cst_132 : f32 to vector<128x256xf32>
    %265 = arith.mulf %264, %261 : vector<128x256xf32>
    %266 = arith.select %263, %261, %265 : vector<128x256xi1>, vector<128x256xf32>
    %267 = arith.truncf %266 : vector<128x256xf32> to vector<128x256xbf16>
    %c0_133 = arith.constant 0 : index
    %c0_134 = arith.constant 0 : index
    %268 = vector.load %arg10[%c0_133, %c0_134] : memref<256x256xbf16, #tpu.memory_space<vmem>>, vector<256x256xbf16>
    %cst_135 = arith.constant dense<0.000000e+00> : vector<128x256xf32>
    %269 = tpu.matmul %267, %268, %cst_135 {dimension_numbers = #tpu.dot_dimension_numbers<[1], [0], [0], [1], [0, 0, 1, 1], [], []>} : vector<128x256xbf16>, vector<256x256xbf16>, vector<128x256xf32> -> vector<128x256xf32>
    %c0_136 = arith.constant 0 : index
    %c0_137 = arith.constant 0 : index
    %270 = vector.load %arg11[%c0_136, %c0_137] : memref<1x256xf32, #tpu.memory_space<vmem>>, vector<1x256xf32>
    %271 = vector.broadcast %270 : vector<1x256xf32> to vector<128x256xf32>
    %272 = arith.addf %269, %271 : vector<128x256xf32>
    %cst_138 = arith.constant 0.000000e+00 : f32
    %273 = vector.broadcast %cst_138 : f32 to vector<128x256xf32>
    %274 = arith.cmpf oge, %272, %273 : vector<128x256xf32>
    %cst_139 = arith.constant 0.00999999977 : f32
    %275 = vector.broadcast %cst_139 : f32 to vector<128x256xf32>
    %276 = arith.mulf %275, %272 : vector<128x256xf32>
    %277 = arith.select %274, %272, %276 : vector<128x256xi1>, vector<128x256xf32>
    %278 = arith.truncf %277 : vector<128x256xf32> to vector<128x256xbf16>
    %c0_140 = arith.constant 0 : index
    %c0_141 = arith.constant 0 : index
    %279 = vector.load %arg14[%c0_140, %c0_141] : memref<128x256xbf16, #tpu.memory_space<vmem>>, vector<128x256xbf16>
    tpu.vector_store %arg14[%c0_140, %c0_141], %278 {strides = array<i32>} : memref<128x256xbf16, #tpu.memory_space<vmem>>, vector<128x256xbf16>,
    %280 = arith.truncf %277 : vector<128x256xf32> to vector<128x256xbf16>
    %c0_142 = arith.constant 0 : index
    %c0_143 = arith.constant 0 : index
    %281 = vector.load %arg12[%c0_142, %c0_143] : memref<256x128xbf16, #tpu.memory_space<vmem>>, vector<256x128xbf16>
    %cst_144 = arith.constant dense<0.000000e+00> : vector<128x128xf32>
    %282 = tpu.matmul %280, %281, %cst_144 {dimension_numbers = #tpu.dot_dimension_numbers<[1], [0], [0], [1], [0, 0, 1, 1], [], []>} : vector<128x256xbf16>, vector<256x128xbf16>, vector<128x128xf32> -> vector<128x128xf32>
    %c0_145 = arith.constant 0 : index
    %c0_146 = arith.constant 0 : index
    %283 = vector.load %arg13[%c0_145, %c0_146] : memref<1x128xf32, #tpu.memory_space<vmem>>, vector<1x128xf32>
    %284 = vector.broadcast %283 : vector<1x128xf32> to vector<128x128xf32>
    %285 = arith.addf %282, %284 : vector<128x128xf32>
    %286 = arith.truncf %285 : vector<128x128xf32> to vector<128x128xbf16>
    %c0_147 = arith.constant 0 : index
    %c0_148 = arith.constant 0 : index
    %287 = vector.load %arg15[%c0_147, %c0_148] : memref<128x128xbf16, #tpu.memory_space<vmem>>, vector<128x128xbf16>
    tpu.vector_store %arg15[%c0_147, %c0_148], %286 {strides = array<i32>} : memref<128x128xbf16, #tpu.memory_space<vmem>>, vector<128x128xbf16>,
    return
  }
  func.func @transform_0(%arg0: i32, %arg1: i32) -> (i32, i32, i32) {
    %c0_i32 = arith.constant 0 : i32
    %c0_i32_0 = arith.constant 0 : i32
    %c0_i32_1 = arith.constant 0 : i32
    return %arg0, %c0_i32, %c0_i32_0 : i32, i32, i32
  }
  func.func @transform_1(%arg0: i32, %arg1: i32) -> (i32, i32) {
    %c0_i32 = arith.constant 0 : i32
    %c0_i32_0 = arith.constant 0 : i32
    %c0_i32_1 = arith.constant 0 : i32
    return %c0_i32, %c0_i32_0 : i32, i32
  }
  func.func @transform_2(%arg0: i32, %arg1: i32) -> (i32, i32) {
    %c2_i32 = arith.constant 2 : i32
    %0 = arith.muli %arg0, %c2_i32 : i32
    %1 = arith.addi %0, %arg1 : i32
    %c0_i32 = arith.constant 0 : i32
    %c0_i32_0 = arith.constant 0 : i32
    return %1, %c0_i32 : i32, i32
  }
  func.func @transform_3(%arg0: i32, %arg1: i32) -> (i32, i32) {
    %c0_i32 = arith.constant 0 : i32
    %c0_i32_0 = arith.constant 0 : i32
    %c0_i32_1 = arith.constant 0 : i32
    return %c0_i32, %c0_i32_0 : i32, i32
  }
  func.func @transform_4(%arg0: i32, %arg1: i32) -> (i32, i32) {
    %c0_i32 = arith.constant 0 : i32
    %c0_i32_0 = arith.constant 0 : i32
    %c0_i32_1 = arith.constant 0 : i32
    return %c0_i32, %c0_i32_0 : i32, i32
  }
  func.func @transform_5(%arg0: i32, %arg1: i32) -> (i32, i32) {
    %c0_i32 = arith.constant 0 : i32
    %c0_i32_0 = arith.constant 0 : i32
    %c0_i32_1 = arith.constant 0 : i32
    return %c0_i32, %c0_i32_0 : i32, i32
  }
  func.func @transform_6(%arg0: i32, %arg1: i32) -> (i32, i32) {
    %c0_i32 = arith.constant 0 : i32
    %c0_i32_0 = arith.constant 0 : i32
    %c0_i32_1 = arith.constant 0 : i32
    return %c0_i32, %c0_i32_0 : i32, i32
  }
  func.func @transform_7(%arg0: i32, %arg1: i32) -> (i32, i32) {
    %c0_i32 = arith.constant 0 : i32
    %c0_i32_0 = arith.constant 0 : i32
    %c0_i32_1 = arith.constant 0 : i32
    return %c0_i32, %c0_i32_0 : i32, i32
  }
  func.func @transform_8(%arg0: i32, %arg1: i32) -> (i32, i32) {
    %c0_i32 = arith.constant 0 : i32
    %c0_i32_0 = arith.constant 0 : i32
    %c0_i32_1 = arith.constant 0 : i32
    return %c0_i32, %c0_i32_0 : i32, i32
  }
  func.func @transform_9(%arg0: i32, %arg1: i32) -> (i32, i32) {
    %c0_i32 = arith.constant 0 : i32
    %c0_i32_0 = arith.constant 0 : i32
    %c0_i32_1 = arith.constant 0 : i32
    return %c0_i32, %c0_i32_0 : i32, i32
  }
  func.func @transform_10(%arg0: i32, %arg1: i32) -> (i32, i32) {
    %c0_i32 = arith.constant 0 : i32
    %c0_i32_0 = arith.constant 0 : i32
    %c0_i32_1 = arith.constant 0 : i32
    return %c0_i32, %c0_i32_0 : i32, i32
  }
  func.func @transform_11(%arg0: i32, %arg1: i32) -> (i32, i32) {
    %c0_i32 = arith.constant 0 : i32
    %c0_i32_0 = arith.constant 0 : i32
    %c0_i32_1 = arith.constant 0 : i32
    return %c0_i32, %c0_i32_0 : i32, i32
  }
  func.func @transform_12(%arg0: i32, %arg1: i32) -> (i32, i32) {
    %c2_i32 = arith.constant 2 : i32
    %0 = arith.muli %arg0, %c2_i32 : i32
    %1 = arith.addi %0, %arg1 : i32
    %c0_i32 = arith.constant 0 : i32
    %c0_i32_0 = arith.constant 0 : i32
    return %1, %c0_i32 : i32, i32
  }
  func.func @transform_13(%arg0: i32, %arg1: i32) -> (i32, i32) {
    %c2_i32 = arith.constant 2 : i32
    %0 = arith.muli %arg0, %c2_i32 : i32
    %1 = arith.addi %0, %arg1 : i32
    %c0_i32 = arith.constant 0 : i32
    %c0_i32_0 = arith.constant 0 : i32
    return %1, %c0_i32 : i32, i32
  }
}

</mosaic_0001>

<llo_original>
// kernel: decoder_forward.2
$region0: #{decoder_forward.2}
  #allocation0 [shape = 'u32[]', space=smem, size = 0x4, offset = 0x4, fixed_abs, tag = 'smem constant byte address 0x4 - core index']
  #allocation1 [shape = 'u32[144,128]{1,0:T(1,128)}', space=vmem, size = 0x12000, scoped, tag = 'internal scratch']
  %s0 = inlined_call_operand.vmem [shape: bf16[128,512], index: 0, kind: input, shape index: {}]
  %s1 = inlined_call_operand.vmem [shape: bf16[512,256], index: 1, kind: input, shape index: {}]
  %s2 = inlined_call_operand.hbm [shape: f32[1,256], index: 2, kind: input, shape index: {}]
  %s3 = inlined_call_operand.vmem [shape: bf16[128,256], index: 3, kind: output, shape index: {}]
  %s4 = sld [smem:[#allocation0]]
  $region26: #{decoder_forward.2} parent=0
    _
  %s6 = ssub.s32 1, %s4
  %s7 = scalar_select 0, %s6, %s4
  $region1: #{decoder_forward.2} parent=0
    #allocation2 [shape = 'u8[1024]{0}', space=vmem, size = 0x400, scoped, tag = 'input window, operand 2, single buffered']
    #allocation3 [shape = 's32[1]{0}', space=sflag, size = 0x4, scoped, tag = 'scoped memory for decoder_forward.2']
    %8 = vsyncpa [#allocation3], 0
    // Predicated region
    $region2: #{decoder_forward.2} parent=1 // pred_check
      _
    $region3: #{decoder_forward.2} parent=1 // pred_check_branch
      %10 = sbr.rel (0) target = $region5
    $region4: #{decoder_forward.2} parent=1 // pred_region
      _
    $region5: #{decoder_forward.2} parent=1 // pred_fallthru
      _
    // Predicated region
    $region6: #{decoder_forward.2} parent=1 // pred_check
      _
    $region7: #{decoder_forward.2} parent=1 // pred_check_branch
      %12 = sbr.rel (0) target = $region9
    $region8: #{decoder_forward.2} parent=1 // pred_region
      _
    $region9: #{decoder_forward.2} parent=1 // pred_fallthru
      _
    // Predicated region
    $region10: #{decoder_forward.2} parent=1 // pred_check
      _
    $region11: #{decoder_forward.2} parent=1 // pred_check_branch
      %14 = sbr.rel (0) target = $region13
    $region12: #{decoder_forward.2} parent=1 // pred_region
      %s16 = ssub.s32 32, 32
      %17 = vsyncadd [#allocation3], %s16
      %s19 = sshll.u32 [#allocation2], 4
      %s20 = int_to_ptr.vmem [resolvable:$true] %s19
      %22 = dma.hbm_to_vmem [thread:$0]  %s2, 32, %s20, [#allocation3]
    $region13: #{decoder_forward.2} parent=1 // pred_fallthru
      _
    // Predicated region
    $region14: #{decoder_forward.2} parent=1 // pred_check
      _
    $region15: #{decoder_forward.2} parent=1 // pred_check_branch
      %24 = sbr.rel (0) target = $region17
    $region16: #{decoder_forward.2} parent=1 // pred_region
      %25 = dma.done [#allocation3], 32
    $region17: #{decoder_forward.2} parent=1 // pred_fallthru
      _
    %v26 = vld [vmem:[%s0] sm:$0xff]
    %v27 = vld [vmem:[%s0 + $0x8] sm:$0xff]
    %v28 = vld [vmem:[%s0 + $0x10] sm:$0xff]
    %v29 = vld [vmem:[%s0 + $0x18] sm:$0xff]
    %v30 = vld [vmem:[%s0 + $0x20] sm:$0xff]
    %v31 = vld [vmem:[%s0 + $0x28] sm:$0xff]
    %v32 = vld [vmem:[%s0 + $0x30] sm:$0xff]
    %v33 = vld [vmem:[%s0 + $0x38] sm:$0xff]
    %v34 = vld [vmem:[%s0 + $0x40] sm:$0xff]
    %v35 = vld [vmem:[%s0 + $0x48] sm:$0xff]
    %v36 = vld [vmem:[%s0 + $0x50] sm:$0xff]
    %v37 = vld [vmem:[%s0 + $0x58] sm:$0xff]
    %v38 = vld [vmem:[%s0 + $0x60] sm:$0xff]
    %v39 = vld [vmem:[%s0 + $0x68] sm:$0xff]
    %v40 = vld [vmem:[%s0 + $0x70] sm:$0xff]
    %v41 = vld [vmem:[%s0 + $0x78] sm:$0xff]
    %v42 = vld [vmem:[%s0 + $0x80] sm:$0xff]
    %v43 = vld [vmem:[%s0 + $0x88] sm:$0xff]
    %v44 = vld [vmem:[%s0 + $0x90] sm:$0xff]
    %v45 = vld [vmem:[%s0 + $0x98] sm:$0xff]
    %v46 = vld [vmem:[%s0 + $0xa0] sm:$0xff]
    %v47 = vld [vmem:[%s0 + $0xa8] sm:$0xff]
    %v48 = vld [vmem:[%s0 + $0xb0] sm:$0xff]
    %v49 = vld [vmem:[%s0 + $0xb8] sm:$0xff]
    %v50 = vld [vmem:[%s0 + $0xc0] sm:$0xff]
    %v51 = vld [vmem:[%s0 + $0xc8] sm:$0xff]
    %v52 = vld [vmem:[%s0 + $0xd0] sm:$0xff]
    %v53 = vld [vmem:[%s0 + $0xd8] sm:$0xff]
    %v54 = vld [vmem:[%s0 + $0xe0] sm:$0xff]
    %v55 = vld [vmem:[%s0 + $0xe8] sm:$0xff]
    %v56 = vld [vmem:[%s0 + $0xf0] sm:$0xff]
    %v57 = vld [vmem:[%s0 + $0xf8] sm:$0xff]
    %v58 = vld [vmem:[%s1] sm:$0xff]
    %v59 = vld [vmem:[%s1 + $0x8] sm:$0xff]
    %v60 = vld [vmem:[%s1 + $0x10] sm:$0xff]
    %v61 = vld [vmem:[%s1 + $0x18] sm:$0xff]
    %v62 = vld [vmem:[%s1 + $0x20] sm:$0xff]
    %v63 = vld [vmem:[%s1 + $0x28] sm:$0xff]
    %v64 = vld [vmem:[%s1 + $0x30] sm:$0xff]
    %v65 = vld [vmem:[%s1 + $0x38] sm:$0xff]
    %v66 = vld [vmem:[%s1 + $0x40] sm:$0xff]
    %v67 = vld [vmem:[%s1 + $0x48] sm:$0xff]
    %v68 = vld [vmem:[%s1 + $0x50] sm:$0xff]
    %v69 = vld [vmem:[%s1 + $0x58] sm:$0xff]
    %v70 = vld [vmem:[%s1 + $0x60] sm:$0xff]
    %v71 = vld [vmem:[%s1 + $0x68] sm:$0xff]
    %v72 = vld [vmem:[%s1 + $0x70] sm:$0xff]
    %v73 = vld [vmem:[%s1 + $0x78] sm:$0xff]
    %v74 = vld [vmem:[%s1 + $0x80] sm:$0xff]
    %v75 = vld [vmem:[%s1 + $0x88] sm:$0xff]
    %v76 = vld [vmem:[%s1 + $0x90] sm:$0xff]
    %v77 = vld [vmem:[%s1 + $0x98] sm:$0xff]
    %v78 = vld [vmem:[%s1 + $0xa0] sm:$0xff]
    %v79 = vld [vmem:[%s1 + $0xa8] sm:$0xff]
    %v80 = vld [vmem:[%s1 + $0xb0] sm:$0xff]
    %v81 = vld [vmem:[%s1 + $0xb8] sm:$0xff]
    %v82 = vld [vmem:[%s1 + $0xc0] sm:$0xff]
    %v83 = vld [vmem:[%s1 + $0xc8] sm:$0xff]
    %v84 = vld [vmem:[%s1 + $0xd0] sm:$0xff]
    %v85 = vld [vmem:[%s1 + $0xd8] sm:$0xff]
    %v86 = vld [vmem:[%s1 + $0xe0] sm:$0xff]
    %v87 = vld [vmem:[%s1 + $0xe8] sm:$0xff]
    %v88 = vld [vmem:[%s1 + $0xf0] sm:$0xff]
    %v89 = vld [vmem:[%s1 + $0xf8] sm:$0xff]
    %v90 = vld [vmem:[%s1 + $0x100] sm:$0xff]
    %v91 = vld [vmem:[%s1 + $0x108] sm:$0xff]
    %v92 = vld [vmem:[%s1 + $0x110] sm:$0xff]
    %v93 = vld [vmem:[%s1 + $0x118] sm:$0xff]
    %v94 = vld [vmem:[%s1 + $0x120] sm:$0xff]
    %v95 = vld [vmem:[%s1 + $0x128] sm:$0xff]
    %v96 = vld [vmem:[%s1 + $0x130] sm:$0xff]
    %v97 = vld [vmem:[%s1 + $0x138] sm:$0xff]
    %v98 = vld [vmem:[%s1 + $0x140] sm:$0xff]
    %v99 = vld [vmem:[%s1 + $0x148] sm:$0xff]
    %v100 = vld [vmem:[%s1 + $0x150] sm:$0xff]
    %v101 = vld [vmem:[%s1 + $0x158] sm:$0xff]
    %v102 = vld [vmem:[%s1 + $0x160] sm:$0xff]
    %v103 = vld [vmem:[%s1 + $0x168] sm:$0xff]
    %v104 = vld [vmem:[%s1 + $0x170] sm:$0xff]
    %v105 = vld [vmem:[%s1 + $0x178] sm:$0xff]
    %v106 = vld [vmem:[%s1 + $0x180] sm:$0xff]
    %v107 = vld [vmem:[%s1 + $0x188] sm:$0xff]
    %v108 = vld [vmem:[%s1 + $0x190] sm:$0xff]
    %v109 = vld [vmem:[%s1 + $0x198] sm:$0xff]
    %v110 = vld [vmem:[%s1 + $0x1a0] sm:$0xff]
    %v111 = vld [vmem:[%s1 + $0x1a8] sm:$0xff]
    %v112 = vld [vmem:[%s1 + $0x1b0] sm:$0xff]
    %v113 = vld [vmem:[%s1 + $0x1b8] sm:$0xff]
    %v114 = vld [vmem:[%s1 + $0x1c0] sm:$0xff]
    %v115 = vld [vmem:[%s1 + $0x1c8] sm:$0xff]
    %v116 = vld [vmem:[%s1 + $0x1d0] sm:$0xff]
    %v117 = vld [vmem:[%s1 + $0x1d8] sm:$0xff]
    %v118 = vld [vmem:[%s1 + $0x1e0] sm:$0xff]
    %v119 = vld [vmem:[%s1 + $0x1e8] sm:$0xff]
    %v120 = vld [vmem:[%s1 + $0x1f0] sm:$0xff]
    %v121 = vld [vmem:[%s1 + $0x1f8] sm:$0xff]
    %v122 = vld [vmem:[#allocation2] sm:$0x3]
    %v124 = vlaneseq
    %v125 = vshrl.u32 %v124, 7
    %v126 = vsub.s32 0, %v125
    %v127 = vrot.slane %v122, %v126
    %v128 = vlaneseq
    %v129 = vshrl.u32 %v128, 7
    %v130 = vsub.s32 1, %v129
    %v131 = vrot.slane %v122, %v130
    %v166 = vunpack.c.l.b16 %v26
    %v167 = vunpack.c.h.b16 %v26
    %v168 = vunpack.c.l.b16 %v27
    %v169 = vunpack.c.h.b16 %v27
    %v170 = vunpack.c.l.b16 %v28
    %v171 = vunpack.c.h.b16 %v28
    %v172 = vunpack.c.l.b16 %v29
    %v173 = vunpack.c.h.b16 %v29
    %v174 = vunpack.c.l.b16 %v30
    %v175 = vunpack.c.h.b16 %v30
    %v176 = vunpack.c.l.b16 %v31
    %v177 = vunpack.c.h.b16 %v31
    %v178 = vunpack.c.l.b16 %v32
    %v179 = vunpack.c.h.b16 %v32
    %v180 = vunpack.c.l.b16 %v33
    %v181 = vunpack.c.h.b16 %v33
    %v182 = vunpack.c.l.b16 %v34
    %v183 = vunpack.c.h.b16 %v34
    %v184 = vunpack.c.l.b16 %v35
    %v185 = vunpack.c.h.b16 %v35
    %v186 = vunpack.c.l.b16 %v36
    %v187 = vunpack.c.h.b16 %v36
    %v188 = vunpack.c.l.b16 %v37
    %v189 = vunpack.c.h.b16 %v37
    %v190 = vunpack.c.l.b16 %v38
    %v191 = vunpack.c.h.b16 %v38
    %v192 = vunpack.c.l.b16 %v39
    %v193 = vunpack.c.h.b16 %v39
    %v194 = vunpack.c.l.b16 %v40
    %v195 = vunpack.c.h.b16 %v40
    %v196 = vunpack.c.l.b16 %v41
    %v197 = vunpack.c.h.b16 %v41
    %v198 = vunpack.c.l.b16 %v42
    %v199 = vunpack.c.h.b16 %v42
    %v200 = vunpack.c.l.b16 %v43
    %v201 = vunpack.c.h.b16 %v43
    %v202 = vunpack.c.l.b16 %v44
    %v203 = vunpack.c.h.b16 %v44
    %v204 = vunpack.c.l.b16 %v45
    %v205 = vunpack.c.h.b16 %v45
    %v206 = vunpack.c.l.b16 %v46
    %v207 = vunpack.c.h.b16 %v46
    %v208 = vunpack.c.l.b16 %v47
    %v209 = vunpack.c.h.b16 %v47
    %v210 = vunpack.c.l.b16 %v48
    %v211 = vunpack.c.h.b16 %v48
    %v212 = vunpack.c.l.b16 %v49
    %v213 = vunpack.c.h.b16 %v49
    %v214 = vunpack.c.l.b16 %v50
    %v215 = vunpack.c.h.b16 %v50
    %v216 = vunpack.c.l.b16 %v51
    %v217 = vunpack.c.h.b16 %v51
    %v218 = vunpack.c.l.b16 %v52
    %v219 = vunpack.c.h.b16 %v52
    %v220 = vunpack.c.l.b16 %v53
    %v221 = vunpack.c.h.b16 %v53
    %v222 = vunpack.c.l.b16 %v54
    %v223 = vunpack.c.h.b16 %v54
    %v224 = vunpack.c.l.b16 %v55
    %v225 = vunpack.c.h.b16 %v55
    %v226 = vunpack.c.l.b16 %v56
    %v227 = vunpack.c.h.b16 %v56
    %v228 = vunpack.c.l.b16 %v57
    %v229 = vunpack.c.h.b16 %v57
    %v230 = vpack.c.b16 %v170, %v166
    %v231 = vpack.c.b16 %v171, %v167
    %v232 = vpack.c.b16 %v172, %v168
    %v233 = vpack.c.b16 %v173, %v169
    %v234 = vpack.c.b16 %v178, %v174
    %v235 = vpack.c.b16 %v179, %v175
    %v236 = vpack.c.b16 %v180, %v176
    %v237 = vpack.c.b16 %v181, %v177
    %v238 = vpack.c.b16 %v186, %v182
    %v239 = vpack.c.b16 %v187, %v183
    %v240 = vpack.c.b16 %v188, %v184
    %v241 = vpack.c.b16 %v189, %v185
    %v242 = vpack.c.b16 %v194, %v190
    %v243 = vpack.c.b16 %v195, %v191
    %v244 = vpack.c.b16 %v196, %v192
    %v245 = vpack.c.b16 %v197, %v193
    %v246 = vpack.c.b16 %v202, %v198
    %v247 = vpack.c.b16 %v203, %v199
    %v248 = vpack.c.b16 %v204, %v200
    %v249 = vpack.c.b16 %v205, %v201
    %v250 = vpack.c.b16 %v210, %v206
    %v251 = vpack.c.b16 %v211, %v207
    %v252 = vpack.c.b16 %v212, %v208
    %v253 = vpack.c.b16 %v213, %v209
    %v254 = vpack.c.b16 %v218, %v214
    %v255 = vpack.c.b16 %v219, %v215
    %v256 = vpack.c.b16 %v220, %v216
    %v257 = vpack.c.b16 %v221, %v217
    %v258 = vpack.c.b16 %v226, %v222
    %v259 = vpack.c.b16 %v227, %v223
    %v260 = vpack.c.b16 %v228, %v224
    %v261 = vpack.c.b16 %v229, %v225
    %v358 = vunpack.c.l.b16 %v58
    %v359 = vunpack.c.h.b16 %v58
    %v360 = vunpack.c.l.b16 %v59
    %v361 = vunpack.c.h.b16 %v59
    %v362 = vunpack.c.l.b16 %v60
    %v363 = vunpack.c.h.b16 %v60
    %v364 = vunpack.c.l.b16 %v61
    %v365 = vunpack.c.h.b16 %v61
    %v366 = vunpack.c.l.b16 %v62
    %v367 = vunpack.c.h.b16 %v62
    %v368 = vunpack.c.l.b16 %v63
    %v369 = vunpack.c.h.b16 %v63
    %v370 = vunpack.c.l.b16 %v64
    %v371 = vunpack.c.h.b16 %v64
    %v372 = vunpack.c.l.b16 %v65
    %v373 = vunpack.c.h.b16 %v65
    %v374 = vunpack.c.l.b16 %v66
    %v375 = vunpack.c.h.b16 %v66
    %v376 = vunpack.c.l.b16 %v67
    %v377 = vunpack.c.h.b16 %v67
    %v378 = vunpack.c.l.b16 %v68
    %v379 = vunpack.c.h.b16 %v68
    %v380 = vunpack.c.l.b16 %v69
    %v381 = vunpack.c.h.b16 %v69
    %v382 = vunpack.c.l.b16 %v70
    %v383 = vunpack.c.h.b16 %v70
    %v384 = vunpack.c.l.b16 %v71
    %v385 = vunpack.c.h.b16 %v71
    %v386 = vunpack.c.l.b16 %v72
    %v387 = vunpack.c.h.b16 %v72
    %v388 = vunpack.c.l.b16 %v73
    %v389 = vunpack.c.h.b16 %v73
    %v390 = vunpack.c.l.b16 %v74
    %v391 = vunpack.c.h.b16 %v74
    %v392 = vunpack.c.l.b16 %v75
    %v393 = vunpack.c.h.b16 %v75
    %v394 = vunpack.c.l.b16 %v76
    %v395 = vunpack.c.h.b16 %v76
    %v396 = vunpack.c.l.b16 %v77
    %v397 = vunpack.c.h.b16 %v77
    %v398 = vunpack.c.l.b16 %v78
    %v399 = vunpack.c.h.b16 %v78
    %v400 = vunpack.c.l.b16 %v79
    %v401 = vunpack.c.h.b16 %v79
    %v402 = vunpack.c.l.b16 %v80
    %v403 = vunpack.c.h.b16 %v80
    %v404 = vunpack.c.l.b16 %v81
    %v405 = vunpack.c.h.b16 %v81
    %v406 = vunpack.c.l.b16 %v82
    %v407 = vunpack.c.h.b16 %v82
    %v408 = vunpack.c.l.b16 %v83
    %v409 = vunpack.c.h.b16 %v83
    %v410 = vunpack.c.l.b16 %v84
    %v411 = vunpack.c.h.b16 %v84
    %v412 = vunpack.c.l.b16 %v85
    %v413 = vunpack.c.h.b16 %v85
    %v414 = vunpack.c.l.b16 %v86
    %v415 = vunpack.c.h.b16 %v86
    %v416 = vunpack.c.l.b16 %v87
    %v417 = vunpack.c.h.b16 %v87
    %v418 = vunpack.c.l.b16 %v88
    %v419 = vunpack.c.h.b16 %v88
    %v420 = vunpack.c.l.b16 %v89
    %v421 = vunpack.c.h.b16 %v89
    %v422 = vunpack.c.l.b16 %v90
    %v423 = vunpack.c.h.b16 %v90
    %v424 = vunpack.c.l.b16 %v91
    %v425 = vunpack.c.h.b16 %v91
    %v426 = vunpack.c.l.b16 %v92
    %v427 = vunpack.c.h.b16 %v92
    %v428 = vunpack.c.l.b16 %v93
    %v429 = vunpack.c.h.b16 %v93
    %v430 = vunpack.c.l.b16 %v94
    %v431 = vunpack.c.h.b16 %v94
    %v432 = vunpack.c.l.b16 %v95
    %v433 = vunpack.c.h.b16 %v95
    %v434 = vunpack.c.l.b16 %v96
    %v435 = vunpack.c.h.b16 %v96
    %v436 = vunpack.c.l.b16 %v97
    %v437 = vunpack.c.h.b16 %v97
    %v438 = vunpack.c.l.b16 %v98
    %v439 = vunpack.c.h.b16 %v98
    %v440 = vunpack.c.l.b16 %v99
    %v441 = vunpack.c.h.b16 %v99
    %v442 = vunpack.c.l.b16 %v100
    %v443 = vunpack.c.h.b16 %v100
    %v444 = vunpack.c.l.b16 %v101
    %v445 = vunpack.c.h.b16 %v101
    %v446 = vunpack.c.l.b16 %v102
    %v447 = vunpack.c.h.b16 %v102
    %v448 = vunpack.c.l.b16 %v103
    %v449 = vunpack.c.h.b16 %v103
    %v450 = vunpack.c.l.b16 %v104
    %v451 = vunpack.c.h.b16 %v104
    %v452 = vunpack.c.l.b16 %v105
    %v453 = vunpack.c.h.b16 %v105
    %v454 = vunpack.c.l.b16 %v106
    %v455 = vunpack.c.h.b16 %v106
    %v456 = vunpack.c.l.b16 %v107
    %v457 = vunpack.c.h.b16 %v107
    %v458 = vunpack.c.l.b16 %v108
    %v459 = vunpack.c.h.b16 %v108
    %v460 = vunpack.c.l.b16 %v109
    %v461 = vunpack.c.h.b16 %v109
    %v462 = vunpack.c.l.b16 %v110
    %v463 = vunpack.c.h.b16 %v110
    %v464 = vunpack.c.l.b16 %v111
    %v465 = vunpack.c.h.b16 %v111
    %v466 = vunpack.c.l.b16 %v112
    %v467 = vunpack.c.h.b16 %v112
    %v468 = vunpack.c.l.b16 %v113
    %v469 = vunpack.c.h.b16 %v113
    %v470 = vunpack.c.l.b16 %v114
    %v471 = vunpack.c.h.b16 %v114
    %v472 = vunpack.c.l.b16 %v115
    %v473 = vunpack.c.h.b16 %v115
    %v474 = vunpack.c.l.b16 %v116
    %v475 = vunpack.c.h.b16 %v116
    %v476 = vunpack.c.l.b16 %v117
    %v477 = vunpack.c.h.b16 %v117
    %v478 = vunpack.c.l.b16 %v118
    %v479 = vunpack.c.h.b16 %v118
    %v480 = vunpack.c.l.b16 %v119
    %v481 = vunpack.c.h.b16 %v119
    %v482 = vunpack.c.l.b16 %v120
    %v483 = vunpack.c.h.b16 %v120
    %v484 = vunpack.c.l.b16 %v121
    %v485 = vunpack.c.h.b16 %v121
    %v486 = vpack.c.b16 %v360, %v358
    %v487 = vpack.c.b16 %v361, %v359
    %v488 = vpack.c.b16 %v364, %v362
    %v489 = vpack.c.b16 %v365, %v363
    %v490 = vpack.c.b16 %v368, %v366
    %v491 = vpack.c.b16 %v369, %v367
    %v492 = vpack.c.b16 %v372, %v370
    %v493 = vpack.c.b16 %v373, %v371
    %v494 = vpack.c.b16 %v376, %v374
    %v495 = vpack.c.b16 %v377, %v375
    %v496 = vpack.c.b16 %v380, %v378
    %v497 = vpack.c.b16 %v381, %v379
    %v498 = vpack.c.b16 %v384, %v382
    %v499 = vpack.c.b16 %v385, %v383
    %v500 = vpack.c.b16 %v388, %v386
    %v501 = vpack.c.b16 %v389, %v387
    %v502 = vpack.c.b16 %v392, %v390
    %v503 = vpack.c.b16 %v393, %v391
    %v504 = vpack.c.b16 %v396, %v394
    %v505 = vpack.c.b16 %v397, %v395
    %v506 = vpack.c.b16 %v400, %v398
    %v507 = vpack.c.b16 %v401, %v399
    %v508 = vpack.c.b16 %v404, %v402
    %v509 = vpack.c.b16 %v405, %v403
    %v510 = vpack.c.b16 %v408, %v406
    %v511 = vpack.c.b16 %v409, %v407
    %v512 = vpack.c.b16 %v412, %v410
    %v513 = vpack.c.b16 %v413, %v411
    %v514 = vpack.c.b16 %v416, %v414
    %v515 = vpack.c.b16 %v417, %v415
    %v516 = vpack.c.b16 %v420, %v418
    %v517 = vpack.c.b16 %v421, %v419
    %v518 = vpack.c.b16 %v424, %v422
    %v519 = vpack.c.b16 %v425, %v423
    %v520 = vpack.c.b16 %v428, %v426
    %v521 = vpack.c.b16 %v429, %v427
    %v522 = vpack.c.b16 %v432, %v430
    %v523 = vpack.c.b16 %v433, %v431
    %v524 = vpack.c.b16 %v436, %v434
    %v525 = vpack.c.b16 %v437, %v435
    %v526 = vpack.c.b16 %v440, %v438
    %v527 = vpack.c.b16 %v441, %v439
    %v528 = vpack.c.b16 %v444, %v442
    %v529 = vpack.c.b16 %v445, %v443
    %v530 = vpack.c.b16 %v448, %v446
    %v531 = vpack.c.b16 %v449, %v447
    %v532 = vpack.c.b16 %v452, %v450
    %v533 = vpack.c.b16 %v453, %v451
    %v534 = vpack.c.b16 %v456, %v454
    %v535 = vpack.c.b16 %v457, %v455
    %v536 = vpack.c.b16 %v460, %v458
    %v537 = vpack.c.b16 %v461, %v459
    %v538 = vpack.c.b16 %v464, %v462
    %v539 = vpack.c.b16 %v465, %v463
    %v540 = vpack.c.b16 %v468, %v466
    %v541 = vpack.c.b16 %v469, %v467
    %v542 = vpack.c.b16 %v472, %v470
    %v543 = vpack.c.b16 %v473, %v471
    %v544 = vpack.c.b16 %v476, %v474
    %v545 = vpack.c.b16 %v477, %v475
    %v546 = vpack.c.b16 %v480, %v478
    %v547 = vpack.c.b16 %v481, %v479
    %v548 = vpack.c.b16 %v484, %v482
    %v549 = vpack.c.b16 %v485, %v483
    %614 = vmatprep.subr.bf16.mxu0 %v487
    %615 = vmatpush1.bf16.msra.mxu0 %v486
    %616 = vmatprep.subr.bf16.mxu0 %v489
    %617 = vmatpush1.bf16.msra.mxu0 %v488
    %618 = vmatprep.subr.bf16.mxu0 %v491
    %619 = vmatpush1.bf16.msra.mxu0 %v490
    %620 = vmatprep.subr.bf16.mxu0 %v493
    %621 = vmatpush1.bf16.msra.mxu0 %v492
    %622 = vmatprep.subr.bf16.mxu0 %v495
    %623 = vmatpush1.bf16.msra.mxu0 %v494
    %624 = vmatprep.subr.bf16.mxu0 %v497
    %625 = vmatpush1.bf16.msra.mxu0 %v496
    %626 = vmatprep.subr.bf16.mxu0 %v499
    %627 = vmatpush1.bf16.msra.mxu0 %v498
    %628 = vmatprep.subr.bf16.mxu0 %v501
    %629 = vmatpush1.bf16.msra.mxu0 %v500
    %630 = vmatprep.subr.bf16.mxu0 %v503
    %631 = vmatpush1.bf16.msra.mxu0 %v502
    %632 = vmatprep.subr.bf16.mxu0 %v505
    %633 = vmatpush1.bf16.msra.mxu0 %v504
    %634 = vmatprep.subr.bf16.mxu0 %v507
    %635 = vmatpush1.bf16.msra.mxu0 %v506
    %636 = vmatprep.subr.bf16.mxu0 %v509
    %637 = vmatpush1.bf16.msra.mxu0 %v508
    %638 = vmatprep.subr.bf16.mxu0 %v511
    %639 = vmatpush1.bf16.msra.mxu0 %v510
    %640 = vmatprep.subr.bf16.mxu0 %v513
    %641 = vmatpush1.bf16.msra.mxu0 %v512
    %642 = vmatprep.subr.bf16.mxu0 %v515
    %643 = vmatpush1.bf16.msra.mxu0 %v514
    %644 = vmatprep.subr.bf16.mxu0 %v517
    %645 = vmatpush1.bf16.msra.mxu0 %v516
    %646 = vmatprep.mubr.bf16.mxu0 %v231
    %647 = vmatmul.mubr.bf16.gmra.mrb[0].mxu0 %v230
    %v648 = vpop.f32.mrb[0].mxu0
    %v649 = vadd.f32 %v127, %v648
    %v650 = vpop.f32.mrb[0].mxu0
    %v651 = vadd.f32 %v131, %v650
    %v652 = vpop.f32.mrb[0].mxu0
    %v653 = vadd.f32 %v127, %v652
    %v654 = vpop.f32.mrb[0].mxu0
    %v655 = vadd.f32 %v131, %v654
    %656 = vmatprep.mubr.bf16.mxu0 %v235
    %657 = vmatmul.mubr.bf16.gmra.mrb[0].mxu0 %v234
    %v658 = vpop.f32.mrb[0].mxu0
    %v659 = vadd.f32 %v127, %v658
    %v660 = vpop.f32.mrb[0].mxu0
    %v661 = vadd.f32 %v131, %v660
    %v662 = vpop.f32.mrb[0].mxu0
    %v663 = vadd.f32 %v127, %v662
    %v664 = vpop.f32.mrb[0].mxu0
    %v665 = vadd.f32 %v131, %v664
    %666 = vmatprep.mubr.bf16.mxu0 %v239
    %667 = vmatmul.mubr.bf16.gmra.mrb[0].mxu0 %v238
    %v668 = vpop.f32.mrb[0].mxu0
    %v669 = vadd.f32 %v127, %v668
    %v670 = vpop.f32.mrb[0].mxu0
    %v671 = vadd.f32 %v131, %v670
    %v672 = vpop.f32.mrb[0].mxu0
    %v673 = vadd.f32 %v127, %v672
    %v674 = vpop.f32.mrb[0].mxu0
    %v675 = vadd.f32 %v131, %v674
    %676 = vmatprep.mubr.bf16.mxu0 %v243
    %677 = vmatmul.mubr.bf16.gmra.mrb[0].mxu0 %v242
    %v678 = vpop.f32.mrb[0].mxu0
    %v679 = vadd.f32 %v127, %v678
    %v680 = vpop.f32.mrb[0].mxu0
    %v681 = vadd.f32 %v131, %v680
    %v682 = vpop.f32.mrb[0].mxu0
    %v683 = vadd.f32 %v127, %v682
    %v684 = vpop.f32.mrb[0].mxu0
    %v685 = vadd.f32 %v131, %v684
    %686 = vmatprep.mubr.bf16.mxu0 %v247
    %687 = vmatmul.mubr.bf16.gmra.mrb[0].mxu0 %v246
    %v688 = vpop.f32.mrb[0].mxu0
    %v689 = vadd.f32 %v127, %v688
    %v690 = vpop.f32.mrb[0].mxu0
    %v691 = vadd.f32 %v131, %v690
    %v692 = vpop.f32.mrb[0].mxu0
    %v693 = vadd.f32 %v127, %v692
    %v694 = vpop.f32.mrb[0].mxu0
    %v695 = vadd.f32 %v131, %v694
    %696 = vmatprep.mubr.bf16.mxu0 %v251
    %697 = vmatmul.mubr.bf16.gmra.mrb[0].mxu0 %v250
    %v698 = vpop.f32.mrb[0].mxu0
    %v699 = vadd.f32 %v127, %v698
    %v700 = vpop.f32.mrb[0].mxu0
    %v701 = vadd.f32 %v131, %v700
    %v702 = vpop.f32.mrb[0].mxu0
    %v703 = vadd.f32 %v127, %v702
    %v704 = vpop.f32.mrb[0].mxu0
    %v705 = vadd.f32 %v131, %v704
    %706 = vmatprep.mubr.bf16.mxu0 %v255
    %707 = vmatmul.mubr.bf16.gmra.mrb[0].mxu0 %v254
    %v708 = vpop.f32.mrb[0].mxu0
    %v709 = vadd.f32 %v127, %v708
    %v710 = vpop.f32.mrb[0].mxu0
    %v711 = vadd.f32 %v131, %v710
    %v712 = vpop.f32.mrb[0].mxu0
    %v713 = vadd.f32 %v127, %v712
    %v714 = vpop.f32.mrb[0].mxu0
    %v715 = vadd.f32 %v131, %v714
    %716 = vmatprep.mubr.bf16.mxu0 %v259
    %717 = vmatmul.mubr.bf16.gmra.mrb[0].mxu0 %v258
    %v718 = vpop.f32.mrb[0].mxu0
    %v719 = vadd.f32 %v127, %v718
    %v720 = vpop.f32.mrb[0].mxu0
    %v721 = vadd.f32 %v131, %v720
    %v722 = vpop.f32.mrb[0].mxu0
    %v723 = vadd.f32 %v127, %v722
    %v724 = vpop.f32.mrb[0].mxu0
    %v725 = vadd.f32 %v131, %v724
    %726 = vdwg.mxu0
    %727 = vmatprep.subr.bf16.mxu0 %v519
    %728 = vmatpush1.bf16.msra.mxu0 %v518
    %729 = vmatprep.subr.bf16.mxu0 %v521
    %730 = vmatpush1.bf16.msra.mxu0 %v520
    %731 = vmatprep.subr.bf16.mxu0 %v523
    %732 = vmatpush1.bf16.msra.mxu0 %v522
    %733 = vmatprep.subr.bf16.mxu0 %v525
    %734 = vmatpush1.bf16.msra.mxu0 %v524
    %735 = vmatprep.subr.bf16.mxu0 %v527
    %736 = vmatpush1.bf16.msra.mxu0 %v526
    %737 = vmatprep.subr.bf16.mxu0 %v529
    %738 = vmatpush1.bf16.msra.mxu0 %v528
    %739 = vmatprep.subr.bf16.mxu0 %v531
    %740 = vmatpush1.bf16.msra.mxu0 %v530
    %741 = vmatprep.subr.bf16.mxu0 %v533
    %742 = vmatpush1.bf16.msra.mxu0 %v532
    %743 = vmatprep.subr.bf16.mxu0 %v535
    %744 = vmatpush1.bf16.msra.mxu0 %v534
    %745 = vmatprep.subr.bf16.mxu0 %v537
    %746 = vmatpush1.bf16.msra.mxu0 %v536
    %747 = vmatprep.subr.bf16.mxu0 %v539
    %748 = vmatpush1.bf16.msra.mxu0 %v538
    %749 = vmatprep.subr.bf16.mxu0 %v541
    %750 = vmatpush1.bf16.msra.mxu0 %v540
    %751 = vmatprep.subr.bf16.mxu0 %v543
    %752 = vmatpush1.bf16.msra.mxu0 %v542
    %753 = vmatprep.subr.bf16.mxu0 %v545
    %754 = vmatpush1.bf16.msra.mxu0 %v544
    %755 = vmatprep.subr.bf16.mxu0 %v547
    %756 = vmatpush1.bf16.msra.mxu0 %v546
    %757 = vmatprep.subr.bf16.mxu0 %v549
    %758 = vmatpush1.bf16.msra.mxu0 %v548
    %759 = vmatprep.mubr.bf16.mxu0 %v233
    %760 = vmatmul.mubr.bf16.gmra.mrb[0].mxu0 %v232
    %v761 = vpop.f32.mrb[0].mxu0
    %v762 = vadd.f32 %v649, %v761
    %v763 = vpop.f32.mrb[0].mxu0
    %v764 = vadd.f32 %v651, %v763
    %v765 = vpop.f32.mrb[0].mxu0
    %v766 = vadd.f32 %v653, %v765
    %v767 = vpop.f32.mrb[0].mxu0
    %v768 = vadd.f32 %v655, %v767
    %769 = vmatprep.mubr.bf16.mxu0 %v237
    %770 = vmatmul.mubr.bf16.gmra.mrb[0].mxu0 %v236
    %v771 = vpop.f32.mrb[0].mxu0
    %v772 = vadd.f32 %v659, %v771
    %v773 = vpop.f32.mrb[0].mxu0
    %v774 = vadd.f32 %v661, %v773
    %v775 = vpop.f32.mrb[0].mxu0
    %v776 = vadd.f32 %v663, %v775
    %v777 = vpop.f32.mrb[0].mxu0
    %v778 = vadd.f32 %v665, %v777
    %779 = vmatprep.mubr.bf16.mxu0 %v241
    %780 = vmatmul.mubr.bf16.gmra.mrb[0].mxu0 %v240
    %v781 = vpop.f32.mrb[0].mxu0
    %v782 = vadd.f32 %v669, %v781
    %v783 = vpop.f32.mrb[0].mxu0
    %v784 = vadd.f32 %v671, %v783
    %v785 = vpop.f32.mrb[0].mxu0
    %v786 = vadd.f32 %v673, %v785
    %v787 = vpop.f32.mrb[0].mxu0
    %v788 = vadd.f32 %v675, %v787
    %789 = vmatprep.mubr.bf16.mxu0 %v245
    %790 = vmatmul.mubr.bf16.gmra.mrb[0].mxu0 %v244
    %v791 = vpop.f32.mrb[0].mxu0
    %v792 = vadd.f32 %v679, %v791
    %v793 = vpop.f32.mrb[0].mxu0
    %v794 = vadd.f32 %v681, %v793
    %v795 = vpop.f32.mrb[0].mxu0
    %v796 = vadd.f32 %v683, %v795
    %v797 = vpop.f32.mrb[0].mxu0
    %v798 = vadd.f32 %v685, %v797
    %799 = vmatprep.mubr.bf16.mxu0 %v249
    %800 = vmatmul.mubr.bf16.gmra.mrb[0].mxu0 %v248
    %v801 = vpop.f32.mrb[0].mxu0
    %v802 = vadd.f32 %v689, %v801
    %v803 = vpop.f32.mrb[0].mxu0
    %v804 = vadd.f32 %v691, %v803
    %v805 = vpop.f32.mrb[0].mxu0
    %v806 = vadd.f32 %v693, %v805
    %v807 = vpop.f32.mrb[0].mxu0
    %v808 = vadd.f32 %v695, %v807
    %809 = vmatprep.mubr.bf16.mxu0 %v253
    %810 = vmatmul.mubr.bf16.gmra.mrb[0].mxu0 %v252
    %v811 = vpop.f32.mrb[0].mxu0
    %v812 = vadd.f32 %v699, %v811
    %v813 = vpop.f32.mrb[0].mxu0
    %v814 = vadd.f32 %v701, %v813
    %v815 = vpop.f32.mrb[0].mxu0
    %v816 = vadd.f32 %v703, %v815
    %v817 = vpop.f32.mrb[0].mxu0
    %v818 = vadd.f32 %v705, %v817
    %819 = vmatprep.mubr.bf16.mxu0 %v257
    %820 = vmatmul.mubr.bf16.gmra.mrb[0].mxu0 %v256
    %v821 = vpop.f32.mrb[0].mxu0
    %v822 = vadd.f32 %v709, %v821
    %v823 = vpop.f32.mrb[0].mxu0
    %v824 = vadd.f32 %v711, %v823
    %v825 = vpop.f32.mrb[0].mxu0
    %v826 = vadd.f32 %v713, %v825
    %v827 = vpop.f32.mrb[0].mxu0
    %v828 = vadd.f32 %v715, %v827
    %829 = vmatprep.mubr.bf16.mxu0 %v261
    %830 = vmatmul.mubr.bf16.gmra.mrb[0].mxu0 %v260
    %v831 = vpop.f32.mrb[0].mxu0
    %v832 = vadd.f32 %v719, %v831
    %v833 = vpop.f32.mrb[0].mxu0
    %v834 = vadd.f32 %v721, %v833
    %v835 = vpop.f32.mrb[0].mxu0
    %v836 = vadd.f32 %v723, %v835
    %v837 = vpop.f32.mrb[0].mxu0
    %v838 = vadd.f32 %v725, %v837
    %839 = vdwg.mxu0
    %vm840 = vcmp.ge.f32.partialorder %v762, 0.0
    %vm841 = vcmp.ge.f32.partialorder %v764, 0.0
    %vm842 = vcmp.ge.f32.partialorder %v766, 0.0
    %vm843 = vcmp.ge.f32.partialorder %v768, 0.0
    %vm844 = vcmp.ge.f32.partialorder %v772, 0.0
    %vm845 = vcmp.ge.f32.partialorder %v774, 0.0
    %vm846 = vcmp.ge.f32.partialorder %v776, 0.0
    %vm847 = vcmp.ge.f32.partialorder %v778, 0.0
    %vm848 = vcmp.ge.f32.partialorder %v782, 0.0
    %vm849 = vcmp.ge.f32.partialorder %v784, 0.0
    %vm850 = vcmp.ge.f32.partialorder %v786, 0.0
    %vm851 = vcmp.ge.f32.partialorder %v788, 0.0
    %vm852 = vcmp.ge.f32.partialorder %v792, 0.0
    %vm853 = vcmp.ge.f32.partialorder %v794, 0.0
    %vm854 = vcmp.ge.f32.partialorder %v796, 0.0
    %vm855 = vcmp.ge.f32.partialorder %v798, 0.0
    %vm856 = vcmp.ge.f32.partialorder %v802, 0.0
    %vm857 = vcmp.ge.f32.partialorder %v804, 0.0
    %vm858 = vcmp.ge.f32.partialorder %v806, 0.0
    %vm859 = vcmp.ge.f32.partialorder %v808, 0.0
    %vm860 = vcmp.ge.f32.partialorder %v812, 0.0
    %vm861 = vcmp.ge.f32.partialorder %v814, 0.0
    %vm862 = vcmp.ge.f32.partialorder %v816, 0.0
    %vm863 = vcmp.ge.f32.partialorder %v818, 0.0
    %vm864 = vcmp.ge.f32.partialorder %v822, 0.0
    %vm865 = vcmp.ge.f32.partialorder %v824, 0.0
    %vm866 = vcmp.ge.f32.partialorder %v826, 0.0
    %vm867 = vcmp.ge.f32.partialorder %v828, 0.0
    %vm868 = vcmp.ge.f32.partialorder %v832, 0.0
    %vm869 = vcmp.ge.f32.partialorder %v834, 0.0
    %vm870 = vcmp.ge.f32.partialorder %v836, 0.0
    %vm871 = vcmp.ge.f32.partialorder %v838, 0.0
    %v872 = vmul.f32 %v762, 0.01
    %v873 = vmul.f32 %v764, 0.01
    %v874 = vmul.f32 %v766, 0.01
    %v875 = vmul.f32 %v768, 0.01
    %v876 = vmul.f32 %v772, 0.01
    %v877 = vmul.f32 %v774, 0.01
    %v878 = vmul.f32 %v776, 0.01
    %v879 = vmul.f32 %v778, 0.01
    %v880 = vmul.f32 %v782, 0.01
    %v881 = vmul.f32 %v784, 0.01
    %v882 = vmul.f32 %v786, 0.01
    %v883 = vmul.f32 %v788, 0.01
    %v884 = vmul.f32 %v792, 0.01
    %v885 = vmul.f32 %v794, 0.01
    %v886 = vmul.f32 %v796, 0.01
    %v887 = vmul.f32 %v798, 0.01
    %v888 = vmul.f32 %v802, 0.01
    %v889 = vmul.f32 %v804, 0.01
    %v890 = vmul.f32 %v806, 0.01
    %v891 = vmul.f32 %v808, 0.01
    %v892 = vmul.f32 %v812, 0.01
    %v893 = vmul.f32 %v814, 0.01
    %v894 = vmul.f32 %v816, 0.01
    %v895 = vmul.f32 %v818, 0.01
    %v896 = vmul.f32 %v822, 0.01
    %v897 = vmul.f32 %v824, 0.01
    %v898 = vmul.f32 %v826, 0.01
    %v899 = vmul.f32 %v828, 0.01
    %v900 = vmul.f32 %v832, 0.01
    %v901 = vmul.f32 %v834, 0.01
    %v902 = vmul.f32 %v836, 0.01
    %v903 = vmul.f32 %v838, 0.01
    %v904 = vsel %vm840, %v762, %v872
    %v905 = vsel %vm841, %v764, %v873
    %v906 = vsel %vm842, %v766, %v874
    %v907 = vsel %vm843, %v768, %v875
    %v908 = vsel %vm844, %v772, %v876
    %v909 = vsel %vm845, %v774, %v877
    %v910 = vsel %vm846, %v776, %v878
    %v911 = vsel %vm847, %v778, %v879
    %v912 = vsel %vm848, %v782, %v880
    %v913 = vsel %vm849, %v784, %v881
    %v914 = vsel %vm850, %v786, %v882
    %v915 = vsel %vm851, %v788, %v883
    %v916 = vsel %vm852, %v792, %v884
    %v917 = vsel %vm853, %v794, %v885
    %v918 = vsel %vm854, %v796, %v886
    %v919 = vsel %vm855, %v798, %v887
    %v920 = vsel %vm856, %v802, %v888
    %v921 = vsel %vm857, %v804, %v889
    %v922 = vsel %vm858, %v806, %v890
    %v923 = vsel %vm859, %v808, %v891
    %v924 = vsel %vm860, %v812, %v892
    %v925 = vsel %vm861, %v814, %v893
    %v926 = vsel %vm862, %v816, %v894
    %v927 = vsel %vm863, %v818, %v895
    %v928 = vsel %vm864, %v822, %v896
    %v929 = vsel %vm865, %v824, %v897
    %v930 = vsel %vm866, %v826, %v898
    %v931 = vsel %vm867, %v828, %v899
    %v932 = vsel %vm868, %v832, %v900
    %v933 = vsel %vm869, %v834, %v901
    %v934 = vsel %vm870, %v836, %v902
    %v935 = vsel %vm871, %v838, %v903
    %v936 = vpack.c.bf16 %v906, %v904
    %v937 = vpack.c.bf16 %v907, %v905
    %v938 = vpack.c.bf16 %v910, %v908
    %v939 = vpack.c.bf16 %v911, %v909
    %v940 = vpack.c.bf16 %v914, %v912
    %v941 = vpack.c.bf16 %v915, %v913
    %v942 = vpack.c.bf16 %v918, %v916
    %v943 = vpack.c.bf16 %v919, %v917
    %v944 = vpack.c.bf16 %v922, %v920
    %v945 = vpack.c.bf16 %v923, %v921
    %v946 = vpack.c.bf16 %v926, %v924
    %v947 = vpack.c.bf16 %v927, %v925
    %v948 = vpack.c.bf16 %v930, %v928
    %v949 = vpack.c.bf16 %v931, %v929
    %v950 = vpack.c.bf16 %v934, %v932
    %v951 = vpack.c.bf16 %v935, %v933
    %v968 = vunpack.c.l.b16 %v936
    %v969 = vunpack.c.l.b16 %v937
    %v970 = vunpack.c.h.b16 %v936
    %v971 = vunpack.c.h.b16 %v937
    %v972 = vunpack.c.l.b16 %v938
    %v973 = vunpack.c.l.b16 %v939
    %v974 = vunpack.c.h.b16 %v938
    %v975 = vunpack.c.h.b16 %v939
    %v976 = vunpack.c.l.b16 %v940
    %v977 = vunpack.c.l.b16 %v941
    %v978 = vunpack.c.h.b16 %v940
    %v979 = vunpack.c.h.b16 %v941
    %v980 = vunpack.c.l.b16 %v942
    %v981 = vunpack.c.l.b16 %v943
    %v982 = vunpack.c.h.b16 %v942
    %v983 = vunpack.c.h.b16 %v943
    %v984 = vunpack.c.l.b16 %v944
    %v985 = vunpack.c.l.b16 %v945
    %v986 = vunpack.c.h.b16 %v944
    %v987 = vunpack.c.h.b16 %v945
    %v988 = vunpack.c.l.b16 %v946
    %v989 = vunpack.c.l.b16 %v947
    %v990 = vunpack.c.h.b16 %v946
    %v991 = vunpack.c.h.b16 %v947
    %v992 = vunpack.c.l.b16 %v948
    %v993 = vunpack.c.l.b16 %v949
    %v994 = vunpack.c.h.b16 %v948
    %v995 = vunpack.c.h.b16 %v949
    %v996 = vunpack.c.l.b16 %v950
    %v997 = vunpack.c.l.b16 %v951
    %v998 = vunpack.c.h.b16 %v950
    %v999 = vunpack.c.h.b16 %v951
    %v1000 = vpack.c.b16 %v969, %v968
    %v1001 = vpack.c.b16 %v971, %v970
    %v1002 = vpack.c.b16 %v973, %v972
    %v1003 = vpack.c.b16 %v975, %v974
    %v1004 = vpack.c.b16 %v977, %v976
    %v1005 = vpack.c.b16 %v979, %v978
    %v1006 = vpack.c.b16 %v981, %v980
    %v1007 = vpack.c.b16 %v983, %v982
    %v1008 = vpack.c.b16 %v985, %v984
    %v1009 = vpack.c.b16 %v987, %v986
    %v1010 = vpack.c.b16 %v989, %v988
    %v1011 = vpack.c.b16 %v991, %v990
    %v1012 = vpack.c.b16 %v993, %v992
    %v1013 = vpack.c.b16 %v995, %v994
    %v1014 = vpack.c.b16 %v997, %v996
    %v1015 = vpack.c.b16 %v999, %v998
    %1032 = vst [vmem:[%s3] sm:$0xff] %v1000
    %1033 = vst [vmem:[%s3 + $0x8] sm:$0xff] %v1001
    %1034 = vst [vmem:[%s3 + $0x10] sm:$0xff] %v1002
    %1035 = vst [vmem:[%s3 + $0x18] sm:$0xff] %v1003
    %1036 = vst [vmem:[%s3 + $0x20] sm:$0xff] %v1004
    %1037 = vst [vmem:[%s3 + $0x28] sm:$0xff] %v1005
    %1038 = vst [vmem:[%s3 + $0x30] sm:$0xff] %v1006
    %1039 = vst [vmem:[%s3 + $0x38] sm:$0xff] %v1007
    %1040 = vst [vmem:[%s3 + $0x40] sm:$0xff] %v1008
    %1041 = vst [vmem:[%s3 + $0x48] sm:$0xff] %v1009
    %1042 = vst [vmem:[%s3 + $0x50] sm:$0xff] %v1010
    %1043 = vst [vmem:[%s3 + $0x58] sm:$0xff] %v1011
    %1044 = vst [vmem:[%s3 + $0x60] sm:$0xff] %v1012
    %1045 = vst [vmem:[%s3 + $0x68] sm:$0xff] %v1013
    %1046 = vst [vmem:[%s3 + $0x70] sm:$0xff] %v1014
    %1047 = vst [vmem:[%s3 + $0x78] sm:$0xff] %v1015
    // Predicated region
    $region18: #{decoder_forward.2} parent=1 // pred_check
      _
    $region19: #{decoder_forward.2} parent=1 // pred_check_branch
      %1049 = sbr.rel (0) target = $region21
    $region20: #{decoder_forward.2} parent=1 // pred_region
      _
    $region21: #{decoder_forward.2} parent=1 // pred_fallthru
      _
    // Predicated region
    $region22: #{decoder_forward.2} parent=1 // pred_check
      _
    $region23: #{decoder_forward.2} parent=1 // pred_check_branch
      %1051 = sbr.rel (0) target = $region25
    $region24: #{decoder_forward.2} parent=1 // pred_region
      _
    $region25: #{decoder_forward.2} parent=1 // pred_fallthru
      _
    %1052 = vsyncpa [#allocation3], 1

// kernel: decoder_forward.3
$region0: #{decoder_forward.3}
  #allocation0 [shape = 'u32[]', space=smem, size = 0x4, offset = 0x4, fixed_abs, tag = 'smem constant byte address 0x4 - core index']
  #allocation1 [shape = 'u32[144,128]{1,0:T(1,128)}', space=vmem, size = 0x12000, scoped, tag = 'internal scratch']
  #allocation2 [shape = 'bf16[128,256]{1,0:T(16,128)(2,1)}', space=vmem, size = 0x10000, scoped, tag = 'scratch operand']
  %s0 = inlined_call_operand.vmem [shape: bf16[2,64,256], index: 0, kind: input, shape index: {}]
  %s1 = inlined_call_operand.vmem [shape: f32[16,8], index: 1, kind: input, shape index: {}]
  %s2 = inlined_call_operand.vmem [shape: bf16[512,256], index: 2, kind: input, shape index: {}]
  %s3 = inlined_call_operand.vmem [shape: bf16[256,48], index: 3, kind: input, shape index: {}]
  %s4 = inlined_call_operand.vmem [shape: f32[1,48], index: 4, kind: input, shape index: {}]
  %s5 = inlined_call_operand.vmem [shape: bf16[256,256], index: 5, kind: input, shape index: {}]
  %s6 = inlined_call_operand.vmem [shape: bf16[48,256], index: 6, kind: input, shape index: {}]
  %s7 = inlined_call_operand.vmem [shape: f32[1,256], index: 7, kind: input, shape index: {}]
  %s8 = inlined_call_operand.vmem [shape: bf16[256,256], index: 8, kind: input, shape index: {}]
  %s9 = inlined_call_operand.vmem [shape: f32[1,256], index: 9, kind: input, shape index: {}]
  %s10 = inlined_call_operand.vmem [shape: bf16[256,128], index: 10, kind: input, shape index: {}]
  %s11 = inlined_call_operand.vmem [shape: f32[1,128], index: 11, kind: input, shape index: {}]
  %s12 = inlined_call_operand.vmem [shape: bf16[512,256], index: 12, kind: output, shape index: {0}]
  %s13 = inlined_call_operand.vmem [shape: bf16[512,128], index: 13, kind: output, shape index: {1}]
  %14 = xla_tuple %s12, %s13
  %s15 = sld [smem:[#allocation0]]
  $region89: #{decoder_forward.3} parent=0
    _
  %s17 = ssub.s32 1, %s15
  %s18 = scalar_select 0, %s17, %s15
  loop: start=0, step=1, limit=6
  $region2: #{decoder_forward.3} parent=0 // loop_pre_header
    _
  $region3: #{decoder_forward.3} parent=0 // loop_header
    %s20 = sphi 0, %s24
    %p21 = scmp.ge.s32.totalorder %s20, 6
    %s27 = sphi 0, %s39
    %s28 = sphi 0, %s35
    %s29 = sphi 0, %s27
    %s30 = sphi 0, %s28
    %s31 = sphi 0, %s29
    %s32 = sphi 0, %s30
    %s42 = sphi 0, %s44
    %s45 = sphi 0, %s42
    %s46 = sphi 0, %s45
    %s62 = sphi 0, %s46
    %s66 = sphi 0, %s66
    %s68 = sphi 0, %s66
    %s69 = sphi 0, %s68
    %s83 = sphi 0, %s69
    %s93 = sphi 0, %s95
    %s96 = sphi 0, %s93
    %s97 = sphi 0, %s96
    %s113 = sphi 0, %s97
    %s117 = sphi 0, %s117
    %s119 = sphi 0, %s117
    %s120 = sphi 0, %s119
    %s134 = sphi 0, %s120
    %s138 = sphi 0, %s138
    %s140 = sphi 0, %s138
    %s141 = sphi 0, %s140
    %s155 = sphi 0, %s141
    %s159 = sphi 0, %s159
    %s161 = sphi 0, %s159
    %s162 = sphi 0, %s161
    %s176 = sphi 0, %s162
    %s180 = sphi 0, %s180
    %s182 = sphi 0, %s180
    %s183 = sphi 0, %s182
    %s197 = sphi 0, %s183
    %s201 = sphi 0, %s201
    %s203 = sphi 0, %s201
    %s204 = sphi 0, %s203
    %s218 = sphi 0, %s204
    %s222 = sphi 0, %s222
    %s224 = sphi 0, %s222
    %s225 = sphi 0, %s224
    %s239 = sphi 0, %s225
    %s243 = sphi 0, %s243
    %s245 = sphi 0, %s243
    %s246 = sphi 0, %s245
    %s260 = sphi 0, %s246
    %s264 = sphi 0, %s264
    %s266 = sphi 0, %s264
    %s267 = sphi 0, %s266
    %s281 = sphi 0, %s267
    %s285 = sphi 0, %s285
    %s287 = sphi 0, %s285
    %s288 = sphi 0, %s287
    %s302 = sphi 0, %s288
    %s312 = sphi 0, %s314
    %s315 = sphi 0, %s312
    %s316 = sphi 0, %s315
    %s332 = sphi 0, %s316
    %s342 = sphi 0, %s344
    %s345 = sphi 0, %s342
    %s346 = sphi 0, %s345
    %s362 = sphi 0, %s346
  $region4: #{decoder_forward.3} parent=0 // loop_header_branch
    %23 = sbr.rel (%p21) target = $region8
  $region5: #{decoder_forward.3} parent=0 // loop_body
    %s25 = ssub.s32 %s20, 1
    %s26 = ssub.s32 %s20, 2
    %s33 = sadd.s32 1, %s28
    %p34 = scmp.ge.s32.totalorder %s33, 2
    %s35 = scalar_select %p34, 0, %s33
    %s36 = sadd.s32 1, %s27
    %s37 = scalar_select %p34, %s36, %s27
    %p38 = scmp.ge.s32.totalorder %s37, 2
    %s39 = scalar_select %p38, 0, %s37
    %s40 = ssub.s32 %s27, %s39
    %p41 = scmp.eq.s32.totalorder %s40, 0
    %s43 = sadd.s32 %s42, 1
    %s44 = scalar_select %p41, %s42, %s43
    %p47 = pneg %p41
    %p48 = scmp.eq.s32.totalorder %s20, 3
    %p49 = por %p47, %p48
    %p50 = scmp.ne.s32.totalorder %s42, %s45
    %p51 = scmp.eq.s32.totalorder %s20, 0
    %p52 = por %p50, %p51
    %p53 = scmp.ne.s32.totalorder %s42, %s45
    %p54 = scmp.eq.s32.totalorder %s25, 3
    %p55 = por %p53, %p54
    %p56 = scmp.ne.s32.totalorder %s45, %s46
    %p57 = scmp.eq.s32.totalorder %s25, 0
    %p58 = por %p56, %p57
    %p59 = scmp.ne.s32.totalorder %s45, %s46
    %p60 = scmp.eq.s32.totalorder %s26, 3
    %p61 = por %p59, %p60
    %p63 = scmp.ne.s32.totalorder %s46, %s62
    %p64 = scmp.eq.s32.totalorder %s26, 0
    %p65 = por %p63, %p64
    %s67 = sadd.s32 %s66, 1
    %p70 = scmp.eq.s32.totalorder %s20, 3
    %p71 = scmp.ne.s32.totalorder %s66, %s68
    %p72 = scmp.eq.s32.totalorder %s20, 0
    %p73 = por %p71, %p72
    %p74 = scmp.ne.s32.totalorder %s66, %s68
    %p75 = scmp.eq.s32.totalorder %s25, 3
    %p76 = por %p74, %p75
    %p77 = scmp.ne.s32.totalorder %s68, %s69
    %p78 = scmp.eq.s32.totalorder %s25, 0
    %p79 = por %p77, %p78
    %p80 = scmp.ne.s32.totalorder %s68, %s69
    %p81 = scmp.eq.s32.totalorder %s26, 3
    %p82 = por %p80, %p81
    %p84 = scmp.ne.s32.totalorder %s69, %s83
    %p85 = scmp.eq.s32.totalorder %s26, 0
    %p86 = por %p84, %p85
    %s87 = smul.u32 %s27, 2
    %s88 = sadd.s32 %s87, %s28
    %s89 = smul.u32 %s39, 2
    %s90 = sadd.s32 %s89, %s35
    %s91 = ssub.s32 %s88, %s90
    %p92 = scmp.eq.s32.totalorder %s91, 0
    %s94 = sadd.s32 %s93, 1
    %s95 = scalar_select %p92, %s93, %s94
    %p98 = pneg %p92
    %p99 = scmp.eq.s32.totalorder %s20, 3
    %p100 = por %p98, %p99
    %p101 = scmp.ne.s32.totalorder %s93, %s96
    %p102 = scmp.eq.s32.totalorder %s20, 0
    %p103 = por %p101, %p102
    %p104 = scmp.ne.s32.totalorder %s93, %s96
    %p105 = scmp.eq.s32.totalorder %s25, 3
    %p106 = por %p104, %p105
    %p107 = scmp.ne.s32.totalorder %s96, %s97
    %p108 = scmp.eq.s32.totalorder %s25, 0
    %p109 = por %p107, %p108
    %p110 = scmp.ne.s32.totalorder %s96, %s97
    %p111 = scmp.eq.s32.totalorder %s26, 3
    %p112 = por %p110, %p111
    %p114 = scmp.ne.s32.totalorder %s97, %s113
    %p115 = scmp.eq.s32.totalorder %s26, 0
    %p116 = por %p114, %p115
    %s118 = sadd.s32 %s117, 1
    %p121 = scmp.eq.s32.totalorder %s20, 3
    %p122 = scmp.ne.s32.totalorder %s117, %s119
    %p123 = scmp.eq.s32.totalorder %s20, 0
    %p124 = por %p122, %p123
    %p125 = scmp.ne.s32.totalorder %s117, %s119
    %p126 = scmp.eq.s32.totalorder %s25, 3
    %p127 = por %p125, %p126
    %p128 = scmp.ne.s32.totalorder %s119, %s120
    %p129 = scmp.eq.s32.totalorder %s25, 0
    %p130 = por %p128, %p129
    %p131 = scmp.ne.s32.totalorder %s119, %s120
    %p132 = scmp.eq.s32.totalorder %s26, 3
    %p133 = por %p131, %p132
    %p135 = scmp.ne.s32.totalorder %s120, %s134
    %p136 = scmp.eq.s32.totalorder %s26, 0
    %p137 = por %p135, %p136
    %s139 = sadd.s32 %s138, 1
    %p142 = scmp.eq.s32.totalorder %s20, 3
    %p143 = scmp.ne.s32.totalorder %s138, %s140
    %p144 = scmp.eq.s32.totalorder %s20, 0
    %p145 = por %p143, %p144
    %p146 = scmp.ne.s32.totalorder %s138, %s140
    %p147 = scmp.eq.s32.totalorder %s25, 3
    %p148 = por %p146, %p147
    %p149 = scmp.ne.s32.totalorder %s140, %s141
    %p150 = scmp.eq.s32.totalorder %s25, 0
    %p151 = por %p149, %p150
    %p152 = scmp.ne.s32.totalorder %s140, %s141
    %p153 = scmp.eq.s32.totalorder %s26, 3
    %p154 = por %p152, %p153
    %p156 = scmp.ne.s32.totalorder %s141, %s155
    %p157 = scmp.eq.s32.totalorder %s26, 0
    %p158 = por %p156, %p157
    %s160 = sadd.s32 %s159, 1
    %p163 = scmp.eq.s32.totalorder %s20, 3
    %p164 = scmp.ne.s32.totalorder %s159, %s161
    %p165 = scmp.eq.s32.totalorder %s20, 0
    %p166 = por %p164, %p165
    %p167 = scmp.ne.s32.totalorder %s159, %s161
    %p168 = scmp.eq.s32.totalorder %s25, 3
    %p169 = por %p167, %p168
    %p170 = scmp.ne.s32.totalorder %s161, %s162
    %p171 = scmp.eq.s32.totalorder %s25, 0
    %p172 = por %p170, %p171
    %p173 = scmp.ne.s32.totalorder %s161, %s162
    %p174 = scmp.eq.s32.totalorder %s26, 3
    %p175 = por %p173, %p174
    %p177 = scmp.ne.s32.totalorder %s162, %s176
    %p178 = scmp.eq.s32.totalorder %s26, 0
    %p179 = por %p177, %p178
    %s181 = sadd.s32 %s180, 1
    %p184 = scmp.eq.s32.totalorder %s20, 3
    %p185 = scmp.ne.s32.totalorder %s180, %s182
    %p186 = scmp.eq.s32.totalorder %s20, 0
    %p187 = por %p185, %p186
    %p188 = scmp.ne.s32.totalorder %s180, %s182
    %p189 = scmp.eq.s32.totalorder %s25, 3
    %p190 = por %p188, %p189
    %p191 = scmp.ne.s32.totalorder %s182, %s183
    %p192 = scmp.eq.s32.totalorder %s25, 0
    %p193 = por %p191, %p192
    %p194 = scmp.ne.s32.totalorder %s182, %s183
    %p195 = scmp.eq.s32.totalorder %s26, 3
    %p196 = por %p194, %p195
    %p198 = scmp.ne.s32.totalorder %s183, %s197
    %p199 = scmp.eq.s32.totalorder %s26, 0
    %p200 = por %p198, %p199
    %s202 = sadd.s32 %s201, 1
    %p205 = scmp.eq.s32.totalorder %s20, 3
    %p206 = scmp.ne.s32.totalorder %s201, %s203
    %p207 = scmp.eq.s32.totalorder %s20, 0
    %p208 = por %p206, %p207
    %p209 = scmp.ne.s32.totalorder %s201, %s203
    %p210 = scmp.eq.s32.totalorder %s25, 3
    %p211 = por %p209, %p210
    %p212 = scmp.ne.s32.totalorder %s203, %s204
    %p213 = scmp.eq.s32.totalorder %s25, 0
    %p214 = por %p212, %p213
    %p215 = scmp.ne.s32.totalorder %s203, %s204
    %p216 = scmp.eq.s32.totalorder %s26, 3
    %p217 = por %p215, %p216
    %p219 = scmp.ne.s32.totalorder %s204, %s218
    %p220 = scmp.eq.s32.totalorder %s26, 0
    %p221 = por %p219, %p220
    %s223 = sadd.s32 %s222, 1
    %p226 = scmp.eq.s32.totalorder %s20, 3
    %p227 = scmp.ne.s32.totalorder %s222, %s224
    %p228 = scmp.eq.s32.totalorder %s20, 0
    %p229 = por %p227, %p228
    %p230 = scmp.ne.s32.totalorder %s222, %s224
    %p231 = scmp.eq.s32.totalorder %s25, 3
    %p232 = por %p230, %p231
    %p233 = scmp.ne.s32.totalorder %s224, %s225
    %p234 = scmp.eq.s32.totalorder %s25, 0
    %p235 = por %p233, %p234
    %p236 = scmp.ne.s32.totalorder %s224, %s225
    %p237 = scmp.eq.s32.totalorder %s26, 3
    %p238 = por %p236, %p237
    %p240 = scmp.ne.s32.totalorder %s225, %s239
    %p241 = scmp.eq.s32.totalorder %s26, 0
    %p242 = por %p240, %p241
    %s244 = sadd.s32 %s243, 1
    %p247 = scmp.eq.s32.totalorder %s20, 3
    %p248 = scmp.ne.s32.totalorder %s243, %s245
    %p249 = scmp.eq.s32.totalorder %s20, 0
    %p250 = por %p248, %p249
    %p251 = scmp.ne.s32.totalorder %s243, %s245
    %p252 = scmp.eq.s32.totalorder %s25, 3
    %p253 = por %p251, %p252
    %p254 = scmp.ne.s32.totalorder %s245, %s246
    %p255 = scmp.eq.s32.totalorder %s25, 0
    %p256 = por %p254, %p255
    %p257 = scmp.ne.s32.totalorder %s245, %s246
    %p258 = scmp.eq.s32.totalorder %s26, 3
    %p259 = por %p257, %p258
    %p261 = scmp.ne.s32.totalorder %s246, %s260
    %p262 = scmp.eq.s32.totalorder %s26, 0
    %p263 = por %p261, %p262
    %s265 = sadd.s32 %s264, 1
    %p268 = scmp.eq.s32.totalorder %s20, 3
    %p269 = scmp.ne.s32.totalorder %s264, %s266
    %p270 = scmp.eq.s32.totalorder %s20, 0
    %p271 = por %p269, %p270
    %p272 = scmp.ne.s32.totalorder %s264, %s266
    %p273 = scmp.eq.s32.totalorder %s25, 3
    %p274 = por %p272, %p273
    %p275 = scmp.ne.s32.totalorder %s266, %s267
    %p276 = scmp.eq.s32.totalorder %s25, 0
    %p277 = por %p275, %p276
    %p278 = scmp.ne.s32.totalorder %s266, %s267
    %p279 = scmp.eq.s32.totalorder %s26, 3
    %p280 = por %p278, %p279
    %p282 = scmp.ne.s32.totalorder %s267, %s281
    %p283 = scmp.eq.s32.totalorder %s26, 0
    %p284 = por %p282, %p283
    %s286 = sadd.s32 %s285, 1
    %p289 = scmp.eq.s32.totalorder %s20, 3
    %p290 = scmp.ne.s32.totalorder %s285, %s287
    %p291 = scmp.eq.s32.totalorder %s20, 0
    %p292 = por %p290, %p291
    %p293 = scmp.ne.s32.totalorder %s285, %s287
    %p294 = scmp.eq.s32.totalorder %s25, 3
    %p295 = por %p293, %p294
    %p296 = scmp.ne.s32.totalorder %s287, %s288
    %p297 = scmp.eq.s32.totalorder %s25, 0
    %p298 = por %p296, %p297
    %p299 = scmp.ne.s32.totalorder %s287, %s288
    %p300 = scmp.eq.s32.totalorder %s26, 3
    %p301 = por %p299, %p300
    %p303 = scmp.ne.s32.totalorder %s288, %s302
    %p304 = scmp.eq.s32.totalorder %s26, 0
    %p305 = por %p303, %p304
    %s306 = smul.u32 %s27, 2
    %s307 = sadd.s32 %s306, %s28
    %s308 = smul.u32 %s39, 2
    %s309 = sadd.s32 %s308, %s35
    %s310 = ssub.s32 %s307, %s309
    %p311 = scmp.eq.s32.totalorder %s310, 0
    %s313 = sadd.s32 %s312, 1
    %s314 = scalar_select %p311, %s312, %s313
    %p317 = pneg %p311
    %p318 = scmp.eq.s32.totalorder %s20, 3
    %p319 = por %p317, %p318
    %p320 = scmp.ne.s32.totalorder %s312, %s315
    %p321 = scmp.eq.s32.totalorder %s20, 0
    %p322 = por %p320, %p321
    %p323 = scmp.ne.s32.totalorder %s312, %s315
    %p324 = scmp.eq.s32.totalorder %s25, 3
    %p325 = por %p323, %p324
    %p326 = scmp.ne.s32.totalorder %s315, %s316
    %p327 = scmp.eq.s32.totalorder %s25, 0
    %p328 = por %p326, %p327
    %p329 = scmp.ne.s32.totalorder %s315, %s316
    %p330 = scmp.eq.s32.totalorder %s26, 3
    %p331 = por %p329, %p330
    %p333 = scmp.ne.s32.totalorder %s316, %s332
    %p334 = scmp.eq.s32.totalorder %s26, 0
    %p335 = por %p333, %p334
    %s336 = smul.u32 %s27, 2
    %s337 = sadd.s32 %s336, %s28
    %s338 = smul.u32 %s39, 2
    %s339 = sadd.s32 %s338, %s35
    %s340 = ssub.s32 %s337, %s339
    %p341 = scmp.eq.s32.totalorder %s340, 0
    %s343 = sadd.s32 %s342, 1
    %s344 = scalar_select %p341, %s342, %s343
    %p347 = pneg %p341
    %p348 = scmp.eq.s32.totalorder %s20, 3
    %p349 = por %p347, %p348
    %p350 = scmp.ne.s32.totalorder %s342, %s345
    %p351 = scmp.eq.s32.totalorder %s20, 0
    %p352 = por %p350, %p351
    %p353 = scmp.ne.s32.totalorder %s342, %s345
    %p354 = scmp.eq.s32.totalorder %s25, 3
    %p355 = por %p353, %p354
    %p356 = scmp.ne.s32.totalorder %s345, %s346
    %p357 = scmp.eq.s32.totalorder %s25, 0
    %p358 = por %p356, %p357
    %p359 = scmp.ne.s32.totalorder %s345, %s346
    %p360 = scmp.eq.s32.totalorder %s26, 3
    %p361 = por %p359, %p360
    %p363 = scmp.ne.s32.totalorder %s346, %s362
    %p364 = scmp.eq.s32.totalorder %s26, 0
    %p365 = por %p363, %p364
    %p366 = scmp.le.s32.totalorder 1, %s20
    %p367 = scmp.lt.s32.totalorder %s20, 5
    %p368 = pnand %p366, %p367
    %p369 = pneg %p368
    // Predicated region
    $region9: #{decoder_forward.3} parent=5 // pred_check
      _
    $region10: #{decoder_forward.3} parent=5 // pred_check_branch
      %371 = sbr.rel (%p368) target = $region12
    $region11: #{decoder_forward.3} parent=5 // pred_region
      %s372 = ssub.s32 %s20, 1
      // Predicated region
      $region13: #{decoder_forward.3} parent=11 // pred_check
        %p373 = pneg %p79
      $region14: #{decoder_forward.3} parent=11 // pred_check_branch
        %375 = sbr.rel (%p373) target = $region16
      $region15: #{decoder_forward.3} parent=11 // pred_region
        _
      $region16: #{decoder_forward.3} parent=11 // pred_fallthru
        _
      // Predicated region
      $region17: #{decoder_forward.3} parent=11 // pred_check
        %p376 = pneg %p130
      $region18: #{decoder_forward.3} parent=11 // pred_check_branch
        %378 = sbr.rel (%p376) target = $region20
      $region19: #{decoder_forward.3} parent=11 // pred_region
        _
      $region20: #{decoder_forward.3} parent=11 // pred_fallthru
        _
      // Predicated region
      $region21: #{decoder_forward.3} parent=11 // pred_check
        %p379 = pneg %p151
      $region22: #{decoder_forward.3} parent=11 // pred_check_branch
        %381 = sbr.rel (%p379) target = $region24
      $region23: #{decoder_forward.3} parent=11 // pred_region
        _
      $region24: #{decoder_forward.3} parent=11 // pred_fallthru
        _
      // Predicated region
      $region25: #{decoder_forward.3} parent=11 // pred_check
        %p382 = pneg %p172
      $region26: #{decoder_forward.3} parent=11 // pred_check_branch
        %384 = sbr.rel (%p382) target = $region28
      $region27: #{decoder_forward.3} parent=11 // pred_region
        _
      $region28: #{decoder_forward.3} parent=11 // pred_fallthru
        _
      // Predicated region
      $region29: #{decoder_forward.3} parent=11 // pred_check
        %p385 = pneg %p193
      $region30: #{decoder_forward.3} parent=11 // pred_check_branch
        %387 = sbr.rel (%p385) target = $region32
      $region31: #{decoder_forward.3} parent=11 // pred_region
        _
      $region32: #{decoder_forward.3} parent=11 // pred_fallthru
        _
      // Predicated region
      $region33: #{decoder_forward.3} parent=11 // pred_check
        %p388 = pneg %p214
      $region34: #{decoder_forward.3} parent=11 // pred_check_branch
        %390 = sbr.rel (%p388) target = $region36
      $region35: #{decoder_forward.3} parent=11 // pred_region
        _
      $region36: #{decoder_forward.3} parent=11 // pred_fallthru
        _
      // Predicated region
      $region37: #{decoder_forward.3} parent=11 // pred_check
        %p391 = pneg %p235
      $region38: #{decoder_forward.3} parent=11 // pred_check_branch
        %393 = sbr.rel (%p391) target = $region40
      $region39: #{decoder_forward.3} parent=11 // pred_region
        _
      $region40: #{decoder_forward.3} parent=11 // pred_fallthru
        _
      // Predicated region
      $region41: #{decoder_forward.3} parent=11 // pred_check
        %p394 = pneg %p256
      $region42: #{decoder_forward.3} parent=11 // pred_check_branch
        %396 = sbr.rel (%p394) target = $region44
      $region43: #{decoder_forward.3} parent=11 // pred_region
        _
      $region44: #{decoder_forward.3} parent=11 // pred_fallthru
        _
      // Predicated region
      $region45: #{decoder_forward.3} parent=11 // pred_check
        %p397 = pneg %p277
      $region46: #{decoder_forward.3} parent=11 // pred_check_branch
        %399 = sbr.rel (%p397) target = $region48
      $region47: #{decoder_forward.3} parent=11 // pred_region
        _
      $region48: #{decoder_forward.3} parent=11 // pred_fallthru
        _
      // Predicated region
      $region49: #{decoder_forward.3} parent=11 // pred_check
        %p400 = pneg %p298
      $region50: #{decoder_forward.3} parent=11 // pred_check_branch
        %402 = sbr.rel (%p400) target = $region52
      $region51: #{decoder_forward.3} parent=11 // pred_region
        _
      $region52: #{decoder_forward.3} parent=11 // pred_fallthru
        _
    $region12: #{decoder_forward.3} parent=5 // pred_fallthru
      _
    %p403 = scmp.lt.s32.totalorder %s20, 4
    // Predicated region
    $region53: #{decoder_forward.3} parent=5 // pred_check
      %p404 = pneg %p403
    $region54: #{decoder_forward.3} parent=5 // pred_check_branch
      %406 = sbr.rel (%p404) target = $region56
    $region55: #{decoder_forward.3} parent=5 // pred_region
      // Predicated region
      $region57: #{decoder_forward.3} parent=55 // pred_check
        %p407 = pneg %p52
      $region58: #{decoder_forward.3} parent=55 // pred_check_branch
        %409 = sbr.rel (%p407) target = $region60
      $region59: #{decoder_forward.3} parent=55 // pred_region
        %p410 = scmp.lt.s32.totalorder %s27, 1
        %s411 = scalar_select %p410, %s27, 1
        %s412 = smul.addr %s411, 16
        %s413 = smul.addr %s412, 4
        %s414 = scalar_lea.vmem %s0, %s413
      $region60: #{decoder_forward.3} parent=55 // pred_fallthru
        _
      // Predicated region
      $region61: #{decoder_forward.3} parent=55 // pred_check
        %p415 = pneg %p103
      $region62: #{decoder_forward.3} parent=55 // pred_check_branch
        %417 = sbr.rel (%p415) target = $region64
      $region63: #{decoder_forward.3} parent=55 // pred_region
        %s418 = smul.u32 %s27, 2
        %s419 = sadd.s32 %s418, %s28
        %s420 = smul.u32 16, %s419
        %p421 = scmp.lt.s32.totalorder %s420, 63
        %s422 = scalar_select %p421, %s420, 63
        %s423 = smul.addr %s422, 2
        %s424 = smul.addr %s423, 4
        %s425 = scalar_lea.vmem %s2, %s424
        %s426 = smul.u32 %s27, 2
        %s427 = sadd.s32 %s426, %s28
        %s428 = smul.u32 16, %s427
      $region64: #{decoder_forward.3} parent=55 // pred_fallthru
        _
    $region56: #{decoder_forward.3} parent=5 // pred_fallthru
      _
    %p429 = scmp.le.s32.totalorder 1, %s20
    %p430 = scmp.lt.s32.totalorder %s20, 5
    %p431 = pnand %p429, %p430
    %p432 = pneg %p431
    // Predicated region
    $region65: #{decoder_forward.3} parent=5 // pred_check
      _
    $region66: #{decoder_forward.3} parent=5 // pred_check_branch
      %434 = sbr.rel (%p431) target = $region68
    $region67: #{decoder_forward.3} parent=5 // pred_region
      %s435 = ssub.s32 %s20, 1
      %p436 = scmp.lt.s32.totalorder %s29, 1
      %s437 = scalar_select %p436, %s29, 1
      %s438 = smul.addr %s437, 16
      %s439 = smul.addr %s438, 4
      %s440 = scalar_lea.vmem %s0, %s439
      %p441 = pneg %p58
      %p442 = pneg %p55
      %p443 = pneg %p79
      %p444 = pneg %p76
      %s445 = smul.u32 %s29, 2
      %s446 = sadd.s32 %s445, %s30
      %s447 = smul.u32 16, %s446
      %p448 = scmp.lt.s32.totalorder %s447, 63
      %s449 = scalar_select %p448, %s447, 63
      %s450 = smul.addr %s449, 2
      %s451 = smul.addr %s450, 4
      %s452 = scalar_lea.vmem %s2, %s451
      %p453 = pneg %p109
      %p454 = pneg %p106
      %p455 = pneg %p130
      %p456 = pneg %p127
      %p457 = pneg %p151
      %p458 = pneg %p148
      %p459 = pneg %p172
      %p460 = pneg %p169
      %p461 = pneg %p193
      %p462 = pneg %p190
      %p463 = pneg %p214
      %p464 = pneg %p211
      %p465 = pneg %p235
      %p466 = pneg %p232
      %p467 = pneg %p256
      %p468 = pneg %p253
      %p469 = pneg %p277
      %p470 = pneg %p274
      %p471 = pneg %p298
      %p472 = pneg %p295
      %p473 = pneg %p328
      %p474 = pneg %p325
      %s475 = smul.u32 %s29, 2
      %s476 = sadd.s32 %s475, %s30
      %s477 = smul.u32 16, %s476
      %p478 = scmp.lt.s32.totalorder %s477, 63
      %s479 = scalar_select %p478, %s477, 63
      %s480 = smul.addr %s479, 2
      %s481 = smul.addr %s480, 4
      %s482 = scalar_lea.vmem %s12, %s481
      %p483 = pneg %p358
      %p484 = pneg %p355
      %s485 = smul.u32 %s29, 2
      %s486 = sadd.s32 %s485, %s30
      %s487 = smul.u32 16, %s486
      %p488 = scmp.lt.s32.totalorder %s487, 63
      %s489 = scalar_select %p488, %s487, 63
      %s490 = smul.addr %s489, 4
      %s491 = scalar_lea.vmem %s13, %s490
      %p492 = scmp.lt.s32.totalorder %s29, 1
      %s493 = scalar_select %p492, %s29, 1
      %s494 = smul.addr %s493, 16
      %s495 = smul.addr %s494, 4
      %s496 = scalar_lea.vmem %s0, %s495
      %s497 = smul.u32 %s29, 2
      %s498 = sadd.s32 %s497, %s30
      %s499 = smul.u32 16, %s498
      %p500 = scmp.lt.s32.totalorder %s499, 63
      %s501 = scalar_select %p500, %s499, 63
      %s502 = smul.addr %s501, 2
      %s503 = smul.addr %s502, 4
      %s504 = scalar_lea.vmem %s2, %s503
      %s505 = smul.u32 %s29, 2
      %s506 = sadd.s32 %s505, %s30
      %s507 = smul.u32 16, %s506
      %s508 = smul.u32 %s29, 2
      %s509 = sadd.s32 %s508, %s30
      %s510 = smul.u32 16, %s509
      %p511 = scmp.lt.s32.totalorder %s510, 63
      %s512 = scalar_select %p511, %s510, 63
      %s513 = smul.addr %s512, 2
      %s514 = smul.addr %s513, 4
      %s515 = scalar_lea.vmem %s12, %s514
      %s516 = smul.u32 %s29, 2
      %s517 = sadd.s32 %s516, %s30
      %s518 = smul.u32 16, %s517
      %s519 = smul.u32 %s29, 2
      %s520 = sadd.s32 %s519, %s30
      %s521 = smul.u32 16, %s520
      %p522 = scmp.lt.s32.totalorder %s521, 63
      %s523 = scalar_select %p522, %s521, 63
      %s524 = smul.addr %s523, 4
      %s525 = scalar_lea.vmem %s13, %s524
      %s526 = smul.u32 %s29, 2
      %s527 = sadd.s32 %s526, %s30
      %s528 = smul.u32 16, %s527
      %v530 = vld [vmem:[%s1] sm:$0xff]
      %v531 = vld [vmem:[%s1 + $0x8] sm:$0xff]
      %s532 = smul.u32 %s30, 8
      %s533 = scvt.s32.f32 %s532
      %s534 = smul.f32 %s533, 0.46666667
      %s535 = sfloor.f32 %s534
      %s536 = ssub.f32 %s534, %s535
      %s537 = scvt.f32.s32.to.zero.pseudo %s535
      %p538 = scmp.gt.s32.totalorder %s537, 0
      %s539 = scalar_select %p538, %s537, 0
      %p540 = scmp.lt.s32.totalorder %s539, 7
      %s541 = scalar_select %p540, %s539, 7
      %s542 = sadd.s32 %s541, 1
      %p543 = scmp.lt.s32.totalorder %s542, 7
      %s544 = scalar_select %p543, %s542, 7
      %s545 = smul.u32 %s541, 8
      %s546 = smul.u32 %s544, 8
      %s547 = sshra.s32 %s545, 3
      %s548 = sand.u32 %s545, 7
      %s549 = smul.u32 %s547, 2
      %s550 = smul.addr %s549, 4
      %s551 = scalar_lea.vmem %s496, %s550
      %v552 = vld [vmem:[%s551] sm:$0xff]
      %v553 = vunpack.c.l.bf16 %v552
      %v554 = vunpack.c.h.bf16 %v552
      %s555 = sshra.s32 %s546, 3
      %s556 = sand.u32 %s546, 7
      %s557 = smul.u32 %s555, 2
      %s558 = smul.addr %s557, 4
      %s559 = scalar_lea.vmem %s496, %s558
      %v560 = vld [vmem:[%s559] sm:$0xff]
      %v561 = vunpack.c.l.bf16 %v560
      %v562 = vunpack.c.h.bf16 %v560
      %v563 = vsub.f32 %v561, %v553
      %v564 = vsub.f32 %v562, %v554
      %v565 = vstv %s536
      %v566 = vmul.f32 %v565, %v563
      %v567 = vmul.f32 %v565, %v564
      %v568 = vadd.f32 %v553, %v566
      %v569 = vadd.f32 %v554, %v567
      %vm570 = vcmask 64512
      %v572 = vsel %vm570, %v530, 0
      %v575 = vsel %vm570, %v531, 0
      %577 = vmatprep.subr.mxu0 %v569
      %578 = vmatpush1.msra.mxu0 %v568
      %579 = vmatprep.subr.mxu0 0.0
      %580 = vmatpush1.msra.mxu0 0.0
      %581 = vmatprep.subr.mxu0 0.0
      %582 = vmatpush1.msra.mxu0 0.0
      %583 = vmatprep.subr.mxu0 0.0
      %584 = vmatpush1.msra.mxu0 0.0
      %585 = vmatprep.subr.mxu0 0.0
      %586 = vmatpush1.msra.mxu0 0.0
      %587 = vmatprep.subr.mxu0 0.0
      %588 = vmatpush1.msra.mxu0 0.0
      %589 = vmatprep.subr.mxu0 0.0
      %590 = vmatpush1.msra.mxu0 0.0
      %591 = vmatprep.subr.mxu0 0.0
      %592 = vmatpush1.msra.mxu0 0.0
      %593 = vmatprep.subr.mxu0 0.0
      %594 = vmatpush1.msra.mxu0 0.0
      %595 = vmatprep.subr.mxu0 0.0
      %596 = vmatpush1.msra.mxu0 0.0
      %597 = vmatprep.subr.mxu0 0.0
      %598 = vmatpush1.msra.mxu0 0.0
      %599 = vmatprep.subr.mxu0 0.0
      %600 = vmatpush1.msra.mxu0 0.0
      %601 = vmatprep.subr.mxu0 0.0
      %602 = vmatpush1.msra.mxu0 0.0
      %603 = vmatprep.subr.mxu0 0.0
      %604 = vmatpush1.msra.mxu0 0.0
      %605 = vmatprep.subr.mxu0 0.0
      %606 = vmatpush1.msra.mxu0 0.0
      %607 = vmatprep.subr.mxu0 0.0
      %608 = vmatpush1.msra.mxu0 0.0
      %609 = vmatprep.subr.mxu0 0.0
      %610 = vmatpush1.msra.mxu0 0.0
      %611 = vmatprep.subr.mxu0 0.0
      %612 = vmatpush1.msra.mxu0 0.0
      %613 = vmatprep.subr.mxu0 0.0
      %614 = vmatpush1.msra.mxu0 0.0
      %615 = vmatprep.subr.mxu0 0.0
      %616 = vmatpush1.msra.mxu0 0.0
      %617 = vmatprep.subr.mxu0 0.0
      %618 = vmatpush1.msra.mxu0 0.0
      %619 = vmatprep.subr.mxu0 0.0
      %620 = vmatpush1.msra.mxu0 0.0
      %621 = vmatprep.subr.mxu0 0.0
      %622 = vmatpush1.msra.mxu0 0.0
      %623 = vmatprep.subr.mxu0 0.0
      %624 = vmatpush1.msra.mxu0 0.0
      %625 = vmatprep.subr.mxu0 0.0
      %626 = vmatpush1.msra.mxu0 0.0
      %627 = vmatprep.subr.mxu0 0.0
      %628 = vmatpush1.msra.mxu0 0.0
      %629 = vmatprep.subr.mxu0 0.0
      %630 = vmatpush1.msra.mxu0 0.0
      %631 = vmatprep.subr.mxu0 0.0
      %632 = vmatpush1.msra.mxu0 0.0
      %633 = vmatprep.subr.mxu0 0.0
      %634 = vmatpush1.msra.mxu0 0.0
      %635 = vmatprep.subr.mxu0 0.0
      %636 = vmatpush1.msra.mxu0 0.0
      %637 = vmatprep.subr.mxu0 0.0
      %638 = vmatpush1.msra.mxu0 0.0
      %639 = vmatprep.subr.mxu0 0.0
      %640 = vmatpush1.msra.mxu0 0.0
      %641 = vmatprep.mubr.f32.mxu0 0.0
      %642 = vmatmul.mubr.f32.gmra.mrb[0].mxu0 %v572
      %v643 = vpop.f32.mrb[0].mxu0
      %v644 = vadd.f32 0.0, %v643
      %v645 = vpop.f32.mrb[0].mxu0
      %v646 = vadd.f32 0.0, %v645
      %647 = vmatprep.mubr.f32.mxu0 0.0
      %648 = vmatmul.mubr.f32.gmra.mrb[0].mxu0 %v575
      %v649 = vpop.f32.mrb[0].mxu0
      %v650 = vadd.f32 0.0, %v649
      %v651 = vpop.f32.mrb[0].mxu0
      %v652 = vadd.f32 0.0, %v651
      %653 = vdwg.mxu0
      %v654 = vpack.c.bf16 %v650, %v644
      %v655 = vpack.c.bf16 %v652, %v646
      %656 = vst [vmem:[#allocation2] sm:$0xff] %v654
      %657 = vst [vmem:[#allocation2 + $0x8] sm:$0xff] %v655
      %s658 = sadd.s32 %s532, 1
      %s659 = scvt.s32.f32 %s658
      %s660 = smul.f32 %s659, 0.46666667
      %s661 = sfloor.f32 %s660
      %s662 = ssub.f32 %s660, %s661
      %s663 = scvt.f32.s32.to.zero.pseudo %s661
      %p664 = scmp.gt.s32.totalorder %s663, 0
      %s665 = scalar_select %p664, %s663, 0
      %p666 = scmp.lt.s32.totalorder %s665, 7
      %s667 = scalar_select %p666, %s665, 7
      %s668 = sadd.s32 %s667, 1
      %p669 = scmp.lt.s32.totalorder %s668, 7
      %s670 = scalar_select %p669, %s668, 7
      %s671 = smul.u32 %s667, 8
      %s672 = smul.u32 %s670, 8
      %s673 = sshra.s32 %s671, 3
      %s674 = sand.u32 %s671, 7
      %s675 = smul.u32 %s673, 2
      %s676 = smul.addr %s675, 4
      %s677 = scalar_lea.vmem %s496, %s676
      %v678 = vld [vmem:[%s677] sm:$0xff]
      %v679 = vunpack.c.l.bf16 %v678
      %v680 = vunpack.c.h.bf16 %v678
      %s681 = sshra.s32 %s672, 3
      %s682 = sand.u32 %s672, 7
      %s683 = smul.u32 %s681, 2
      %s684 = smul.addr %s683, 4
      %s685 = scalar_lea.vmem %s496, %s684
      %v686 = vld [vmem:[%s685] sm:$0xff]
      %v687 = vunpack.c.l.bf16 %v686
      %v688 = vunpack.c.h.bf16 %v686
      %v689 = vsub.f32 %v687, %v679
      %v690 = vsub.f32 %v688, %v680
      %v691 = vstv %s662
      %v692 = vmul.f32 %v691, %v689
      %v693 = vmul.f32 %v691, %v690
      %v694 = vadd.f32 %v679, %v692
      %v695 = vadd.f32 %v680, %v693
      %696 = vmatprep.subr.mxu0 %v695
      %697 = vmatpush1.msra.mxu0 %v694
      %698 = vmatprep.subr.mxu0 0.0
      %699 = vmatpush1.msra.mxu0 0.0
      %700 = vmatprep.subr.mxu0 0.0
      %701 = vmatpush1.msra.mxu0 0.0
      %702 = vmatprep.subr.mxu0 0.0
      %703 = vmatpush1.msra.mxu0 0.0
      %704 = vmatprep.subr.mxu0 0.0
      %705 = vmatpush1.msra.mxu0 0.0
      %706 = vmatprep.subr.mxu0 0.0
      %707 = vmatpush1.msra.mxu0 0.0
      %708 = vmatprep.subr.mxu0 0.0
      %709 = vmatpush1.msra.mxu0 0.0
      %710 = vmatprep.subr.mxu0 0.0
      %711 = vmatpush1.msra.mxu0 0.0
      %712 = vmatprep.subr.mxu0 0.0
      %713 = vmatpush1.msra.mxu0 0.0
      %714 = vmatprep.subr.mxu0 0.0
      %715 = vmatpush1.msra.mxu0 0.0
      %716 = vmatprep.subr.mxu0 0.0
      %717 = vmatpush1.msra.mxu0 0.0
      %718 = vmatprep.subr.mxu0 0.0
      %719 = vmatpush1.msra.mxu0 0.0
      %720 = vmatprep.subr.mxu0 0.0
      %721 = vmatpush1.msra.mxu0 0.0
      %722 = vmatprep.subr.mxu0 0.0
      %723 = vmatpush1.msra.mxu0 0.0
      %724 = vmatprep.subr.mxu0 0.0
      %725 = vmatpush1.msra.mxu0 0.0
      %726 = vmatprep.subr.mxu0 0.0
      %727 = vmatpush1.msra.mxu0 0.0
      %728 = vmatprep.subr.mxu0 0.0
      %729 = vmatpush1.msra.mxu0 0.0
      %730 = vmatprep.subr.mxu0 0.0
      %731 = vmatpush1.msra.mxu0 0.0
      %732 = vmatprep.subr.mxu0 0.0
      %733 = vmatpush1.msra.mxu0 0.0
      %734 = vmatprep.subr.mxu0 0.0
      %735 = vmatpush1.msra.mxu0 0.0
      %736 = vmatprep.subr.mxu0 0.0
      %737 = vmatpush1.msra.mxu0 0.0
      %738 = vmatprep.subr.mxu0 0.0
      %739 = vmatpush1.msra.mxu0 0.0
      %740 = vmatprep.subr.mxu0 0.0
      %741 = vmatpush1.msra.mxu0 0.0
      %742 = vmatprep.subr.mxu0 0.0
      %743 = vmatpush1.msra.mxu0 0.0
      %744 = vmatprep.subr.mxu0 0.0
      %745 = vmatpush1.msra.mxu0 0.0
      %746 = vmatprep.subr.mxu0 0.0
      %747 = vmatpush1.msra.mxu0 0.0
      %748 = vmatprep.subr.mxu0 0.0
      %749 = vmatpush1.msra.mxu0 0.0
      %750 = vmatprep.subr.mxu0 0.0
      %751 = vmatpush1.msra.mxu0 0.0
      %752 = vmatprep.subr.mxu0 0.0
      %753 = vmatpush1.msra.mxu0 0.0
      %754 = vmatprep.subr.mxu0 0.0
      %755 = vmatpush1.msra.mxu0 0.0
      %756 = vmatprep.subr.mxu0 0.0
      %757 = vmatpush1.msra.mxu0 0.0
      %758 = vmatprep.subr.mxu0 0.0
      %759 = vmatpush1.msra.mxu0 0.0
      %760 = vmatprep.mubr.f32.mxu0 0.0
      %761 = vmatmul.mubr.f32.gmra.mrb[0].mxu0 %v572
      %v762 = vpop.f32.mrb[0].mxu0
      %v763 = vadd.f32 0.0, %v762
      %v764 = vpop.f32.mrb[0].mxu0
      %v765 = vadd.f32 0.0, %v764
      %766 = vmatprep.mubr.f32.mxu0 0.0
      %767 = vmatmul.mubr.f32.gmra.mrb[0].mxu0 %v575
      %v768 = vpop.f32.mrb[0].mxu0
      %v769 = vadd.f32 0.0, %v768
      %v770 = vpop.f32.mrb[0].mxu0
      %v771 = vadd.f32 0.0, %v770
      %772 = vdwg.mxu0
      %v773 = vpack.c.bf16 %v769, %v763
      %v774 = vpack.c.bf16 %v771, %v765
      %775 = vst [vmem:[#allocation2 + $0x10] sm:$0xff] %v773
      %776 = vst [vmem:[#allocation2 + $0x18] sm:$0xff] %v774
      %s777 = sadd.s32 %s532, 2
      %s778 = scvt.s32.f32 %s777
      %s779 = smul.f32 %s778, 0.46666667
      %s780 = sfloor.f32 %s779
      %s781 = ssub.f32 %s779, %s780
      %s782 = scvt.f32.s32.to.zero.pseudo %s780
      %p783 = scmp.gt.s32.totalorder %s782, 0
      %s784 = scalar_select %p783, %s782, 0
      %p785 = scmp.lt.s32.totalorder %s784, 7
      %s786 = scalar_select %p785, %s784, 7
      %s787 = sadd.s32 %s786, 1
      %p788 = scmp.lt.s32.totalorder %s787, 7
      %s789 = scalar_select %p788, %s787, 7
      %s790 = smul.u32 %s786, 8
      %s791 = smul.u32 %s789, 8
      %s792 = sshra.s32 %s790, 3
      %s793 = sand.u32 %s790, 7
      %s794 = smul.u32 %s792, 2
      %s795 = smul.addr %s794, 4
      %s796 = scalar_lea.vmem %s496, %s795
      %v797 = vld [vmem:[%s796] sm:$0xff]
      %v798 = vunpack.c.l.bf16 %v797
      %v799 = vunpack.c.h.bf16 %v797
      %s800 = sshra.s32 %s791, 3
      %s801 = sand.u32 %s791, 7
      %s802 = smul.u32 %s800, 2
      %s803 = smul.addr %s802, 4
      %s804 = scalar_lea.vmem %s496, %s803
      %v805 = vld [vmem:[%s804] sm:$0xff]
      %v806 = vunpack.c.l.bf16 %v805
      %v807 = vunpack.c.h.bf16 %v805
      %v808 = vsub.f32 %v806, %v798
      %v809 = vsub.f32 %v807, %v799
      %v810 = vstv %s781
      %v811 = vmul.f32 %v810, %v808
      %v812 = vmul.f32 %v810, %v809
      %v813 = vadd.f32 %v798, %v811
      %v814 = vadd.f32 %v799, %v812
      %815 = vmatprep.subr.mxu0 %v814
      %816 = vmatpush1.msra.mxu0 %v813
      %817 = vmatprep.subr.mxu0 0.0
      %818 = vmatpush1.msra.mxu0 0.0
      %819 = vmatprep.subr.mxu0 0.0
      %820 = vmatpush1.msra.mxu0 0.0
      %821 = vmatprep.subr.mxu0 0.0
      %822 = vmatpush1.msra.mxu0 0.0
      %823 = vmatprep.subr.mxu0 0.0
      %824 = vmatpush1.msra.mxu0 0.0
      %825 = vmatprep.subr.mxu0 0.0
      %826 = vmatpush1.msra.mxu0 0.0
      %827 = vmatprep.subr.mxu0 0.0
      %828 = vmatpush1.msra.mxu0 0.0
      %829 = vmatprep.subr.mxu0 0.0
      %830 = vmatpush1.msra.mxu0 0.0
      %831 = vmatprep.subr.mxu0 0.0
      %832 = vmatpush1.msra.mxu0 0.0
      %833 = vmatprep.subr.mxu0 0.0
      %834 = vmatpush1.msra.mxu0 0.0
      %835 = vmatprep.subr.mxu0 0.0
      %836 = vmatpush1.msra.mxu0 0.0
      %837 = vmatprep.subr.mxu0 0.0
      %838 = vmatpush1.msra.mxu0 0.0
      %839 = vmatprep.subr.mxu0 0.0
      %840 = vmatpush1.msra.mxu0 0.0
      %841 = vmatprep.subr.mxu0 0.0
      %842 = vmatpush1.msra.mxu0 0.0
      %843 = vmatprep.subr.mxu0 0.0
      %844 = vmatpush1.msra.mxu0 0.0
      %845 = vmatprep.subr.mxu0 0.0
      %846 = vmatpush1.msra.mxu0 0.0
      %847 = vmatprep.subr.mxu0 0.0
      %848 = vmatpush1.msra.mxu0 0.0
      %849 = vmatprep.subr.mxu0 0.0
      %850 = vmatpush1.msra.mxu0 0.0
      %851 = vmatprep.subr.mxu0 0.0
      %852 = vmatpush1.msra.mxu0 0.0
      %853 = vmatprep.subr.mxu0 0.0
      %854 = vmatpush1.msra.mxu0 0.0
      %855 = vmatprep.subr.mxu0 0.0
      %856 = vmatpush1.msra.mxu0 0.0
      %857 = vmatprep.subr.mxu0 0.0
      %858 = vmatpush1.msra.mxu0 0.0
      %859 = vmatprep.subr.mxu0 0.0
      %860 = vmatpush1.msra.mxu0 0.0
      %861 = vmatprep.subr.mxu0 0.0
      %862 = vmatpush1.msra.mxu0 0.0
      %863 = vmatprep.subr.mxu0 0.0
      %864 = vmatpush1.msra.mxu0 0.0
      %865 = vmatprep.subr.mxu0 0.0
      %866 = vmatpush1.msra.mxu0 0.0
      %867 = vmatprep.subr.mxu0 0.0
      %868 = vmatpush1.msra.mxu0 0.0
      %869 = vmatprep.subr.mxu0 0.0
      %870 = vmatpush1.msra.mxu0 0.0
      %871 = vmatprep.subr.mxu0 0.0
      %872 = vmatpush1.msra.mxu0 0.0
      %873 = vmatprep.subr.mxu0 0.0
      %874 = vmatpush1.msra.mxu0 0.0
      %875 = vmatprep.subr.mxu0 0.0
      %876 = vmatpush1.msra.mxu0 0.0
      %877 = vmatprep.subr.mxu0 0.0
      %878 = vmatpush1.msra.mxu0 0.0
      %879 = vmatprep.mubr.f32.mxu0 0.0
      %880 = vmatmul.mubr.f32.gmra.mrb[0].mxu0 %v572
      %v881 = vpop.f32.mrb[0].mxu0
      %v882 = vadd.f32 0.0, %v881
      %v883 = vpop.f32.mrb[0].mxu0
      %v884 = vadd.f32 0.0, %v883
      %885 = vmatprep.mubr.f32.mxu0 0.0
      %886 = vmatmul.mubr.f32.gmra.mrb[0].mxu0 %v575
      %v887 = vpop.f32.mrb[0].mxu0
      %v888 = vadd.f32 0.0, %v887
      %v889 = vpop.f32.mrb[0].mxu0
      %v890 = vadd.f32 0.0, %v889
      %891 = vdwg.mxu0
      %v892 = vpack.c.bf16 %v888, %v882
      %v893 = vpack.c.bf16 %v890, %v884
      %894 = vst [vmem:[#allocation2 + $0x20] sm:$0xff] %v892
      %895 = vst [vmem:[#allocation2 + $0x28] sm:$0xff] %v893
      %s896 = sadd.s32 %s532, 3
      %s897 = scvt.s32.f32 %s896
      %s898 = smul.f32 %s897, 0.46666667
      %s899 = sfloor.f32 %s898
      %s900 = ssub.f32 %s898, %s899
      %s901 = scvt.f32.s32.to.zero.pseudo %s899
      %p902 = scmp.gt.s32.totalorder %s901, 0
      %s903 = scalar_select %p902, %s901, 0
      %p904 = scmp.lt.s32.totalorder %s903, 7
      %s905 = scalar_select %p904, %s903, 7
      %s906 = sadd.s32 %s905, 1
      %p907 = scmp.lt.s32.totalorder %s906, 7
      %s908 = scalar_select %p907, %s906, 7
      %s909 = smul.u32 %s905, 8
      %s910 = smul.u32 %s908, 8
      %s911 = sshra.s32 %s909, 3
      %s912 = sand.u32 %s909, 7
      %s913 = smul.u32 %s911, 2
      %s914 = smul.addr %s913, 4
      %s915 = scalar_lea.vmem %s496, %s914
      %v916 = vld [vmem:[%s915] sm:$0xff]
      %v917 = vunpack.c.l.bf16 %v916
      %v918 = vunpack.c.h.bf16 %v916
      %s919 = sshra.s32 %s910, 3
      %s920 = sand.u32 %s910, 7
      %s921 = smul.u32 %s919, 2
      %s922 = smul.addr %s921, 4
      %s923 = scalar_lea.vmem %s496, %s922
      %v924 = vld [vmem:[%s923] sm:$0xff]
      %v925 = vunpack.c.l.bf16 %v924
      %v926 = vunpack.c.h.bf16 %v924
      %v927 = vsub.f32 %v925, %v917
      %v928 = vsub.f32 %v926, %v918
      %v929 = vstv %s900
      %v930 = vmul.f32 %v929, %v927
      %v931 = vmul.f32 %v929, %v928
      %v932 = vadd.f32 %v917, %v930
      %v933 = vadd.f32 %v918, %v931
      %934 = vmatprep.subr.mxu0 %v933
      %935 = vmatpush1.msra.mxu0 %v932
      %936 = vmatprep.subr.mxu0 0.0
      %937 = vmatpush1.msra.mxu0 0.0
      %938 = vmatprep.subr.mxu0 0.0
      %939 = vmatpush1.msra.mxu0 0.0
      %940 = vmatprep.subr.mxu0 0.0
      %941 = vmatpush1.msra.mxu0 0.0
      %942 = vmatprep.subr.mxu0 0.0
      %943 = vmatpush1.msra.mxu0 0.0
      %944 = vmatprep.subr.mxu0 0.0
      %945 = vmatpush1.msra.mxu0 0.0
      %946 = vmatprep.subr.mxu0 0.0
      %947 = vmatpush1.msra.mxu0 0.0
      %948 = vmatprep.subr.mxu0 0.0
      %949 = vmatpush1.msra.mxu0 0.0
      %950 = vmatprep.subr.mxu0 0.0
      %951 = vmatpush1.msra.mxu0 0.0
      %952 = vmatprep.subr.mxu0 0.0
      %953 = vmatpush1.msra.mxu0 0.0
      %954 = vmatprep.subr.mxu0 0.0
      %955 = vmatpush1.msra.mxu0 0.0
      %956 = vmatprep.subr.mxu0 0.0
      %957 = vmatpush1.msra.mxu0 0.0
      %958 = vmatprep.subr.mxu0 0.0
      %959 = vmatpush1.msra.mxu0 0.0
      %960 = vmatprep.subr.mxu0 0.0
      %961 = vmatpush1.msra.mxu0 0.0
      %962 = vmatprep.subr.mxu0 0.0
      %963 = vmatpush1.msra.mxu0 0.0
      %964 = vmatprep.subr.mxu0 0.0
      %965 = vmatpush1.msra.mxu0 0.0
      %966 = vmatprep.subr.mxu0 0.0
      %967 = vmatpush1.msra.mxu0 0.0
      %968 = vmatprep.subr.mxu0 0.0
      %969 = vmatpush1.msra.mxu0 0.0
      %970 = vmatprep.subr.mxu0 0.0
      %971 = vmatpush1.msra.mxu0 0.0
      %972 = vmatprep.subr.mxu0 0.0
      %973 = vmatpush1.msra.mxu0 0.0
      %974 = vmatprep.subr.mxu0 0.0
      %975 = vmatpush1.msra.mxu0 0.0
      %976 = vmatprep.subr.mxu0 0.0
      %977 = vmatpush1.msra.mxu0 0.0
      %978 = vmatprep.subr.mxu0 0.0
      %979 = vmatpush1.msra.mxu0 0.0
      %980 = vmatprep.subr.mxu0 0.0
      %981 = vmatpush1.msra.mxu0 0.0
      %982 = vmatprep.subr.mxu0 0.0
      %983 = vmatpush1.msra.mxu0 0.0
      %984 = vmatprep.subr.mxu0 0.0
      %985 = vmatpush1.msra.mxu0 0.0
      %986 = vmatprep.subr.mxu0 0.0
      %987 = vmatpush1.msra.mxu0 0.0
      %988 = vmatprep.subr.mxu0 0.0
      %989 = vmatpush1.msra.mxu0 0.0
      %990 = vmatprep.subr.mxu0 0.0
      %991 = vmatpush1.msra.mxu0 0.0
      %992 = vmatprep.subr.mxu0 0.0
      %993 = vmatpush1.msra.mxu0 0.0
      %994 = vmatprep.subr.mxu0 0.0
      %995 = vmatpush1.msra.mxu0 0.0
      %996 = vmatprep.subr.mxu0 0.0
      %997 = vmatpush1.msra.mxu0 0.0
      %998 = vmatprep.mubr.f32.mxu0 0.0
      %999 = vmatmul.mubr.f32.gmra.mrb[0].mxu0 %v572
      %v1000 = vpop.f32.mrb[0].mxu0
      %v1001 = vadd.f32 0.0, %v1000
      %v1002 = vpop.f32.mrb[0].mxu0
      %v1003 = vadd.f32 0.0, %v1002
      %1004 = vmatprep.mubr.f32.mxu0 0.0
      %1005 = vmatmul.mubr.f32.gmra.mrb[0].mxu0 %v575
      %v1006 = vpop.f32.mrb[0].mxu0
      %v1007 = vadd.f32 0.0, %v1006
      %v1008 = vpop.f32.mrb[0].mxu0
      %v1009 = vadd.f32 0.0, %v1008
      %1010 = vdwg.mxu0
      %v1011 = vpack.c.bf16 %v1007, %v1001
      %v1012 = vpack.c.bf16 %v1009, %v1003
      %1013 = vst [vmem:[#allocation2 + $0x30] sm:$0xff] %v1011
      %1014 = vst [vmem:[#allocation2 + $0x38] sm:$0xff] %v1012
      %s1015 = sadd.s32 %s532, 4
      %s1016 = scvt.s32.f32 %s1015
      %s1017 = smul.f32 %s1016, 0.46666667
      %s1018 = sfloor.f32 %s1017
      %s1019 = ssub.f32 %s1017, %s1018
      %s1020 = scvt.f32.s32.to.zero.pseudo %s1018
      %p1021 = scmp.gt.s32.totalorder %s1020, 0
      %s1022 = scalar_select %p1021, %s1020, 0
      %p1023 = scmp.lt.s32.totalorder %s1022, 7
      %s1024 = scalar_select %p1023, %s1022, 7
      %s1025 = sadd.s32 %s1024, 1
      %p1026 = scmp.lt.s32.totalorder %s1025, 7
      %s1027 = scalar_select %p1026, %s1025, 7
      %s1028 = smul.u32 %s1024, 8
      %s1029 = smul.u32 %s1027, 8
      %s1030 = sshra.s32 %s1028, 3
      %s1031 = sand.u32 %s1028, 7
      %s1032 = smul.u32 %s1030, 2
      %s1033 = smul.addr %s1032, 4
      %s1034 = scalar_lea.vmem %s496, %s1033
      %v1035 = vld [vmem:[%s1034] sm:$0xff]
      %v1036 = vunpack.c.l.bf16 %v1035
      %v1037 = vunpack.c.h.bf16 %v1035
      %s1038 = sshra.s32 %s1029, 3
      %s1039 = sand.u32 %s1029, 7
      %s1040 = smul.u32 %s1038, 2
      %s1041 = smul.addr %s1040, 4
      %s1042 = scalar_lea.vmem %s496, %s1041
      %v1043 = vld [vmem:[%s1042] sm:$0xff]
      %v1044 = vunpack.c.l.bf16 %v1043
      %v1045 = vunpack.c.h.bf16 %v1043
      %v1046 = vsub.f32 %v1044, %v1036
      %v1047 = vsub.f32 %v1045, %v1037
      %v1048 = vstv %s1019
      %v1049 = vmul.f32 %v1048, %v1046
      %v1050 = vmul.f32 %v1048, %v1047
      %v1051 = vadd.f32 %v1036, %v1049
      %v1052 = vadd.f32 %v1037, %v1050
      %1053 = vmatprep.subr.mxu0 %v1052
      %1054 = vmatpush1.msra.mxu0 %v1051
      %1055 = vmatprep.subr.mxu0 0.0
      %1056 = vmatpush1.msra.mxu0 0.0
      %1057 = vmatprep.subr.mxu0 0.0
      %1058 = vmatpush1.msra.mxu0 0.0
      %1059 = vmatprep.subr.mxu0 0.0
      %1060 = vmatpush1.msra.mxu0 0.0
      %1061 = vmatprep.subr.mxu0 0.0
      %1062 = vmatpush1.msra.mxu0 0.0
      %1063 = vmatprep.subr.mxu0 0.0
      %1064 = vmatpush1.msra.mxu0 0.0
      %1065 = vmatprep.subr.mxu0 0.0
      %1066 = vmatpush1.msra.mxu0 0.0
      %1067 = vmatprep.subr.mxu0 0.0
      %1068 = vmatpush1.msra.mxu0 0.0
      %1069 = vmatprep.subr.mxu0 0.0
      %1070 = vmatpush1.msra.mxu0 0.0
      %1071 = vmatprep.subr.mxu0 0.0
      %1072 = vmatpush1.msra.mxu0 0.0
      %1073 = vmatprep.subr.mxu0 0.0
      %1074 = vmatpush1.msra.mxu0 0.0
      %1075 = vmatprep.subr.mxu0 0.0
      %1076 = vmatpush1.msra.mxu0 0.0
      %1077 = vmatprep.subr.mxu0 0.0
      %1078 = vmatpush1.msra.mxu0 0.0
      %1079 = vmatprep.subr.mxu0 0.0
      %1080 = vmatpush1.msra.mxu0 0.0
      %1081 = vmatprep.subr.mxu0 0.0
      %1082 = vmatpush1.msra.mxu0 0.0
      %1083 = vmatprep.subr.mxu0 0.0
      %1084 = vmatpush1.msra.mxu0 0.0
      %1085 = vmatprep.subr.mxu0 0.0
      %1086 = vmatpush1.msra.mxu0 0.0
      %1087 = vmatprep.subr.mxu0 0.0
      %1088 = vmatpush1.msra.mxu0 0.0
      %1089 = vmatprep.subr.mxu0 0.0
      %1090 = vmatpush1.msra.mxu0 0.0
      %1091 = vmatprep.subr.mxu0 0.0
      %1092 = vmatpush1.msra.mxu0 0.0
      %1093 = vmatprep.subr.mxu0 0.0
      %1094 = vmatpush1.msra.mxu0 0.0
      %1095 = vmatprep.subr.mxu0 0.0
      %1096 = vmatpush1.msra.mxu0 0.0
      %1097 = vmatprep.subr.mxu0 0.0
      %1098 = vmatpush1.msra.mxu0 0.0
      %1099 = vmatprep.subr.mxu0 0.0
      %1100 = vmatpush1.msra.mxu0 0.0
      %1101 = vmatprep.subr.mxu0 0.0
      %1102 = vmatpush1.msra.mxu0 0.0
      %1103 = vmatprep.subr.mxu0 0.0
      %1104 = vmatpush1.msra.mxu0 0.0
      %1105 = vmatprep.subr.mxu0 0.0
      %1106 = vmatpush1.msra.mxu0 0.0
      %1107 = vmatprep.subr.mxu0 0.0
      %1108 = vmatpush1.msra.mxu0 0.0
      %1109 = vmatprep.subr.mxu0 0.0
      %1110 = vmatpush1.msra.mxu0 0.0
      %1111 = vmatprep.subr.mxu0 0.0
      %1112 = vmatpush1.msra.mxu0 0.0
      %1113 = vmatprep.subr.mxu0 0.0
      %1114 = vmatpush1.msra.mxu0 0.0
      %1115 = vmatprep.subr.mxu0 0.0
      %1116 = vmatpush1.msra.mxu0 0.0
      %1117 = vmatprep.mubr.f32.mxu0 0.0
      %1118 = vmatmul.mubr.f32.gmra.mrb[0].mxu0 %v572
      %v1119 = vpop.f32.mrb[0].mxu0
      %v1120 = vadd.f32 0.0, %v1119
      %v1121 = vpop.f32.mrb[0].mxu0
      %v1122 = vadd.f32 0.0, %v1121
      %1123 = vmatprep.mubr.f32.mxu0 0.0
      %1124 = vmatmul.mubr.f32.gmra.mrb[0].mxu0 %v575
      %v1125 = vpop.f32.mrb[0].mxu0
      %v1126 = vadd.f32 0.0, %v1125
      %v1127 = vpop.f32.mrb[0].mxu0
      %v1128 = vadd.f32 0.0, %v1127
      %1129 = vdwg.mxu0
      %v1130 = vpack.c.bf16 %v1126, %v1120
      %v1131 = vpack.c.bf16 %v1128, %v1122
      %1132 = vst [vmem:[#allocation2 + $0x40] sm:$0xff] %v1130
      %1133 = vst [vmem:[#allocation2 + $0x48] sm:$0xff] %v1131
      %s1134 = sadd.s32 %s532, 5
      %s1135 = scvt.s32.f32 %s1134
      %s1136 = smul.f32 %s1135, 0.46666667
      %s1137 = sfloor.f32 %s1136
      %s1138 = ssub.f32 %s1136, %s1137
      %s1139 = scvt.f32.s32.to.zero.pseudo %s1137
      %p1140 = scmp.gt.s32.totalorder %s1139, 0
      %s1141 = scalar_select %p1140, %s1139, 0
      %p1142 = scmp.lt.s32.totalorder %s1141, 7
      %s1143 = scalar_select %p1142, %s1141, 7
      %s1144 = sadd.s32 %s1143, 1
      %p1145 = scmp.lt.s32.totalorder %s1144, 7
      %s1146 = scalar_select %p1145, %s1144, 7
      %s1147 = smul.u32 %s1143, 8
      %s1148 = smul.u32 %s1146, 8
      %s1149 = sshra.s32 %s1147, 3
      %s1150 = sand.u32 %s1147, 7
      %s1151 = smul.u32 %s1149, 2
      %s1152 = smul.addr %s1151, 4
      %s1153 = scalar_lea.vmem %s496, %s1152
      %v1154 = vld [vmem:[%s1153] sm:$0xff]
      %v1155 = vunpack.c.l.bf16 %v1154
      %v1156 = vunpack.c.h.bf16 %v1154
      %s1157 = sshra.s32 %s1148, 3
      %s1158 = sand.u32 %s1148, 7
      %s1159 = smul.u32 %s1157, 2
      %s1160 = smul.addr %s1159, 4
      %s1161 = scalar_lea.vmem %s496, %s1160
      %v1162 = vld [vmem:[%s1161] sm:$0xff]
      %v1163 = vunpack.c.l.bf16 %v1162
      %v1164 = vunpack.c.h.bf16 %v1162
      %v1165 = vsub.f32 %v1163, %v1155
      %v1166 = vsub.f32 %v1164, %v1156
      %v1167 = vstv %s1138
      %v1168 = vmul.f32 %v1167, %v1165
      %v1169 = vmul.f32 %v1167, %v1166
      %v1170 = vadd.f32 %v1155, %v1168
      %v1171 = vadd.f32 %v1156, %v1169
      %1172 = vmatprep.subr.mxu0 %v1171
      %1173 = vmatpush1.msra.mxu0 %v1170
      %1174 = vmatprep.subr.mxu0 0.0
      %1175 = vmatpush1.msra.mxu0 0.0
      %1176 = vmatprep.subr.mxu0 0.0
      %1177 = vmatpush1.msra.mxu0 0.0
      %1178 = vmatprep.subr.mxu0 0.0
      %1179 = vmatpush1.msra.mxu0 0.0
      %1180 = vmatprep.subr.mxu0 0.0
      %1181 = vmatpush1.msra.mxu0 0.0
      %1182 = vmatprep.subr.mxu0 0.0
      %1183 = vmatpush1.msra.mxu0 0.0
      %1184 = vmatprep.subr.mxu0 0.0
      %1185 = vmatpush1.msra.mxu0 0.0
      %1186 = vmatprep.subr.mxu0 0.0
      %1187 = vmatpush1.msra.mxu0 0.0
      %1188 = vmatprep.subr.mxu0 0.0
      %1189 = vmatpush1.msra.mxu0 0.0
      %1190 = vmatprep.subr.mxu0 0.0
      %1191 = vmatpush1.msra.mxu0 0.0
      %1192 = vmatprep.subr.mxu0 0.0
      %1193 = vmatpush1.msra.mxu0 0.0
      %1194 = vmatprep.subr.mxu0 0.0
      %1195 = vmatpush1.msra.mxu0 0.0
      %1196 = vmatprep.subr.mxu0 0.0
      %1197 = vmatpush1.msra.mxu0 0.0
      %1198 = vmatprep.subr.mxu0 0.0
      %1199 = vmatpush1.msra.mxu0 0.0
      %1200 = vmatprep.subr.mxu0 0.0
      %1201 = vmatpush1.msra.mxu0 0.0
      %1202 = vmatprep.subr.mxu0 0.0
      %1203 = vmatpush1.msra.mxu0 0.0
      %1204 = vmatprep.subr.mxu0 0.0
      %1205 = vmatpush1.msra.mxu0 0.0
      %1206 = vmatprep.subr.mxu0 0.0
      %1207 = vmatpush1.msra.mxu0 0.0
      %1208 = vmatprep.subr.mxu0 0.0
      %1209 = vmatpush1.msra.mxu0 0.0
      %1210 = vmatprep.subr.mxu0 0.0
      %1211 = vmatpush1.msra.mxu0 0.0
      %1212 = vmatprep.subr.mxu0 0.0
      %1213 = vmatpush1.msra.mxu0 0.0
      %1214 = vmatprep.subr.mxu0 0.0
      %1215 = vmatpush1.msra.mxu0 0.0
      %1216 = vmatprep.subr.mxu0 0.0
      %1217 = vmatpush1.msra.mxu0 0.0
      %1218 = vmatprep.subr.mxu0 0.0
      %1219 = vmatpush1.msra.mxu0 0.0
      %1220 = vmatprep.subr.mxu0 0.0
      %1221 = vmatpush1.msra.mxu0 0.0
      %1222 = vmatprep.subr.mxu0 0.0
      %1223 = vmatpush1.msra.mxu0 0.0
      %1224 = vmatprep.subr.mxu0 0.0
      %1225 = vmatpush1.msra.mxu0 0.0
      %1226 = vmatprep.subr.mxu0 0.0
      %1227 = vmatpush1.msra.mxu0 0.0
      %1228 = vmatprep.subr.mxu0 0.0
      %1229 = vmatpush1.msra.mxu0 0.0
      %1230 = vmatprep.subr.mxu0 0.0
      %1231 = vmatpush1.msra.mxu0 0.0
      %1232 = vmatprep.subr.mxu0 0.0
      %1233 = vmatpush1.msra.mxu0 0.0
      %1234 = vmatprep.subr.mxu0 0.0
      %1235 = vmatpush1.msra.mxu0 0.0
      %1236 = vmatprep.mubr.f32.mxu0 0.0
      %1237 = vmatmul.mubr.f32.gmra.mrb[0].mxu0 %v572
      %v1238 = vpop.f32.mrb[0].mxu0
      %v1239 = vadd.f32 0.0, %v1238
      %v1240 = vpop.f32.mrb[0].mxu0
      %v1241 = vadd.f32 0.0, %v1240
      %1242 = vmatprep.mubr.f32.mxu0 0.0
      %1243 = vmatmul.mubr.f32.gmra.mrb[0].mxu0 %v575
      %v1244 = vpop.f32.mrb[0].mxu0
      %v1245 = vadd.f32 0.0, %v1244
      %v1246 = vpop.f32.mrb[0].mxu0
      %v1247 = vadd.f32 0.0, %v1246
      %1248 = vdwg.mxu0
      %v1249 = vpack.c.bf16 %v1245, %v1239
      %v1250 = vpack.c.bf16 %v1247, %v1241
      %1251 = vst [vmem:[#allocation2 + $0x50] sm:$0xff] %v1249
      %1252 = vst [vmem:[#allocation2 + $0x58] sm:$0xff] %v1250
      %s1253 = sadd.s32 %s532, 6
      %s1254 = scvt.s32.f32 %s1253
      %s1255 = smul.f32 %s1254, 0.46666667
      %s1256 = sfloor.f32 %s1255
      %s1257 = ssub.f32 %s1255, %s1256
      %s1258 = scvt.f32.s32.to.zero.pseudo %s1256
      %p1259 = scmp.gt.s32.totalorder %s1258, 0
      %s1260 = scalar_select %p1259, %s1258, 0
      %p1261 = scmp.lt.s32.totalorder %s1260, 7
      %s1262 = scalar_select %p1261, %s1260, 7
      %s1263 = sadd.s32 %s1262, 1
      %p1264 = scmp.lt.s32.totalorder %s1263, 7
      %s1265 = scalar_select %p1264, %s1263, 7
      %s1266 = smul.u32 %s1262, 8
      %s1267 = smul.u32 %s1265, 8
      %s1268 = sshra.s32 %s1266, 3
      %s1269 = sand.u32 %s1266, 7
      %s1270 = smul.u32 %s1268, 2
      %s1271 = smul.addr %s1270, 4
      %s1272 = scalar_lea.vmem %s496, %s1271
      %v1273 = vld [vmem:[%s1272] sm:$0xff]
      %v1274 = vunpack.c.l.bf16 %v1273
      %v1275 = vunpack.c.h.bf16 %v1273
      %s1276 = sshra.s32 %s1267, 3
      %s1277 = sand.u32 %s1267, 7
      %s1278 = smul.u32 %s1276, 2
      %s1279 = smul.addr %s1278, 4
      %s1280 = scalar_lea.vmem %s496, %s1279
      %v1281 = vld [vmem:[%s1280] sm:$0xff]
      %v1282 = vunpack.c.l.bf16 %v1281
      %v1283 = vunpack.c.h.bf16 %v1281
      %v1284 = vsub.f32 %v1282, %v1274
      %v1285 = vsub.f32 %v1283, %v1275
      %v1286 = vstv %s1257
      %v1287 = vmul.f32 %v1286, %v1284
      %v1288 = vmul.f32 %v1286, %v1285
      %v1289 = vadd.f32 %v1274, %v1287
      %v1290 = vadd.f32 %v1275, %v1288
      %1291 = vmatprep.subr.mxu0 %v1290
      %1292 = vmatpush1.msra.mxu0 %v1289
      %1293 = vmatprep.subr.mxu0 0.0
      %1294 = vmatpush1.msra.mxu0 0.0
      %1295 = vmatprep.subr.mxu0 0.0
      %1296 = vmatpush1.msra.mxu0 0.0
      %1297 = vmatprep.subr.mxu0 0.0
      %1298 = vmatpush1.msra.mxu0 0.0
      %1299 = vmatprep.subr.mxu0 0.0
      %1300 = vmatpush1.msra.mxu0 0.0
      %1301 = vmatprep.subr.mxu0 0.0
      %1302 = vmatpush1.msra.mxu0 0.0
      %1303 = vmatprep.subr.mxu0 0.0
      %1304 = vmatpush1.msra.mxu0 0.0
      %1305 = vmatprep.subr.mxu0 0.0
      %1306 = vmatpush1.msra.mxu0 0.0
      %1307 = vmatprep.subr.mxu0 0.0
      %1308 = vmatpush1.msra.mxu0 0.0
      %1309 = vmatprep.subr.mxu0 0.0
      %1310 = vmatpush1.msra.mxu0 0.0
      %1311 = vmatprep.subr.mxu0 0.0
      %1312 = vmatpush1.msra.mxu0 0.0
      %1313 = vmatprep.subr.mxu0 0.0
      %1314 = vmatpush1.msra.mxu0 0.0
      %1315 = vmatprep.subr.mxu0 0.0
      %1316 = vmatpush1.msra.mxu0 0.0
      %1317 = vmatprep.subr.mxu0 0.0
      %1318 = vmatpush1.msra.mxu0 0.0
      %1319 = vmatprep.subr.mxu0 0.0
      %1320 = vmatpush1.msra.mxu0 0.0
      %1321 = vmatprep.subr.mxu0 0.0
      %1322 = vmatpush1.msra.mxu0 0.0
      %1323 = vmatprep.subr.mxu0 0.0
      %1324 = vmatpush1.msra.mxu0 0.0
      %1325 = vmatprep.subr.mxu0 0.0
      %1326 = vmatpush1.msra.mxu0 0.0
      %1327 = vmatprep.subr.mxu0 0.0
      %1328 = vmatpush1.msra.mxu0 0.0
      %1329 = vmatprep.subr.mxu0 0.0
      %1330 = vmatpush1.msra.mxu0 0.0
      %1331 = vmatprep.subr.mxu0 0.0
      %1332 = vmatpush1.msra.mxu0 0.0
      %1333 = vmatprep.subr.mxu0 0.0
      %1334 = vmatpush1.msra.mxu0 0.0
      %1335 = vmatprep.subr.mxu0 0.0
      %1336 = vmatpush1.msra.mxu0 0.0
      %1337 = vmatprep.subr.mxu0 0.0
      %1338 = vmatpush1.msra.mxu0 0.0
      %1339 = vmatprep.subr.mxu0 0.0
      %1340 = vmatpush1.msra.mxu0 0.0
      %1341 = vmatprep.subr.mxu0 0.0
      %1342 = vmatpush1.msra.mxu0 0.0
      %1343 = vmatprep.subr.mxu0 0.0
      %1344 = vmatpush1.msra.mxu0 0.0
      %1345 = vmatprep.subr.mxu0 0.0
      %1346 = vmatpush1.msra.mxu0 0.0
      %1347 = vmatprep.subr.mxu0 0.0
      %1348 = vmatpush1.msra.mxu0 0.0
      %1349 = vmatprep.subr.mxu0 0.0
      %1350 = vmatpush1.msra.mxu0 0.0
      %1351 = vmatprep.subr.mxu0 0.0
      %1352 = vmatpush1.msra.mxu0 0.0
      %1353 = vmatprep.subr.mxu0 0.0
      %1354 = vmatpush1.msra.mxu0 0.0
      %1355 = vmatprep.mubr.f32.mxu0 0.0
      %1356 = vmatmul.mubr.f32.gmra.mrb[0].mxu0 %v572
      %v1357 = vpop.f32.mrb[0].mxu0
      %v1358 = vadd.f32 0.0, %v1357
      %v1359 = vpop.f32.mrb[0].mxu0
      %v1360 = vadd.f32 0.0, %v1359
      %1361 = vmatprep.mubr.f32.mxu0 0.0
      %1362 = vmatmul.mubr.f32.gmra.mrb[0].mxu0 %v575
      %v1363 = vpop.f32.mrb[0].mxu0
      %v1364 = vadd.f32 0.0, %v1363
      %v1365 = vpop.f32.mrb[0].mxu0
      %v1366 = vadd.f32 0.0, %v1365
      %1367 = vdwg.mxu0
      %v1368 = vpack.c.bf16 %v1364, %v1358
      %v1369 = vpack.c.bf16 %v1366, %v1360
      %1370 = vst [vmem:[#allocation2 + $0x60] sm:$0xff] %v1368
      %1371 = vst [vmem:[#allocation2 + $0x68] sm:$0xff] %v1369
      %s1372 = sadd.s32 %s532, 7
      %s1373 = scvt.s32.f32 %s1372
      %s1374 = smul.f32 %s1373, 0.46666667
      %s1375 = sfloor.f32 %s1374
      %s1376 = ssub.f32 %s1374, %s1375
      %s1377 = scvt.f32.s32.to.zero.pseudo %s1375
      %p1378 = scmp.gt.s32.totalorder %s1377, 0
      %s1379 = scalar_select %p1378, %s1377, 0
      %p1380 = scmp.lt.s32.totalorder %s1379, 7
      %s1381 = scalar_select %p1380, %s1379, 7
      %s1382 = sadd.s32 %s1381, 1
      %p1383 = scmp.lt.s32.totalorder %s1382, 7
      %s1384 = scalar_select %p1383, %s1382, 7
      %s1385 = smul.u32 %s1381, 8
      %s1386 = smul.u32 %s1384, 8
      %s1387 = sshra.s32 %s1385, 3
      %s1388 = sand.u32 %s1385, 7
      %s1389 = smul.u32 %s1387, 2
      %s1390 = smul.addr %s1389, 4
      %s1391 = scalar_lea.vmem %s496, %s1390
      %v1392 = vld [vmem:[%s1391] sm:$0xff]
      %v1393 = vunpack.c.l.bf16 %v1392
      %v1394 = vunpack.c.h.bf16 %v1392
      %s1395 = sshra.s32 %s1386, 3
      %s1396 = sand.u32 %s1386, 7
      %s1397 = smul.u32 %s1395, 2
      %s1398 = smul.addr %s1397, 4
      %s1399 = scalar_lea.vmem %s496, %s1398
      %v1400 = vld [vmem:[%s1399] sm:$0xff]
      %v1401 = vunpack.c.l.bf16 %v1400
      %v1402 = vunpack.c.h.bf16 %v1400
      %v1403 = vsub.f32 %v1401, %v1393
      %v1404 = vsub.f32 %v1402, %v1394
      %v1405 = vstv %s1376
      %v1406 = vmul.f32 %v1405, %v1403
      %v1407 = vmul.f32 %v1405, %v1404
      %v1408 = vadd.f32 %v1393, %v1406
      %v1409 = vadd.f32 %v1394, %v1407
      %1410 = vmatprep.subr.mxu0 %v1409
      %1411 = vmatpush1.msra.mxu0 %v1408
      %1412 = vmatprep.subr.mxu0 0.0
      %1413 = vmatpush1.msra.mxu0 0.0
      %1414 = vmatprep.subr.mxu0 0.0
      %1415 = vmatpush1.msra.mxu0 0.0
      %1416 = vmatprep.subr.mxu0 0.0
      %1417 = vmatpush1.msra.mxu0 0.0
      %1418 = vmatprep.subr.mxu0 0.0
      %1419 = vmatpush1.msra.mxu0 0.0
      %1420 = vmatprep.subr.mxu0 0.0
      %1421 = vmatpush1.msra.mxu0 0.0
      %1422 = vmatprep.subr.mxu0 0.0
      %1423 = vmatpush1.msra.mxu0 0.0
      %1424 = vmatprep.subr.mxu0 0.0
      %1425 = vmatpush1.msra.mxu0 0.0
      %1426 = vmatprep.subr.mxu0 0.0
      %1427 = vmatpush1.msra.mxu0 0.0
      %1428 = vmatprep.subr.mxu0 0.0
      %1429 = vmatpush1.msra.mxu0 0.0
      %1430 = vmatprep.subr.mxu0 0.0
      %1431 = vmatpush1.msra.mxu0 0.0
      %1432 = vmatprep.subr.mxu0 0.0
      %1433 = vmatpush1.msra.mxu0 0.0
      %1434 = vmatprep.subr.mxu0 0.0
      %1435 = vmatpush1.msra.mxu0 0.0
      %1436 = vmatprep.subr.mxu0 0.0
      %1437 = vmatpush1.msra.mxu0 0.0
      %1438 = vmatprep.subr.mxu0 0.0
      %1439 = vmatpush1.msra.mxu0 0.0
      %1440 = vmatprep.subr.mxu0 0.0
      %1441 = vmatpush1.msra.mxu0 0.0
      %1442 = vmatprep.subr.mxu0 0.0
      %1443 = vmatpush1.msra.mxu0 0.0
      %1444 = vmatprep.subr.mxu0 0.0
      %1445 = vmatpush1.msra.mxu0 0.0
      %1446 = vmatprep.subr.mxu0 0.0
      %1447 = vmatpush1.msra.mxu0 0.0
      %1448 = vmatprep.subr.mxu0 0.0
      %1449 = vmatpush1.msra.mxu0 0.0
      %1450 = vmatprep.subr.mxu0 0.0
      %1451 = vmatpush1.msra.mxu0 0.0
      %1452 = vmatprep.subr.mxu0 0.0
      %1453 = vmatpush1.msra.mxu0 0.0
      %1454 = vmatprep.subr.mxu0 0.0
      %1455 = vmatpush1.msra.mxu0 0.0
      %1456 = vmatprep.subr.mxu0 0.0
      %1457 = vmatpush1.msra.mxu0 0.0
      %1458 = vmatprep.subr.mxu0 0.0
      %1459 = vmatpush1.msra.mxu0 0.0
      %1460 = vmatprep.subr.mxu0 0.0
      %1461 = vmatpush1.msra.mxu0 0.0
      %1462 = vmatprep.subr.mxu0 0.0
      %1463 = vmatpush1.msra.mxu0 0.0
      %1464 = vmatprep.subr.mxu0 0.0
      %1465 = vmatpush1.msra.mxu0 0.0
      %1466 = vmatprep.subr.mxu0 0.0
      %1467 = vmatpush1.msra.mxu0 0.0
      %1468 = vmatprep.subr.mxu0 0.0
      %1469 = vmatpush1.msra.mxu0 0.0
      %1470 = vmatprep.subr.mxu0 0.0
      %1471 = vmatpush1.msra.mxu0 0.0
      %1472 = vmatprep.subr.mxu0 0.0
      %1473 = vmatpush1.msra.mxu0 0.0
      %1474 = vmatprep.mubr.f32.mxu0 0.0
      %1475 = vmatmul.mubr.f32.gmra.mrb[0].mxu0 %v572
      %v1476 = vpop.f32.mrb[0].mxu0
      %v1477 = vadd.f32 0.0, %v1476
      %v1478 = vpop.f32.mrb[0].mxu0
      %v1479 = vadd.f32 0.0, %v1478
      %1480 = vmatprep.mubr.f32.mxu0 0.0
      %1481 = vmatmul.mubr.f32.gmra.mrb[0].mxu0 %v575
      %v1482 = vpop.f32.mrb[0].mxu0
      %v1483 = vadd.f32 0.0, %v1482
      %v1484 = vpop.f32.mrb[0].mxu0
      %v1485 = vadd.f32 0.0, %v1484
      %1486 = vdwg.mxu0
      %v1487 = vpack.c.bf16 %v1483, %v1477
      %v1488 = vpack.c.bf16 %v1485, %v1479
      %1489 = vst [vmem:[#allocation2 + $0x70] sm:$0xff] %v1487
      %1490 = vst [vmem:[#allocation2 + $0x78] sm:$0xff] %v1488
      %v1491 = vld [vmem:[#allocation2] sm:$0xff]
      %v1492 = vld [vmem:[#allocation2 + $0x8] sm:$0xff]
      %v1493 = vld [vmem:[#allocation2 + $0x10] sm:$0xff]
      %v1494 = vld [vmem:[#allocation2 + $0x18] sm:$0xff]
      %v1495 = vld [vmem:[#allocation2 + $0x20] sm:$0xff]
      %v1496 = vld [vmem:[#allocation2 + $0x28] sm:$0xff]
      %v1497 = vld [vmem:[#allocation2 + $0x30] sm:$0xff]
      %v1498 = vld [vmem:[#allocation2 + $0x38] sm:$0xff]
      %v1499 = vld [vmem:[#allocation2 + $0x40] sm:$0xff]
      %v1500 = vld [vmem:[#allocation2 + $0x48] sm:$0xff]
      %v1501 = vld [vmem:[#allocation2 + $0x50] sm:$0xff]
      %v1502 = vld [vmem:[#allocation2 + $0x58] sm:$0xff]
      %v1503 = vld [vmem:[#allocation2 + $0x60] sm:$0xff]
      %v1504 = vld [vmem:[#allocation2 + $0x68] sm:$0xff]
      %v1505 = vld [vmem:[#allocation2 + $0x70] sm:$0xff]
      %v1506 = vld [vmem:[#allocation2 + $0x78] sm:$0xff]
      %v1507 = vld [vmem:[%s504] sm:$0xff]
      %v1508 = vld [vmem:[%s504 + $0x8] sm:$0xff]
      %v1509 = vld [vmem:[%s504 + $0x10] sm:$0xff]
      %v1510 = vld [vmem:[%s504 + $0x18] sm:$0xff]
      %v1511 = vld [vmem:[%s504 + $0x20] sm:$0xff]
      %v1512 = vld [vmem:[%s504 + $0x28] sm:$0xff]
      %v1513 = vld [vmem:[%s504 + $0x30] sm:$0xff]
      %v1514 = vld [vmem:[%s504 + $0x38] sm:$0xff]
      %v1515 = vld [vmem:[%s504 + $0x40] sm:$0xff]
      %v1516 = vld [vmem:[%s504 + $0x48] sm:$0xff]
      %v1517 = vld [vmem:[%s504 + $0x50] sm:$0xff]
      %v1518 = vld [vmem:[%s504 + $0x58] sm:$0xff]
      %v1519 = vld [vmem:[%s504 + $0x60] sm:$0xff]
      %v1520 = vld [vmem:[%s504 + $0x68] sm:$0xff]
      %v1521 = vld [vmem:[%s504 + $0x70] sm:$0xff]
      %v1522 = vld [vmem:[%s504 + $0x78] sm:$0xff]
      %v1523 = vld [vmem:[%s3] sm:$0xf]
      %v1524 = vld [vmem:[%s3 + $0x4] sm:$0xf]
      %v1525 = vld [vmem:[%s3 + $0x8] sm:$0xf]
      %v1526 = vld [vmem:[%s3 + $0xc] sm:$0xf]
      %v1527 = vld [vmem:[%s3 + $0x10] sm:$0xf]
      %v1528 = vld [vmem:[%s3 + $0x14] sm:$0xf]
      %v1529 = vld [vmem:[%s3 + $0x18] sm:$0xf]
      %v1530 = vld [vmem:[%s3 + $0x1c] sm:$0xf]
      %v1531 = vld [vmem:[%s3 + $0x20] sm:$0xf]
      %v1532 = vld [vmem:[%s3 + $0x24] sm:$0xf]
      %v1533 = vld [vmem:[%s3 + $0x28] sm:$0xf]
      %v1534 = vld [vmem:[%s3 + $0x2c] sm:$0xf]
      %v1535 = vld [vmem:[%s3 + $0x30] sm:$0xf]
      %v1536 = vld [vmem:[%s3 + $0x34] sm:$0xf]
      %v1537 = vld [vmem:[%s3 + $0x38] sm:$0xf]
      %v1538 = vld [vmem:[%s3 + $0x3c] sm:$0xf]
      %v1539 = vld [vmem:[%s3 + $0x40] sm:$0xf]
      %v1540 = vld [vmem:[%s3 + $0x44] sm:$0xf]
      %v1541 = vld [vmem:[%s3 + $0x48] sm:$0xf]
      %v1542 = vld [vmem:[%s3 + $0x4c] sm:$0xf]
      %v1543 = vld [vmem:[%s3 + $0x50] sm:$0xf]
      %v1544 = vld [vmem:[%s3 + $0x54] sm:$0xf]
      %v1545 = vld [vmem:[%s3 + $0x58] sm:$0xf]
      %v1546 = vld [vmem:[%s3 + $0x5c] sm:$0xf]
      %v1547 = vld [vmem:[%s3 + $0x60] sm:$0xf]
      %v1548 = vld [vmem:[%s3 + $0x64] sm:$0xf]
      %v1549 = vld [vmem:[%s3 + $0x68] sm:$0xf]
      %v1550 = vld [vmem:[%s3 + $0x6c] sm:$0xf]
      %v1551 = vld [vmem:[%s3 + $0x70] sm:$0xf]
      %v1552 = vld [vmem:[%s3 + $0x74] sm:$0xf]
      %v1553 = vld [vmem:[%s3 + $0x78] sm:$0xf]
      %v1554 = vld [vmem:[%s3 + $0x7c] sm:$0xf]
      %v1555 = vld [vmem:[%s4] sm:$0x1]
      %v1557 = vlaneseq
      %v1558 = vshrl.u32 %v1557, 7
      %v1559 = vsub.s32 0, %v1558
      %v1560 = vrot.slane %v1555, %v1559
      %v1578 = vunpack.c.l.b16 %v1507
      %v1579 = vunpack.c.h.b16 %v1507
      %v1580 = vunpack.c.l.b16 %v1508
      %v1581 = vunpack.c.h.b16 %v1508
      %v1582 = vunpack.c.l.b16 %v1509
      %v1583 = vunpack.c.h.b16 %v1509
      %v1584 = vunpack.c.l.b16 %v1510
      %v1585 = vunpack.c.h.b16 %v1510
      %v1586 = vunpack.c.l.b16 %v1511
      %v1587 = vunpack.c.h.b16 %v1511
      %v1588 = vunpack.c.l.b16 %v1512
      %v1589 = vunpack.c.h.b16 %v1512
      %v1590 = vunpack.c.l.b16 %v1513
      %v1591 = vunpack.c.h.b16 %v1513
      %v1592 = vunpack.c.l.b16 %v1514
      %v1593 = vunpack.c.h.b16 %v1514
      %v1594 = vunpack.c.l.b16 %v1515
      %v1595 = vunpack.c.h.b16 %v1515
      %v1596 = vunpack.c.l.b16 %v1516
      %v1597 = vunpack.c.h.b16 %v1516
      %v1598 = vunpack.c.l.b16 %v1517
      %v1599 = vunpack.c.h.b16 %v1517
      %v1600 = vunpack.c.l.b16 %v1518
      %v1601 = vunpack.c.h.b16 %v1518
      %v1602 = vunpack.c.l.b16 %v1519
      %v1603 = vunpack.c.h.b16 %v1519
      %v1604 = vunpack.c.l.b16 %v1520
      %v1605 = vunpack.c.h.b16 %v1520
      %v1606 = vunpack.c.l.b16 %v1521
      %v1607 = vunpack.c.h.b16 %v1521
      %v1608 = vunpack.c.l.b16 %v1522
      %v1609 = vunpack.c.h.b16 %v1522
      %v1610 = vpack.c.b16 %v1580, %v1578
      %v1611 = vpack.c.b16 %v1581, %v1579
      %v1612 = vpack.c.b16 %v1584, %v1582
      %v1613 = vpack.c.b16 %v1585, %v1583
      %v1614 = vpack.c.b16 %v1588, %v1586
      %v1615 = vpack.c.b16 %v1589, %v1587
      %v1616 = vpack.c.b16 %v1592, %v1590
      %v1617 = vpack.c.b16 %v1593, %v1591
      %v1618 = vpack.c.b16 %v1596, %v1594
      %v1619 = vpack.c.b16 %v1597, %v1595
      %v1620 = vpack.c.b16 %v1600, %v1598
      %v1621 = vpack.c.b16 %v1601, %v1599
      %v1622 = vpack.c.b16 %v1604, %v1602
      %v1623 = vpack.c.b16 %v1605, %v1603
      %v1624 = vpack.c.b16 %v1608, %v1606
      %v1625 = vpack.c.b16 %v1609, %v1607
      %v1674 = vunpack.c.l.b16 %v1523
      %v1675 = vunpack.c.l.b16 %v1524
      %v1676 = vunpack.c.l.b16 %v1525
      %v1677 = vunpack.c.l.b16 %v1526
      %v1678 = vunpack.c.l.b16 %v1527
      %v1679 = vunpack.c.l.b16 %v1528
      %v1680 = vunpack.c.l.b16 %v1529
      %v1681 = vunpack.c.l.b16 %v1530
      %v1682 = vunpack.c.l.b16 %v1531
      %v1683 = vunpack.c.l.b16 %v1532
      %v1684 = vunpack.c.l.b16 %v1533
      %v1685 = vunpack.c.l.b16 %v1534
      %v1686 = vunpack.c.l.b16 %v1535
      %v1687 = vunpack.c.l.b16 %v1536
      %v1688 = vunpack.c.l.b16 %v1537
      %v1689 = vunpack.c.l.b16 %v1538
      %v1690 = vunpack.c.l.b16 %v1539
      %v1691 = vunpack.c.l.b16 %v1540
      %v1692 = vunpack.c.l.b16 %v1541
      %v1693 = vunpack.c.l.b16 %v1542
      %v1694 = vunpack.c.l.b16 %v1543
      %v1695 = vunpack.c.l.b16 %v1544
      %v1696 = vunpack.c.l.b16 %v1545
      %v1697 = vunpack.c.l.b16 %v1546
      %v1698 = vunpack.c.l.b16 %v1547
      %v1699 = vunpack.c.l.b16 %v1548
      %v1700 = vunpack.c.l.b16 %v1549
      %v1701 = vunpack.c.l.b16 %v1550
      %v1702 = vunpack.c.l.b16 %v1551
      %v1703 = vunpack.c.l.b16 %v1552
      %v1704 = vunpack.c.l.b16 %v1553
      %v1705 = vunpack.c.l.b16 %v1554
      %v1706 = vpack.c.b16 %v1675, %v1674
      %v1707 = vpack.c.b16 %v1677, %v1676
      %v1708 = vpack.c.b16 %v1679, %v1678
      %v1709 = vpack.c.b16 %v1681, %v1680
      %v1710 = vpack.c.b16 %v1683, %v1682
      %v1711 = vpack.c.b16 %v1685, %v1684
      %v1712 = vpack.c.b16 %v1687, %v1686
      %v1713 = vpack.c.b16 %v1689, %v1688
      %v1714 = vpack.c.b16 %v1691, %v1690
      %v1715 = vpack.c.b16 %v1693, %v1692
      %v1716 = vpack.c.b16 %v1695, %v1694
      %v1717 = vpack.c.b16 %v1697, %v1696
      %v1718 = vpack.c.b16 %v1699, %v1698
      %v1719 = vpack.c.b16 %v1701, %v1700
      %v1720 = vpack.c.b16 %v1703, %v1702
      %v1721 = vpack.c.b16 %v1705, %v1704
      %1738 = vmatprep.subr.bf16.mxu0 0
      %1739 = vmatpush1.bf16.msra.mxu0 %v1706
      %1740 = vmatprep.subr.bf16.mxu0 0
      %1741 = vmatpush1.bf16.msra.mxu0 %v1707
      %1742 = vmatprep.subr.bf16.mxu0 0
      %1743 = vmatpush1.bf16.msra.mxu0 %v1708
      %1744 = vmatprep.subr.bf16.mxu0 0
      %1745 = vmatpush1.bf16.msra.mxu0 %v1709
      %1746 = vmatprep.subr.bf16.mxu0 0
      %1747 = vmatpush1.bf16.msra.mxu0 %v1710
      %1748 = vmatprep.subr.bf16.mxu0 0
      %1749 = vmatpush1.bf16.msra.mxu0 %v1711
      %1750 = vmatprep.subr.bf16.mxu0 0
      %1751 = vmatpush1.bf16.msra.mxu0 %v1712
      %1752 = vmatprep.subr.bf16.mxu0 0
      %1753 = vmatpush1.bf16.msra.mxu0 %v1713
      %1754 = vmatprep.subr.bf16.mxu0 0
      %1755 = vmatpush1.bf16.msra.mxu0 %v1714
      %1756 = vmatprep.subr.bf16.mxu0 0
      %1757 = vmatpush1.bf16.msra.mxu0 %v1715
      %1758 = vmatprep.subr.bf16.mxu0 0
      %1759 = vmatpush1.bf16.msra.mxu0 %v1716
      %1760 = vmatprep.subr.bf16.mxu0 0
      %1761 = vmatpush1.bf16.msra.mxu0 %v1717
      %1762 = vmatprep.subr.bf16.mxu0 0
      %1763 = vmatpush1.bf16.msra.mxu0 %v1718
      %1764 = vmatprep.subr.bf16.mxu0 0
      %1765 = vmatpush1.bf16.msra.mxu0 %v1719
      %1766 = vmatprep.subr.bf16.mxu0 0
      %1767 = vmatpush1.bf16.msra.mxu0 %v1720
      %1768 = vmatprep.subr.bf16.mxu0 0
      %1769 = vmatpush1.bf16.msra.mxu0 %v1721
      %1770 = vmatprep.mubr.bf16.mxu0 %v1611
      %1771 = vmatmul.mubr.bf16.gmra.mrb[0].mxu0 %v1610
      %v1772 = vpop.f32.mrb[0].mxu0
      %v1773 = vadd.f32 %v1560, %v1772
      %v1774 = vpop.f32.mrb[0].mxu0
      %v1775 = vpop.f32.mrb[0].mxu0
      %v1776 = vadd.f32 %v1560, %v1775
      %v1777 = vpop.f32.mrb[0].mxu0
      %1778 = vmatprep.mubr.bf16.mxu0 %v1613
      %1779 = vmatmul.mubr.bf16.gmra.mrb[0].mxu0 %v1612
      %v1780 = vpop.f32.mrb[0].mxu0
      %v1781 = vadd.f32 %v1560, %v1780
      %v1782 = vpop.f32.mrb[0].mxu0
      %v1783 = vpop.f32.mrb[0].mxu0
      %v1784 = vadd.f32 %v1560, %v1783
      %v1785 = vpop.f32.mrb[0].mxu0
      %1786 = vmatprep.mubr.bf16.mxu0 %v1615
      %1787 = vmatmul.mubr.bf16.gmra.mrb[0].mxu0 %v1614
      %v1788 = vpop.f32.mrb[0].mxu0
      %v1789 = vadd.f32 %v1560, %v1788
      %v1790 = vpop.f32.mrb[0].mxu0
      %v1791 = vpop.f32.mrb[0].mxu0
      %v1792 = vadd.f32 %v1560, %v1791
      %v1793 = vpop.f32.mrb[0].mxu0
      %1794 = vmatprep.mubr.bf16.mxu0 %v1617
      %1795 = vmatmul.mubr.bf16.gmra.mrb[0].mxu0 %v1616
      %v1796 = vpop.f32.mrb[0].mxu0
      %v1797 = vadd.f32 %v1560, %v1796
      %v1798 = vpop.f32.mrb[0].mxu0
      %v1799 = vpop.f32.mrb[0].mxu0
      %v1800 = vadd.f32 %v1560, %v1799
      %v1801 = vpop.f32.mrb[0].mxu0
      %1802 = vmatprep.mubr.bf16.mxu0 %v1619
      %1803 = vmatmul.mubr.bf16.gmra.mrb[0].mxu0 %v1618
      %v1804 = vpop.f32.mrb[0].mxu0
      %v1805 = vadd.f32 %v1560, %v1804
      %v1806 = vpop.f32.mrb[0].mxu0
      %v1807 = vpop.f32.mrb[0].mxu0
      %v1808 = vadd.f32 %v1560, %v1807
      %v1809 = vpop.f32.mrb[0].mxu0
      %1810 = vmatprep.mubr.bf16.mxu0 %v1621
      %1811 = vmatmul.mubr.bf16.gmra.mrb[0].mxu0 %v1620
      %v1812 = vpop.f32.mrb[0].mxu0
      %v1813 = vadd.f32 %v1560, %v1812
      %v1814 = vpop.f32.mrb[0].mxu0
      %v1815 = vpop.f32.mrb[0].mxu0
      %v1816 = vadd.f32 %v1560, %v1815
      %v1817 = vpop.f32.mrb[0].mxu0
      %1818 = vmatprep.mubr.bf16.mxu0 %v1623
      %1819 = vmatmul.mubr.bf16.gmra.mrb[0].mxu0 %v1622
      %v1820 = vpop.f32.mrb[0].mxu0
      %v1821 = vadd.f32 %v1560, %v1820
      %v1822 = vpop.f32.mrb[0].mxu0
      %v1823 = vpop.f32.mrb[0].mxu0
      %v1824 = vadd.f32 %v1560, %v1823
      %v1825 = vpop.f32.mrb[0].mxu0
      %1826 = vmatprep.mubr.bf16.mxu0 %v1625
      %1827 = vmatmul.mubr.bf16.gmra.mrb[0].mxu0 %v1624
      %v1828 = vpop.f32.mrb[0].mxu0
      %v1829 = vadd.f32 %v1560, %v1828
      %v1830 = vpop.f32.mrb[0].mxu0
      %v1831 = vpop.f32.mrb[0].mxu0
      %v1832 = vadd.f32 %v1560, %v1831
      %v1833 = vpop.f32.mrb[0].mxu0
      %1834 = vdwg.mxu0
      %vm1835 = vcmp.ge.f32.partialorder %v1773, 0.0
      %vm1836 = vcmp.ge.f32.partialorder %v1776, 0.0
      %vm1837 = vcmp.ge.f32.partialorder %v1781, 0.0
      %vm1838 = vcmp.ge.f32.partialorder %v1784, 0.0
      %vm1839 = vcmp.ge.f32.partialorder %v1789, 0.0
      %vm1840 = vcmp.ge.f32.partialorder %v1792, 0.0
      %vm1841 = vcmp.ge.f32.partialorder %v1797, 0.0
      %vm1842 = vcmp.ge.f32.partialorder %v1800, 0.0
      %vm1843 = vcmp.ge.f32.partialorder %v1805, 0.0
      %vm1844 = vcmp.ge.f32.partialorder %v1808, 0.0
      %vm1845 = vcmp.ge.f32.partialorder %v1813, 0.0
      %vm1846 = vcmp.ge.f32.partialorder %v1816, 0.0
      %vm1847 = vcmp.ge.f32.partialorder %v1821, 0.0
      %vm1848 = vcmp.ge.f32.partialorder %v1824, 0.0
      %vm1849 = vcmp.ge.f32.partialorder %v1829, 0.0
      %vm1850 = vcmp.ge.f32.partialorder %v1832, 0.0
      %v1851 = vmul.f32 %v1773, 0.01
      %v1852 = vmul.f32 %v1776, 0.01
      %v1853 = vmul.f32 %v1781, 0.01
      %v1854 = vmul.f32 %v1784, 0.01
      %v1855 = vmul.f32 %v1789, 0.01
      %v1856 = vmul.f32 %v1792, 0.01
      %v1857 = vmul.f32 %v1797, 0.01
      %v1858 = vmul.f32 %v1800, 0.01
      %v1859 = vmul.f32 %v1805, 0.01
      %v1860 = vmul.f32 %v1808, 0.01
      %v1861 = vmul.f32 %v1813, 0.01
      %v1862 = vmul.f32 %v1816, 0.01
      %v1863 = vmul.f32 %v1821, 0.01
      %v1864 = vmul.f32 %v1824, 0.01
      %v1865 = vmul.f32 %v1829, 0.01
      %v1866 = vmul.f32 %v1832, 0.01
      %v1867 = vsel %vm1835, %v1773, %v1851
      %v1868 = vsel %vm1836, %v1776, %v1852
      %v1869 = vsel %vm1837, %v1781, %v1853
      %v1870 = vsel %vm1838, %v1784, %v1854
      %v1871 = vsel %vm1839, %v1789, %v1855
      %v1872 = vsel %vm1840, %v1792, %v1856
      %v1873 = vsel %vm1841, %v1797, %v1857
      %v1874 = vsel %vm1842, %v1800, %v1858
      %v1875 = vsel %vm1843, %v1805, %v1859
      %v1876 = vsel %vm1844, %v1808, %v1860
      %v1877 = vsel %vm1845, %v1813, %v1861
      %v1878 = vsel %vm1846, %v1816, %v1862
      %v1879 = vsel %vm1847, %v1821, %v1863
      %v1880 = vsel %vm1848, %v1824, %v1864
      %v1881 = vsel %vm1849, %v1829, %v1865
      %v1882 = vsel %vm1850, %v1832, %v1866
      %v1883 = vld [vmem:[%s5] sm:$0xff]
      %v1884 = vld [vmem:[%s5 + $0x8] sm:$0xff]
      %v1885 = vld [vmem:[%s5 + $0x10] sm:$0xff]
      %v1886 = vld [vmem:[%s5 + $0x18] sm:$0xff]
      %v1887 = vld [vmem:[%s5 + $0x20] sm:$0xff]
      %v1888 = vld [vmem:[%s5 + $0x28] sm:$0xff]
      %v1889 = vld [vmem:[%s5 + $0x30] sm:$0xff]
      %v1890 = vld [vmem:[%s5 + $0x38] sm:$0xff]
      %v1891 = vld [vmem:[%s5 + $0x40] sm:$0xff]
      %v1892 = vld [vmem:[%s5 + $0x48] sm:$0xff]
      %v1893 = vld [vmem:[%s5 + $0x50] sm:$0xff]
      %v1894 = vld [vmem:[%s5 + $0x58] sm:$0xff]
      %v1895 = vld [vmem:[%s5 + $0x60] sm:$0xff]
      %v1896 = vld [vmem:[%s5 + $0x68] sm:$0xff]
      %v1897 = vld [vmem:[%s5 + $0x70] sm:$0xff]
      %v1898 = vld [vmem:[%s5 + $0x78] sm:$0xff]
      %v1899 = vld [vmem:[%s5 + $0x80] sm:$0xff]
      %v1900 = vld [vmem:[%s5 + $0x88] sm:$0xff]
      %v1901 = vld [vmem:[%s5 + $0x90] sm:$0xff]
      %v1902 = vld [vmem:[%s5 + $0x98] sm:$0xff]
      %v1903 = vld [vmem:[%s5 + $0xa0] sm:$0xff]
      %v1904 = vld [vmem:[%s5 + $0xa8] sm:$0xff]
      %v1905 = vld [vmem:[%s5 + $0xb0] sm:$0xff]
      %v1906 = vld [vmem:[%s5 + $0xb8] sm:$0xff]
      %v1907 = vld [vmem:[%s5 + $0xc0] sm:$0xff]
      %v1908 = vld [vmem:[%s5 + $0xc8] sm:$0xff]
      %v1909 = vld [vmem:[%s5 + $0xd0] sm:$0xff]
      %v1910 = vld [vmem:[%s5 + $0xd8] sm:$0xff]
      %v1911 = vld [vmem:[%s5 + $0xe0] sm:$0xff]
      %v1912 = vld [vmem:[%s5 + $0xe8] sm:$0xff]
      %v1913 = vld [vmem:[%s5 + $0xf0] sm:$0xff]
      %v1914 = vld [vmem:[%s5 + $0xf8] sm:$0xff]
      %v1915 = vpack.c.bf16 %v1868, %v1867
      %v1916 = vpack.c.bf16 %v1870, %v1869
      %v1917 = vpack.c.bf16 %v1872, %v1871
      %v1918 = vpack.c.bf16 %v1874, %v1873
      %v1919 = vpack.c.bf16 %v1876, %v1875
      %v1920 = vpack.c.bf16 %v1878, %v1877
      %v1921 = vpack.c.bf16 %v1880, %v1879
      %v1922 = vpack.c.bf16 %v1882, %v1881
      %v1923 = vld [vmem:[%s6] sm:$0xff]
      %v1924 = vld [vmem:[%s6 + $0x8] sm:$0xff]
      %v1925 = vld [vmem:[%s6 + $0x10] sm:$0xff]
      %v1926 = vld [vmem:[%s6 + $0x18] sm:$0xff]
      %v1927 = vld [vmem:[%s6 + $0x20] sm:$0xff]
      %v1928 = vld [vmem:[%s6 + $0x28] sm:$0xff]
      %v1935 = vunpack.c.l.b16 %v1923
      %v1936 = vunpack.c.h.b16 %v1923
      %v1937 = vunpack.c.l.b16 %v1924
      %v1938 = vunpack.c.h.b16 %v1924
      %v1939 = vunpack.c.l.b16 %v1925
      %v1940 = vunpack.c.h.b16 %v1925
      %v1941 = vunpack.c.l.b16 %v1926
      %v1942 = vunpack.c.h.b16 %v1926
      %v1943 = vunpack.c.l.b16 %v1927
      %v1944 = vunpack.c.h.b16 %v1927
      %v1945 = vunpack.c.l.b16 %v1928
      %v1946 = vunpack.c.h.b16 %v1928
      %v1947 = vpack.c.b16 %v1937, %v1935
      %v1948 = vpack.c.b16 %v1938, %v1936
      %v1949 = vpack.c.b16 %v1941, %v1939
      %v1950 = vpack.c.b16 %v1942, %v1940
      %v1951 = vpack.c.b16 %v1945, %v1943
      %v1952 = vpack.c.b16 %v1946, %v1944
      %vm1959 = vcmask 392192
      %v1961 = vsel %vm1959, %v1915, 0
      %v1964 = vsel %vm1959, %v1916, 0
      %v1967 = vsel %vm1959, %v1917, 0
      %v1970 = vsel %vm1959, %v1918, 0
      %v1973 = vsel %vm1959, %v1919, 0
      %v1976 = vsel %vm1959, %v1920, 0
      %v1979 = vsel %vm1959, %v1921, 0
      %v1982 = vsel %vm1959, %v1922, 0
      %1984 = vmatprep.subr.bf16.mxu0 %v1948
      %1985 = vmatpush1.bf16.msra.mxu0 %v1947
      %1986 = vmatprep.subr.bf16.mxu0 %v1950
      %1987 = vmatpush1.bf16.msra.mxu0 %v1949
      %1988 = vmatprep.subr.bf16.mxu0 %v1952
      %1989 = vmatpush1.bf16.msra.mxu0 %v1951
      %1990 = vmatprep.subr.bf16.mxu0 0
      %1991 = vmatpush1.bf16.msra.mxu0 0
      %1992 = vmatprep.subr.bf16.mxu0 0
      %1993 = vmatpush1.bf16.msra.mxu0 0
      %1994 = vmatprep.subr.bf16.mxu0 0
      %1995 = vmatpush1.bf16.msra.mxu0 0
      %1996 = vmatprep.subr.bf16.mxu0 0
      %1997 = vmatpush1.bf16.msra.mxu0 0
      %1998 = vmatprep.subr.bf16.mxu0 0
      %1999 = vmatpush1.bf16.msra.mxu0 0
      %2000 = vmatprep.subr.bf16.mxu0 0
      %2001 = vmatpush1.bf16.msra.mxu0 0
      %2002 = vmatprep.subr.bf16.mxu0 0
      %2003 = vmatpush1.bf16.msra.mxu0 0
      %2004 = vmatprep.subr.bf16.mxu0 0
      %2005 = vmatpush1.bf16.msra.mxu0 0
      %2006 = vmatprep.subr.bf16.mxu0 0
      %2007 = vmatpush1.bf16.msra.mxu0 0
      %2008 = vmatprep.subr.bf16.mxu0 0
      %2009 = vmatpush1.bf16.msra.mxu0 0
      %2010 = vmatprep.subr.bf16.mxu0 0
      %2011 = vmatpush1.bf16.msra.mxu0 0
      %2012 = vmatprep.subr.bf16.mxu0 0
      %2013 = vmatpush1.bf16.msra.mxu0 0
      %2014 = vmatprep.subr.bf16.mxu0 0
      %2015 = vmatpush1.bf16.msra.mxu0 0
      %2016 = vmatprep.mubr.bf16.mxu0 0
      %2017 = vmatmul.mubr.bf16.gmra.mrb[0].mxu0 %v1961
      %v2018 = vpop.f32.mrb[0].mxu0
      %v2019 = vadd.f32 0.0, %v2018
      %v2020 = vpop.f32.mrb[0].mxu0
      %v2021 = vadd.f32 0.0, %v2020
      %v2022 = vpop.f32.mrb[0].mxu0
      %v2023 = vadd.f32 0.0, %v2022
      %v2024 = vpop.f32.mrb[0].mxu0
      %v2025 = vadd.f32 0.0, %v2024
      %2026 = vmatprep.mubr.bf16.mxu0 0
      %2027 = vmatmul.mubr.bf16.gmra.mrb[0].mxu0 %v1964
      %v2028 = vpop.f32.mrb[0].mxu0
      %v2029 = vadd.f32 0.0, %v2028
      %v2030 = vpop.f32.mrb[0].mxu0
      %v2031 = vadd.f32 0.0, %v2030
      %v2032 = vpop.f32.mrb[0].mxu0
      %v2033 = vadd.f32 0.0, %v2032
      %v2034 = vpop.f32.mrb[0].mxu0
      %v2035 = vadd.f32 0.0, %v2034
      %2036 = vmatprep.mubr.bf16.mxu0 0
      %2037 = vmatmul.mubr.bf16.gmra.mrb[0].mxu0 %v1967
      %v2038 = vpop.f32.mrb[0].mxu0
      %v2039 = vadd.f32 0.0, %v2038
      %v2040 = vpop.f32.mrb[0].mxu0
      %v2041 = vadd.f32 0.0, %v2040
      %v2042 = vpop.f32.mrb[0].mxu0
      %v2043 = vadd.f32 0.0, %v2042
      %v2044 = vpop.f32.mrb[0].mxu0
      %v2045 = vadd.f32 0.0, %v2044
      %2046 = vmatprep.mubr.bf16.mxu0 0
      %2047 = vmatmul.mubr.bf16.gmra.mrb[0].mxu0 %v1970
      %v2048 = vpop.f32.mrb[0].mxu0
      %v2049 = vadd.f32 0.0, %v2048
      %v2050 = vpop.f32.mrb[0].mxu0
      %v2051 = vadd.f32 0.0, %v2050
      %v2052 = vpop.f32.mrb[0].mxu0
      %v2053 = vadd.f32 0.0, %v2052
      %v2054 = vpop.f32.mrb[0].mxu0
      %v2055 = vadd.f32 0.0, %v2054
      %2056 = vmatprep.mubr.bf16.mxu0 0
      %2057 = vmatmul.mubr.bf16.gmra.mrb[0].mxu0 %v1973
      %v2058 = vpop.f32.mrb[0].mxu0
      %v2059 = vadd.f32 0.0, %v2058
      %v2060 = vpop.f32.mrb[0].mxu0
      %v2061 = vadd.f32 0.0, %v2060
      %v2062 = vpop.f32.mrb[0].mxu0
      %v2063 = vadd.f32 0.0, %v2062
      %v2064 = vpop.f32.mrb[0].mxu0
      %v2065 = vadd.f32 0.0, %v2064
      %2066 = vmatprep.mubr.bf16.mxu0 0
      %2067 = vmatmul.mubr.bf16.gmra.mrb[0].mxu0 %v1976
      %v2068 = vpop.f32.mrb[0].mxu0
      %v2069 = vadd.f32 0.0, %v2068
      %v2070 = vpop.f32.mrb[0].mxu0
      %v2071 = vadd.f32 0.0, %v2070
      %v2072 = vpop.f32.mrb[0].mxu0
      %v2073 = vadd.f32 0.0, %v2072
      %v2074 = vpop.f32.mrb[0].mxu0
      %v2075 = vadd.f32 0.0, %v2074
      %2076 = vmatprep.mubr.bf16.mxu0 0
      %2077 = vmatmul.mubr.bf16.gmra.mrb[0].mxu0 %v1979
      %v2078 = vpop.f32.mrb[0].mxu0
      %v2079 = vadd.f32 0.0, %v2078
      %v2080 = vpop.f32.mrb[0].mxu0
      %v2081 = vadd.f32 0.0, %v2080
      %v2082 = vpop.f32.mrb[0].mxu0
      %v2083 = vadd.f32 0.0, %v2082
      %v2084 = vpop.f32.mrb[0].mxu0
      %v2085 = vadd.f32 0.0, %v2084
      %2086 = vmatprep.mubr.bf16.mxu0 0
      %2087 = vmatmul.mubr.bf16.gmra.mrb[0].mxu0 %v1982
      %v2088 = vpop.f32.mrb[0].mxu0
      %v2089 = vadd.f32 0.0, %v2088
      %v2090 = vpop.f32.mrb[0].mxu0
      %v2091 = vadd.f32 0.0, %v2090
      %v2092 = vpop.f32.mrb[0].mxu0
      %v2093 = vadd.f32 0.0, %v2092
      %v2094 = vpop.f32.mrb[0].mxu0
      %v2095 = vadd.f32 0.0, %v2094
      %2096 = vdwg.mxu0
      %v2129 = vunpack.c.l.b16 %v1883
      %v2130 = vunpack.c.h.b16 %v1883
      %v2131 = vunpack.c.l.b16 %v1884
      %v2132 = vunpack.c.h.b16 %v1884
      %v2133 = vunpack.c.l.b16 %v1885
      %v2134 = vunpack.c.h.b16 %v1885
      %v2135 = vunpack.c.l.b16 %v1886
      %v2136 = vunpack.c.h.b16 %v1886
      %v2137 = vunpack.c.l.b16 %v1887
      %v2138 = vunpack.c.h.b16 %v1887
      %v2139 = vunpack.c.l.b16 %v1888
      %v2140 = vunpack.c.h.b16 %v1888
      %v2141 = vunpack.c.l.b16 %v1889
      %v2142 = vunpack.c.h.b16 %v1889
      %v2143 = vunpack.c.l.b16 %v1890
      %v2144 = vunpack.c.h.b16 %v1890
      %v2145 = vunpack.c.l.b16 %v1891
      %v2146 = vunpack.c.h.b16 %v1891
      %v2147 = vunpack.c.l.b16 %v1892
      %v2148 = vunpack.c.h.b16 %v1892
      %v2149 = vunpack.c.l.b16 %v1893
      %v2150 = vunpack.c.h.b16 %v1893
      %v2151 = vunpack.c.l.b16 %v1894
      %v2152 = vunpack.c.h.b16 %v1894
      %v2153 = vunpack.c.l.b16 %v1895
      %v2154 = vunpack.c.h.b16 %v1895
      %v2155 = vunpack.c.l.b16 %v1896
      %v2156 = vunpack.c.h.b16 %v1896
      %v2157 = vunpack.c.l.b16 %v1897
      %v2158 = vunpack.c.h.b16 %v1897
      %v2159 = vunpack.c.l.b16 %v1898
      %v2160 = vunpack.c.h.b16 %v1898
      %v2161 = vunpack.c.l.b16 %v1899
      %v2162 = vunpack.c.h.b16 %v1899
      %v2163 = vunpack.c.l.b16 %v1900
      %v2164 = vunpack.c.h.b16 %v1900
      %v2165 = vunpack.c.l.b16 %v1901
      %v2166 = vunpack.c.h.b16 %v1901
      %v2167 = vunpack.c.l.b16 %v1902
      %v2168 = vunpack.c.h.b16 %v1902
      %v2169 = vunpack.c.l.b16 %v1903
      %v2170 = vunpack.c.h.b16 %v1903
      %v2171 = vunpack.c.l.b16 %v1904
      %v2172 = vunpack.c.h.b16 %v1904
      %v2173 = vunpack.c.l.b16 %v1905
      %v2174 = vunpack.c.h.b16 %v1905
      %v2175 = vunpack.c.l.b16 %v1906
      %v2176 = vunpack.c.h.b16 %v1906
      %v2177 = vunpack.c.l.b16 %v1907
      %v2178 = vunpack.c.h.b16 %v1907
      %v2179 = vunpack.c.l.b16 %v1908
      %v2180 = vunpack.c.h.b16 %v1908
      %v2181 = vunpack.c.l.b16 %v1909
      %v2182 = vunpack.c.h.b16 %v1909
      %v2183 = vunpack.c.l.b16 %v1910
      %v2184 = vunpack.c.h.b16 %v1910
      %v2185 = vunpack.c.l.b16 %v1911
      %v2186 = vunpack.c.h.b16 %v1911
      %v2187 = vunpack.c.l.b16 %v1912
      %v2188 = vunpack.c.h.b16 %v1912
      %v2189 = vunpack.c.l.b16 %v1913
      %v2190 = vunpack.c.h.b16 %v1913
      %v2191 = vunpack.c.l.b16 %v1914
      %v2192 = vunpack.c.h.b16 %v1914
      %v2193 = vpack.c.b16 %v2131, %v2129
      %v2194 = vpack.c.b16 %v2132, %v2130
      %v2195 = vpack.c.b16 %v2135, %v2133
      %v2196 = vpack.c.b16 %v2136, %v2134
      %v2197 = vpack.c.b16 %v2139, %v2137
      %v2198 = vpack.c.b16 %v2140, %v2138
      %v2199 = vpack.c.b16 %v2143, %v2141
      %v2200 = vpack.c.b16 %v2144, %v2142
      %v2201 = vpack.c.b16 %v2147, %v2145
      %v2202 = vpack.c.b16 %v2148, %v2146
      %v2203 = vpack.c.b16 %v2151, %v2149
      %v2204 = vpack.c.b16 %v2152, %v2150
      %v2205 = vpack.c.b16 %v2155, %v2153
      %v2206 = vpack.c.b16 %v2156, %v2154
      %v2207 = vpack.c.b16 %v2159, %v2157
      %v2208 = vpack.c.b16 %v2160, %v2158
      %v2209 = vpack.c.b16 %v2163, %v2161
      %v2210 = vpack.c.b16 %v2164, %v2162
      %v2211 = vpack.c.b16 %v2167, %v2165
      %v2212 = vpack.c.b16 %v2168, %v2166
      %v2213 = vpack.c.b16 %v2171, %v2169
      %v2214 = vpack.c.b16 %v2172, %v2170
      %v2215 = vpack.c.b16 %v2175, %v2173
      %v2216 = vpack.c.b16 %v2176, %v2174
      %v2217 = vpack.c.b16 %v2179, %v2177
      %v2218 = vpack.c.b16 %v2180, %v2178
      %v2219 = vpack.c.b16 %v2183, %v2181
      %v2220 = vpack.c.b16 %v2184, %v2182
      %v2221 = vpack.c.b16 %v2187, %v2185
      %v2222 = vpack.c.b16 %v2188, %v2186
      %v2223 = vpack.c.b16 %v2191, %v2189
      %v2224 = vpack.c.b16 %v2192, %v2190
      %2257 = vmatprep.subr.bf16.mxu0 %v2194
      %2258 = vmatpush1.bf16.msra.mxu0 %v2193
      %2259 = vmatprep.subr.bf16.mxu0 %v2196
      %2260 = vmatpush1.bf16.msra.mxu0 %v2195
      %2261 = vmatprep.subr.bf16.mxu0 %v2198
      %2262 = vmatpush1.bf16.msra.mxu0 %v2197
      %2263 = vmatprep.subr.bf16.mxu0 %v2200
      %2264 = vmatpush1.bf16.msra.mxu0 %v2199
      %2265 = vmatprep.subr.bf16.mxu0 %v2202
      %2266 = vmatpush1.bf16.msra.mxu0 %v2201
      %2267 = vmatprep.subr.bf16.mxu0 %v2204
      %2268 = vmatpush1.bf16.msra.mxu0 %v2203
      %2269 = vmatprep.subr.bf16.mxu0 %v2206
      %2270 = vmatpush1.bf16.msra.mxu0 %v2205
      %2271 = vmatprep.subr.bf16.mxu0 %v2208
      %2272 = vmatpush1.bf16.msra.mxu0 %v2207
      %2273 = vmatprep.subr.bf16.mxu0 %v2210
      %2274 = vmatpush1.bf16.msra.mxu0 %v2209
      %2275 = vmatprep.subr.bf16.mxu0 %v2212
      %2276 = vmatpush1.bf16.msra.mxu0 %v2211
      %2277 = vmatprep.subr.bf16.mxu0 %v2214
      %2278 = vmatpush1.bf16.msra.mxu0 %v2213
      %2279 = vmatprep.subr.bf16.mxu0 %v2216
      %2280 = vmatpush1.bf16.msra.mxu0 %v2215
      %2281 = vmatprep.subr.bf16.mxu0 %v2218
      %2282 = vmatpush1.bf16.msra.mxu0 %v2217
      %2283 = vmatprep.subr.bf16.mxu0 %v2220
      %2284 = vmatpush1.bf16.msra.mxu0 %v2219
      %2285 = vmatprep.subr.bf16.mxu0 %v2222
      %2286 = vmatpush1.bf16.msra.mxu0 %v2221
      %2287 = vmatprep.subr.bf16.mxu0 %v2224
      %2288 = vmatpush1.bf16.msra.mxu0 %v2223
      %2289 = vmatprep.mubr.bf16.mxu0 %v1492
      %2290 = vmatmul.mubr.bf16.gmra.mrb[0].mxu0 %v1491
      %v2291 = vpop.f32.mrb[0].mxu0
      %v2292 = vadd.f32 %v2019, %v2291
      %v2293 = vpop.f32.mrb[0].mxu0
      %v2294 = vadd.f32 %v2021, %v2293
      %v2295 = vpop.f32.mrb[0].mxu0
      %v2296 = vadd.f32 %v2023, %v2295
      %v2297 = vpop.f32.mrb[0].mxu0
      %v2298 = vadd.f32 %v2025, %v2297
      %2299 = vmatprep.mubr.bf16.mxu0 %v1494
      %2300 = vmatmul.mubr.bf16.gmra.mrb[0].mxu0 %v1493
      %v2301 = vpop.f32.mrb[0].mxu0
      %v2302 = vadd.f32 %v2029, %v2301
      %v2303 = vpop.f32.mrb[0].mxu0
      %v2304 = vadd.f32 %v2031, %v2303
      %v2305 = vpop.f32.mrb[0].mxu0
      %v2306 = vadd.f32 %v2033, %v2305
      %v2307 = vpop.f32.mrb[0].mxu0
      %v2308 = vadd.f32 %v2035, %v2307
      %2309 = vmatprep.mubr.bf16.mxu0 %v1496
      %2310 = vmatmul.mubr.bf16.gmra.mrb[0].mxu0 %v1495
      %v2311 = vpop.f32.mrb[0].mxu0
      %v2312 = vadd.f32 %v2039, %v2311
      %v2313 = vpop.f32.mrb[0].mxu0
      %v2314 = vadd.f32 %v2041, %v2313
      %v2315 = vpop.f32.mrb[0].mxu0
      %v2316 = vadd.f32 %v2043, %v2315
      %v2317 = vpop.f32.mrb[0].mxu0
      %v2318 = vadd.f32 %v2045, %v2317
      %2319 = vmatprep.mubr.bf16.mxu0 %v1498
      %2320 = vmatmul.mubr.bf16.gmra.mrb[0].mxu0 %v1497
      %v2321 = vpop.f32.mrb[0].mxu0
      %v2322 = vadd.f32 %v2049, %v2321
      %v2323 = vpop.f32.mrb[0].mxu0
      %v2324 = vadd.f32 %v2051, %v2323
      %v2325 = vpop.f32.mrb[0].mxu0
      %v2326 = vadd.f32 %v2053, %v2325
      %v2327 = vpop.f32.mrb[0].mxu0
      %v2328 = vadd.f32 %v2055, %v2327
      %2329 = vmatprep.mubr.bf16.mxu0 %v1500
      %2330 = vmatmul.mubr.bf16.gmra.mrb[0].mxu0 %v1499
      %v2331 = vpop.f32.mrb[0].mxu0
      %v2332 = vadd.f32 %v2059, %v2331
      %v2333 = vpop.f32.mrb[0].mxu0
      %v2334 = vadd.f32 %v2061, %v2333
      %v2335 = vpop.f32.mrb[0].mxu0
      %v2336 = vadd.f32 %v2063, %v2335
      %v2337 = vpop.f32.mrb[0].mxu0
      %v2338 = vadd.f32 %v2065, %v2337
      %2339 = vmatprep.mubr.bf16.mxu0 %v1502
      %2340 = vmatmul.mubr.bf16.gmra.mrb[0].mxu0 %v1501
      %v2341 = vpop.f32.mrb[0].mxu0
      %v2342 = vadd.f32 %v2069, %v2341
      %v2343 = vpop.f32.mrb[0].mxu0
      %v2344 = vadd.f32 %v2071, %v2343
      %v2345 = vpop.f32.mrb[0].mxu0
      %v2346 = vadd.f32 %v2073, %v2345
      %v2347 = vpop.f32.mrb[0].mxu0
      %v2348 = vadd.f32 %v2075, %v2347
      %2349 = vmatprep.mubr.bf16.mxu0 %v1504
      %2350 = vmatmul.mubr.bf16.gmra.mrb[0].mxu0 %v1503
      %v2351 = vpop.f32.mrb[0].mxu0
      %v2352 = vadd.f32 %v2079, %v2351
      %v2353 = vpop.f32.mrb[0].mxu0
      %v2354 = vadd.f32 %v2081, %v2353
      %v2355 = vpop.f32.mrb[0].mxu0
      %v2356 = vadd.f32 %v2083, %v2355
      %v2357 = vpop.f32.mrb[0].mxu0
      %v2358 = vadd.f32 %v2085, %v2357
      %2359 = vmatprep.mubr.bf16.mxu0 %v1506
      %2360 = vmatmul.mubr.bf16.gmra.mrb[0].mxu0 %v1505
      %v2361 = vpop.f32.mrb[0].mxu0
      %v2362 = vadd.f32 %v2089, %v2361
      %v2363 = vpop.f32.mrb[0].mxu0
      %v2364 = vadd.f32 %v2091, %v2363
      %v2365 = vpop.f32.mrb[0].mxu0
      %v2366 = vadd.f32 %v2093, %v2365
      %v2367 = vpop.f32.mrb[0].mxu0
      %v2368 = vadd.f32 %v2095, %v2367
      %2369 = vdwg.mxu0
      %v2370 = vld [vmem:[%s7] sm:$0x3]
      %v2372 = vlaneseq
      %v2373 = vshrl.u32 %v2372, 7
      %v2374 = vsub.s32 0, %v2373
      %v2375 = vrot.slane %v2370, %v2374
      %v2376 = vlaneseq
      %v2377 = vshrl.u32 %v2376, 7
      %v2378 = vsub.s32 1, %v2377
      %v2379 = vrot.slane %v2370, %v2378
      %v2382 = vadd.f32 %v2292, %v2375
      %v2383 = vadd.f32 %v2294, %v2379
      %v2384 = vadd.f32 %v2296, %v2375
      %v2385 = vadd.f32 %v2298, %v2379
      %v2386 = vadd.f32 %v2302, %v2375
      %v2387 = vadd.f32 %v2304, %v2379
      %v2388 = vadd.f32 %v2306, %v2375
      %v2389 = vadd.f32 %v2308, %v2379
      %v2390 = vadd.f32 %v2312, %v2375
      %v2391 = vadd.f32 %v2314, %v2379
      %v2392 = vadd.f32 %v2316, %v2375
      %v2393 = vadd.f32 %v2318, %v2379
      %v2394 = vadd.f32 %v2322, %v2375
      %v2395 = vadd.f32 %v2324, %v2379
      %v2396 = vadd.f32 %v2326, %v2375
      %v2397 = vadd.f32 %v2328, %v2379
      %v2398 = vadd.f32 %v2332, %v2375
      %v2399 = vadd.f32 %v2334, %v2379
      %v2400 = vadd.f32 %v2336, %v2375
      %v2401 = vadd.f32 %v2338, %v2379
      %v2402 = vadd.f32 %v2342, %v2375
      %v2403 = vadd.f32 %v2344, %v2379
      %v2404 = vadd.f32 %v2346, %v2375
      %v2405 = vadd.f32 %v2348, %v2379
      %v2406 = vadd.f32 %v2352, %v2375
      %v2407 = vadd.f32 %v2354, %v2379
      %v2408 = vadd.f32 %v2356, %v2375
      %v2409 = vadd.f32 %v2358, %v2379
      %v2410 = vadd.f32 %v2362, %v2375
      %v2411 = vadd.f32 %v2364, %v2379
      %v2412 = vadd.f32 %v2366, %v2375
      %v2413 = vadd.f32 %v2368, %v2379
      %vm2414 = vcmp.ge.f32.partialorder %v2382, 0.0
      %vm2415 = vcmp.ge.f32.partialorder %v2383, 0.0
      %vm2416 = vcmp.ge.f32.partialorder %v2384, 0.0
      %vm2417 = vcmp.ge.f32.partialorder %v2385, 0.0
      %vm2418 = vcmp.ge.f32.partialorder %v2386, 0.0
      %vm2419 = vcmp.ge.f32.partialorder %v2387, 0.0
      %vm2420 = vcmp.ge.f32.partialorder %v2388, 0.0
      %vm2421 = vcmp.ge.f32.partialorder %v2389, 0.0
      %vm2422 = vcmp.ge.f32.partialorder %v2390, 0.0
      %vm2423 = vcmp.ge.f32.partialorder %v2391, 0.0
      %vm2424 = vcmp.ge.f32.partialorder %v2392, 0.0
      %vm2425 = vcmp.ge.f32.partialorder %v2393, 0.0
      %vm2426 = vcmp.ge.f32.partialorder %v2394, 0.0
      %vm2427 = vcmp.ge.f32.partialorder %v2395, 0.0
      %vm2428 = vcmp.ge.f32.partialorder %v2396, 0.0
      %vm2429 = vcmp.ge.f32.partialorder %v2397, 0.0
      %vm2430 = vcmp.ge.f32.partialorder %v2398, 0.0
      %vm2431 = vcmp.ge.f32.partialorder %v2399, 0.0
      %vm2432 = vcmp.ge.f32.partialorder %v2400, 0.0
      %vm2433 = vcmp.ge.f32.partialorder %v2401, 0.0
      %vm2434 = vcmp.ge.f32.partialorder %v2402, 0.0
      %vm2435 = vcmp.ge.f32.partialorder %v2403, 0.0
      %vm2436 = vcmp.ge.f32.partialorder %v2404, 0.0
      %vm2437 = vcmp.ge.f32.partialorder %v2405, 0.0
      %vm2438 = vcmp.ge.f32.partialorder %v2406, 0.0
      %vm2439 = vcmp.ge.f32.partialorder %v2407, 0.0
      %vm2440 = vcmp.ge.f32.partialorder %v2408, 0.0
      %vm2441 = vcmp.ge.f32.partialorder %v2409, 0.0
      %vm2442 = vcmp.ge.f32.partialorder %v2410, 0.0
      %vm2443 = vcmp.ge.f32.partialorder %v2411, 0.0
      %vm2444 = vcmp.ge.f32.partialorder %v2412, 0.0
      %vm2445 = vcmp.ge.f32.partialorder %v2413, 0.0
      %v2446 = vmul.f32 %v2382, 0.01
      %v2447 = vmul.f32 %v2383, 0.01
      %v2448 = vmul.f32 %v2384, 0.01
      %v2449 = vmul.f32 %v2385, 0.01
      %v2450 = vmul.f32 %v2386, 0.01
      %v2451 = vmul.f32 %v2387, 0.01
      %v2452 = vmul.f32 %v2388, 0.01
      %v2453 = vmul.f32 %v2389, 0.01
      %v2454 = vmul.f32 %v2390, 0.01
      %v2455 = vmul.f32 %v2391, 0.01
      %v2456 = vmul.f32 %v2392, 0.01
      %v2457 = vmul.f32 %v2393, 0.01
      %v2458 = vmul.f32 %v2394, 0.01
      %v2459 = vmul.f32 %v2395, 0.01
      %v2460 = vmul.f32 %v2396, 0.01
      %v2461 = vmul.f32 %v2397, 0.01
      %v2462 = vmul.f32 %v2398, 0.01
      %v2463 = vmul.f32 %v2399, 0.01
      %v2464 = vmul.f32 %v2400, 0.01
      %v2465 = vmul.f32 %v2401, 0.01
      %v2466 = vmul.f32 %v2402, 0.01
      %v2467 = vmul.f32 %v2403, 0.01
      %v2468 = vmul.f32 %v2404, 0.01
      %v2469 = vmul.f32 %v2405, 0.01
      %v2470 = vmul.f32 %v2406, 0.01
      %v2471 = vmul.f32 %v2407, 0.01
      %v2472 = vmul.f32 %v2408, 0.01
      %v2473 = vmul.f32 %v2409, 0.01
      %v2474 = vmul.f32 %v2410, 0.01
      %v2475 = vmul.f32 %v2411, 0.01
      %v2476 = vmul.f32 %v2412, 0.01
      %v2477 = vmul.f32 %v2413, 0.01
      %v2478 = vsel %vm2414, %v2382, %v2446
      %v2479 = vsel %vm2415, %v2383, %v2447
      %v2480 = vsel %vm2416, %v2384, %v2448
      %v2481 = vsel %vm2417, %v2385, %v2449
      %v2482 = vsel %vm2418, %v2386, %v2450
      %v2483 = vsel %vm2419, %v2387, %v2451
      %v2484 = vsel %vm2420, %v2388, %v2452
      %v2485 = vsel %vm2421, %v2389, %v2453
      %v2486 = vsel %vm2422, %v2390, %v2454
      %v2487 = vsel %vm2423, %v2391, %v2455
      %v2488 = vsel %vm2424, %v2392, %v2456
      %v2489 = vsel %vm2425, %v2393, %v2457
      %v2490 = vsel %vm2426, %v2394, %v2458
      %v2491 = vsel %vm2427, %v2395, %v2459
      %v2492 = vsel %vm2428, %v2396, %v2460
      %v2493 = vsel %vm2429, %v2397, %v2461
      %v2494 = vsel %vm2430, %v2398, %v2462
      %v2495 = vsel %vm2431, %v2399, %v2463
      %v2496 = vsel %vm2432, %v2400, %v2464
      %v2497 = vsel %vm2433, %v2401, %v2465
      %v2498 = vsel %vm2434, %v2402, %v2466
      %v2499 = vsel %vm2435, %v2403, %v2467
      %v2500 = vsel %vm2436, %v2404, %v2468
      %v2501 = vsel %vm2437, %v2405, %v2469
      %v2502 = vsel %vm2438, %v2406, %v2470
      %v2503 = vsel %vm2439, %v2407, %v2471
      %v2504 = vsel %vm2440, %v2408, %v2472
      %v2505 = vsel %vm2441, %v2409, %v2473
      %v2506 = vsel %vm2442, %v2410, %v2474
      %v2507 = vsel %vm2443, %v2411, %v2475
      %v2508 = vsel %vm2444, %v2412, %v2476
      %v2509 = vsel %vm2445, %v2413, %v2477
      %v2510 = vpack.c.bf16 %v2480, %v2478
      %v2511 = vpack.c.bf16 %v2481, %v2479
      %v2512 = vpack.c.bf16 %v2484, %v2482
      %v2513 = vpack.c.bf16 %v2485, %v2483
      %v2514 = vpack.c.bf16 %v2488, %v2486
      %v2515 = vpack.c.bf16 %v2489, %v2487
      %v2516 = vpack.c.bf16 %v2492, %v2490
      %v2517 = vpack.c.bf16 %v2493, %v2491
      %v2518 = vpack.c.bf16 %v2496, %v2494
      %v2519 = vpack.c.bf16 %v2497, %v2495
      %v2520 = vpack.c.bf16 %v2500, %v2498
      %v2521 = vpack.c.bf16 %v2501, %v2499
      %v2522 = vpack.c.bf16 %v2504, %v2502
      %v2523 = vpack.c.bf16 %v2505, %v2503
      %v2524 = vpack.c.bf16 %v2508, %v2506
      %v2525 = vpack.c.bf16 %v2509, %v2507
      %v2526 = vld [vmem:[%s8] sm:$0xff]
      %v2527 = vld [vmem:[%s8 + $0x8] sm:$0xff]
      %v2528 = vld [vmem:[%s8 + $0x10] sm:$0xff]
      %v2529 = vld [vmem:[%s8 + $0x18] sm:$0xff]
      %v2530 = vld [vmem:[%s8 + $0x20] sm:$0xff]
      %v2531 = vld [vmem:[%s8 + $0x28] sm:$0xff]
      %v2532 = vld [vmem:[%s8 + $0x30] sm:$0xff]
      %v2533 = vld [vmem:[%s8 + $0x38] sm:$0xff]
      %v2534 = vld [vmem:[%s8 + $0x40] sm:$0xff]
      %v2535 = vld [vmem:[%s8 + $0x48] sm:$0xff]
      %v2536 = vld [vmem:[%s8 + $0x50] sm:$0xff]
      %v2537 = vld [vmem:[%s8 + $0x58] sm:$0xff]
      %v2538 = vld [vmem:[%s8 + $0x60] sm:$0xff]
      %v2539 = vld [vmem:[%s8 + $0x68] sm:$0xff]
      %v2540 = vld [vmem:[%s8 + $0x70] sm:$0xff]
      %v2541 = vld [vmem:[%s8 + $0x78] sm:$0xff]
      %v2542 = vld [vmem:[%s8 + $0x80] sm:$0xff]
      %v2543 = vld [vmem:[%s8 + $0x88] sm:$0xff]
      %v2544 = vld [vmem:[%s8 + $0x90] sm:$0xff]
      %v2545 = vld [vmem:[%s8 + $0x98] sm:$0xff]
      %v2546 = vld [vmem:[%s8 + $0xa0] sm:$0xff]
      %v2547 = vld [vmem:[%s8 + $0xa8] sm:$0xff]
      %v2548 = vld [vmem:[%s8 + $0xb0] sm:$0xff]
      %v2549 = vld [vmem:[%s8 + $0xb8] sm:$0xff]
      %v2550 = vld [vmem:[%s8 + $0xc0] sm:$0xff]
      %v2551 = vld [vmem:[%s8 + $0xc8] sm:$0xff]
      %v2552 = vld [vmem:[%s8 + $0xd0] sm:$0xff]
      %v2553 = vld [vmem:[%s8 + $0xd8] sm:$0xff]
      %v2554 = vld [vmem:[%s8 + $0xe0] sm:$0xff]
      %v2555 = vld [vmem:[%s8 + $0xe8] sm:$0xff]
      %v2556 = vld [vmem:[%s8 + $0xf0] sm:$0xff]
      %v2557 = vld [vmem:[%s8 + $0xf8] sm:$0xff]
      %v2558 = vld [vmem:[%s9] sm:$0x3]
      %v2560 = vlaneseq
      %v2561 = vshrl.u32 %v2560, 7
      %v2562 = vsub.s32 0, %v2561
      %v2563 = vrot.slane %v2558, %v2562
      %v2564 = vlaneseq
      %v2565 = vshrl.u32 %v2564, 7
      %v2566 = vsub.s32 1, %v2565
      %v2567 = vrot.slane %v2558, %v2566
      %v2602 = vunpack.c.l.b16 %v2526
      %v2603 = vunpack.c.h.b16 %v2526
      %v2604 = vunpack.c.l.b16 %v2527
      %v2605 = vunpack.c.h.b16 %v2527
      %v2606 = vunpack.c.l.b16 %v2528
      %v2607 = vunpack.c.h.b16 %v2528
      %v2608 = vunpack.c.l.b16 %v2529
      %v2609 = vunpack.c.h.b16 %v2529
      %v2610 = vunpack.c.l.b16 %v2530
      %v2611 = vunpack.c.h.b16 %v2530
      %v2612 = vunpack.c.l.b16 %v2531
      %v2613 = vunpack.c.h.b16 %v2531
      %v2614 = vunpack.c.l.b16 %v2532
      %v2615 = vunpack.c.h.b16 %v2532
      %v2616 = vunpack.c.l.b16 %v2533
      %v2617 = vunpack.c.h.b16 %v2533
      %v2618 = vunpack.c.l.b16 %v2534
      %v2619 = vunpack.c.h.b16 %v2534
      %v2620 = vunpack.c.l.b16 %v2535
      %v2621 = vunpack.c.h.b16 %v2535
      %v2622 = vunpack.c.l.b16 %v2536
      %v2623 = vunpack.c.h.b16 %v2536
      %v2624 = vunpack.c.l.b16 %v2537
      %v2625 = vunpack.c.h.b16 %v2537
      %v2626 = vunpack.c.l.b16 %v2538
      %v2627 = vunpack.c.h.b16 %v2538
      %v2628 = vunpack.c.l.b16 %v2539
      %v2629 = vunpack.c.h.b16 %v2539
      %v2630 = vunpack.c.l.b16 %v2540
      %v2631 = vunpack.c.h.b16 %v2540
      %v2632 = vunpack.c.l.b16 %v2541
      %v2633 = vunpack.c.h.b16 %v2541
      %v2634 = vunpack.c.l.b16 %v2542
      %v2635 = vunpack.c.h.b16 %v2542
      %v2636 = vunpack.c.l.b16 %v2543
      %v2637 = vunpack.c.h.b16 %v2543
      %v2638 = vunpack.c.l.b16 %v2544
      %v2639 = vunpack.c.h.b16 %v2544
      %v2640 = vunpack.c.l.b16 %v2545
      %v2641 = vunpack.c.h.b16 %v2545
      %v2642 = vunpack.c.l.b16 %v2546
      %v2643 = vunpack.c.h.b16 %v2546
      %v2644 = vunpack.c.l.b16 %v2547
      %v2645 = vunpack.c.h.b16 %v2547
      %v2646 = vunpack.c.l.b16 %v2548
      %v2647 = vunpack.c.h.b16 %v2548
      %v2648 = vunpack.c.l.b16 %v2549
      %v2649 = vunpack.c.h.b16 %v2549
      %v2650 = vunpack.c.l.b16 %v2550
      %v2651 = vunpack.c.h.b16 %v2550
      %v2652 = vunpack.c.l.b16 %v2551
      %v2653 = vunpack.c.h.b16 %v2551
      %v2654 = vunpack.c.l.b16 %v2552
      %v2655 = vunpack.c.h.b16 %v2552
      %v2656 = vunpack.c.l.b16 %v2553
      %v2657 = vunpack.c.h.b16 %v2553
      %v2658 = vunpack.c.l.b16 %v2554
      %v2659 = vunpack.c.h.b16 %v2554
      %v2660 = vunpack.c.l.b16 %v2555
      %v2661 = vunpack.c.h.b16 %v2555
      %v2662 = vunpack.c.l.b16 %v2556
      %v2663 = vunpack.c.h.b16 %v2556
      %v2664 = vunpack.c.l.b16 %v2557
      %v2665 = vunpack.c.h.b16 %v2557
      %v2666 = vpack.c.b16 %v2604, %v2602
      %v2667 = vpack.c.b16 %v2605, %v2603
      %v2668 = vpack.c.b16 %v2608, %v2606
      %v2669 = vpack.c.b16 %v2609, %v2607
      %v2670 = vpack.c.b16 %v2612, %v2610
      %v2671 = vpack.c.b16 %v2613, %v2611
      %v2672 = vpack.c.b16 %v2616, %v2614
      %v2673 = vpack.c.b16 %v2617, %v2615
      %v2674 = vpack.c.b16 %v2620, %v2618
      %v2675 = vpack.c.b16 %v2621, %v2619
      %v2676 = vpack.c.b16 %v2624, %v2622
      %v2677 = vpack.c.b16 %v2625, %v2623
      %v2678 = vpack.c.b16 %v2628, %v2626
      %v2679 = vpack.c.b16 %v2629, %v2627
      %v2680 = vpack.c.b16 %v2632, %v2630
      %v2681 = vpack.c.b16 %v2633, %v2631
      %v2682 = vpack.c.b16 %v2636, %v2634
      %v2683 = vpack.c.b16 %v2637, %v2635
      %v2684 = vpack.c.b16 %v2640, %v2638
      %v2685 = vpack.c.b16 %v2641, %v2639
      %v2686 = vpack.c.b16 %v2644, %v2642
      %v2687 = vpack.c.b16 %v2645, %v2643
      %v2688 = vpack.c.b16 %v2648, %v2646
      %v2689 = vpack.c.b16 %v2649, %v2647
      %v2690 = vpack.c.b16 %v2652, %v2650
      %v2691 = vpack.c.b16 %v2653, %v2651
      %v2692 = vpack.c.b16 %v2656, %v2654
      %v2693 = vpack.c.b16 %v2657, %v2655
      %v2694 = vpack.c.b16 %v2660, %v2658
      %v2695 = vpack.c.b16 %v2661, %v2659
      %v2696 = vpack.c.b16 %v2664, %v2662
      %v2697 = vpack.c.b16 %v2665, %v2663
      %2730 = vmatprep.subr.bf16.mxu0 %v2667
      %2731 = vmatpush1.bf16.msra.mxu0 %v2666
      %2732 = vmatprep.subr.bf16.mxu0 %v2669
      %2733 = vmatpush1.bf16.msra.mxu0 %v2668
      %2734 = vmatprep.subr.bf16.mxu0 %v2671
      %2735 = vmatpush1.bf16.msra.mxu0 %v2670
      %2736 = vmatprep.subr.bf16.mxu0 %v2673
      %2737 = vmatpush1.bf16.msra.mxu0 %v2672
      %2738 = vmatprep.subr.bf16.mxu0 %v2675
      %2739 = vmatpush1.bf16.msra.mxu0 %v2674
      %2740 = vmatprep.subr.bf16.mxu0 %v2677
      %2741 = vmatpush1.bf16.msra.mxu0 %v2676
      %2742 = vmatprep.subr.bf16.mxu0 %v2679
      %2743 = vmatpush1.bf16.msra.mxu0 %v2678
      %2744 = vmatprep.subr.bf16.mxu0 %v2681
      %2745 = vmatpush1.bf16.msra.mxu0 %v2680
      %2746 = vmatprep.subr.bf16.mxu0 %v2683
      %2747 = vmatpush1.bf16.msra.mxu0 %v2682
      %2748 = vmatprep.subr.bf16.mxu0 %v2685
      %2749 = vmatpush1.bf16.msra.mxu0 %v2684
      %2750 = vmatprep.subr.bf16.mxu0 %v2687
      %2751 = vmatpush1.bf16.msra.mxu0 %v2686
      %2752 = vmatprep.subr.bf16.mxu0 %v2689
      %2753 = vmatpush1.bf16.msra.mxu0 %v2688
      %2754 = vmatprep.subr.bf16.mxu0 %v2691
      %2755 = vmatpush1.bf16.msra.mxu0 %v2690
      %2756 = vmatprep.subr.bf16.mxu0 %v2693
      %2757 = vmatpush1.bf16.msra.mxu0 %v2692
      %2758 = vmatprep.subr.bf16.mxu0 %v2695
      %2759 = vmatpush1.bf16.msra.mxu0 %v2694
      %2760 = vmatprep.subr.bf16.mxu0 %v2697
      %2761 = vmatpush1.bf16.msra.mxu0 %v2696
      %2762 = vmatprep.mubr.bf16.mxu0 %v2511
      %2763 = vmatmul.mubr.bf16.gmra.mrb[0].mxu0 %v2510
      %v2764 = vpop.f32.mrb[0].mxu0
      %v2765 = vadd.f32 %v2563, %v2764
      %v2766 = vpop.f32.mrb[0].mxu0
      %v2767 = vadd.f32 %v2567, %v2766
      %v2768 = vpop.f32.mrb[0].mxu0
      %v2769 = vadd.f32 %v2563, %v2768
      %v2770 = vpop.f32.mrb[0].mxu0
      %v2771 = vadd.f32 %v2567, %v2770
      %2772 = vmatprep.mubr.bf16.mxu0 %v2513
      %2773 = vmatmul.mubr.bf16.gmra.mrb[0].mxu0 %v2512
      %v2774 = vpop.f32.mrb[0].mxu0
      %v2775 = vadd.f32 %v2563, %v2774
      %v2776 = vpop.f32.mrb[0].mxu0
      %v2777 = vadd.f32 %v2567, %v2776
      %v2778 = vpop.f32.mrb[0].mxu0
      %v2779 = vadd.f32 %v2563, %v2778
      %v2780 = vpop.f32.mrb[0].mxu0
      %v2781 = vadd.f32 %v2567, %v2780
      %2782 = vmatprep.mubr.bf16.mxu0 %v2515
      %2783 = vmatmul.mubr.bf16.gmra.mrb[0].mxu0 %v2514
      %v2784 = vpop.f32.mrb[0].mxu0
      %v2785 = vadd.f32 %v2563, %v2784
      %v2786 = vpop.f32.mrb[0].mxu0
      %v2787 = vadd.f32 %v2567, %v2786
      %v2788 = vpop.f32.mrb[0].mxu0
      %v2789 = vadd.f32 %v2563, %v2788
      %v2790 = vpop.f32.mrb[0].mxu0
      %v2791 = vadd.f32 %v2567, %v2790
      %2792 = vmatprep.mubr.bf16.mxu0 %v2517
      %2793 = vmatmul.mubr.bf16.gmra.mrb[0].mxu0 %v2516
      %v2794 = vpop.f32.mrb[0].mxu0
      %v2795 = vadd.f32 %v2563, %v2794
      %v2796 = vpop.f32.mrb[0].mxu0
      %v2797 = vadd.f32 %v2567, %v2796
      %v2798 = vpop.f32.mrb[0].mxu0
      %v2799 = vadd.f32 %v2563, %v2798
      %v2800 = vpop.f32.mrb[0].mxu0
      %v2801 = vadd.f32 %v2567, %v2800
      %2802 = vmatprep.mubr.bf16.mxu0 %v2519
      %2803 = vmatmul.mubr.bf16.gmra.mrb[0].mxu0 %v2518
      %v2804 = vpop.f32.mrb[0].mxu0
      %v2805 = vadd.f32 %v2563, %v2804
      %v2806 = vpop.f32.mrb[0].mxu0
      %v2807 = vadd.f32 %v2567, %v2806
      %v2808 = vpop.f32.mrb[0].mxu0
      %v2809 = vadd.f32 %v2563, %v2808
      %v2810 = vpop.f32.mrb[0].mxu0
      %v2811 = vadd.f32 %v2567, %v2810
      %2812 = vmatprep.mubr.bf16.mxu0 %v2521
      %2813 = vmatmul.mubr.bf16.gmra.mrb[0].mxu0 %v2520
      %v2814 = vpop.f32.mrb[0].mxu0
      %v2815 = vadd.f32 %v2563, %v2814
      %v2816 = vpop.f32.mrb[0].mxu0
      %v2817 = vadd.f32 %v2567, %v2816
      %v2818 = vpop.f32.mrb[0].mxu0
      %v2819 = vadd.f32 %v2563, %v2818
      %v2820 = vpop.f32.mrb[0].mxu0
      %v2821 = vadd.f32 %v2567, %v2820
      %2822 = vmatprep.mubr.bf16.mxu0 %v2523
      %2823 = vmatmul.mubr.bf16.gmra.mrb[0].mxu0 %v2522
      %v2824 = vpop.f32.mrb[0].mxu0
      %v2825 = vadd.f32 %v2563, %v2824
      %v2826 = vpop.f32.mrb[0].mxu0
      %v2827 = vadd.f32 %v2567, %v2826
      %v2828 = vpop.f32.mrb[0].mxu0
      %v2829 = vadd.f32 %v2563, %v2828
      %v2830 = vpop.f32.mrb[0].mxu0
      %v2831 = vadd.f32 %v2567, %v2830
      %2832 = vmatprep.mubr.bf16.mxu0 %v2525
      %2833 = vmatmul.mubr.bf16.gmra.mrb[0].mxu0 %v2524
      %v2834 = vpop.f32.mrb[0].mxu0
      %v2835 = vadd.f32 %v2563, %v2834
      %v2836 = vpop.f32.mrb[0].mxu0
      %v2837 = vadd.f32 %v2567, %v2836
      %v2838 = vpop.f32.mrb[0].mxu0
      %v2839 = vadd.f32 %v2563, %v2838
      %v2840 = vpop.f32.mrb[0].mxu0
      %v2841 = vadd.f32 %v2567, %v2840
      %2842 = vdwg.mxu0
      %vm2843 = vcmp.ge.f32.partialorder %v2765, 0.0
      %vm2844 = vcmp.ge.f32.partialorder %v2767, 0.0
      %vm2845 = vcmp.ge.f32.partialorder %v2769, 0.0
      %vm2846 = vcmp.ge.f32.partialorder %v2771, 0.0
      %vm2847 = vcmp.ge.f32.partialorder %v2775, 0.0
      %vm2848 = vcmp.ge.f32.partialorder %v2777, 0.0
      %vm2849 = vcmp.ge.f32.partialorder %v2779, 0.0
      %vm2850 = vcmp.ge.f32.partialorder %v2781, 0.0
      %vm2851 = vcmp.ge.f32.partialorder %v2785, 0.0
      %vm2852 = vcmp.ge.f32.partialorder %v2787, 0.0
      %vm2853 = vcmp.ge.f32.partialorder %v2789, 0.0
      %vm2854 = vcmp.ge.f32.partialorder %v2791, 0.0
      %vm2855 = vcmp.ge.f32.partialorder %v2795, 0.0
      %vm2856 = vcmp.ge.f32.partialorder %v2797, 0.0
      %vm2857 = vcmp.ge.f32.partialorder %v2799, 0.0
      %vm2858 = vcmp.ge.f32.partialorder %v2801, 0.0
      %vm2859 = vcmp.ge.f32.partialorder %v2805, 0.0
      %vm2860 = vcmp.ge.f32.partialorder %v2807, 0.0
      %vm2861 = vcmp.ge.f32.partialorder %v2809, 0.0
      %vm2862 = vcmp.ge.f32.partialorder %v2811, 0.0
      %vm2863 = vcmp.ge.f32.partialorder %v2815, 0.0
      %vm2864 = vcmp.ge.f32.partialorder %v2817, 0.0
      %vm2865 = vcmp.ge.f32.partialorder %v2819, 0.0
      %vm2866 = vcmp.ge.f32.partialorder %v2821, 0.0
      %vm2867 = vcmp.ge.f32.partialorder %v2825, 0.0
      %vm2868 = vcmp.ge.f32.partialorder %v2827, 0.0
      %vm2869 = vcmp.ge.f32.partialorder %v2829, 0.0
      %vm2870 = vcmp.ge.f32.partialorder %v2831, 0.0
      %vm2871 = vcmp.ge.f32.partialorder %v2835, 0.0
      %vm2872 = vcmp.ge.f32.partialorder %v2837, 0.0
      %vm2873 = vcmp.ge.f32.partialorder %v2839, 0.0
      %vm2874 = vcmp.ge.f32.partialorder %v2841, 0.0
      %v2875 = vmul.f32 %v2765, 0.01
      %v2876 = vmul.f32 %v2767, 0.01
      %v2877 = vmul.f32 %v2769, 0.01
      %v2878 = vmul.f32 %v2771, 0.01
      %v2879 = vmul.f32 %v2775, 0.01
      %v2880 = vmul.f32 %v2777, 0.01
      %v2881 = vmul.f32 %v2779, 0.01
      %v2882 = vmul.f32 %v2781, 0.01
      %v2883 = vmul.f32 %v2785, 0.01
      %v2884 = vmul.f32 %v2787, 0.01
      %v2885 = vmul.f32 %v2789, 0.01
      %v2886 = vmul.f32 %v2791, 0.01
      %v2887 = vmul.f32 %v2795, 0.01
      %v2888 = vmul.f32 %v2797, 0.01
      %v2889 = vmul.f32 %v2799, 0.01
      %v2890 = vmul.f32 %v2801, 0.01
      %v2891 = vmul.f32 %v2805, 0.01
      %v2892 = vmul.f32 %v2807, 0.01
      %v2893 = vmul.f32 %v2809, 0.01
      %v2894 = vmul.f32 %v2811, 0.01
      %v2895 = vmul.f32 %v2815, 0.01
      %v2896 = vmul.f32 %v2817, 0.01
      %v2897 = vmul.f32 %v2819, 0.01
      %v2898 = vmul.f32 %v2821, 0.01
      %v2899 = vmul.f32 %v2825, 0.01
      %v2900 = vmul.f32 %v2827, 0.01
      %v2901 = vmul.f32 %v2829, 0.01
      %v2902 = vmul.f32 %v2831, 0.01
      %v2903 = vmul.f32 %v2835, 0.01
      %v2904 = vmul.f32 %v2837, 0.01
      %v2905 = vmul.f32 %v2839, 0.01
      %v2906 = vmul.f32 %v2841, 0.01
      %v2907 = vsel %vm2843, %v2765, %v2875
      %v2908 = vsel %vm2844, %v2767, %v2876
      %v2909 = vsel %vm2845, %v2769, %v2877
      %v2910 = vsel %vm2846, %v2771, %v2878
      %v2911 = vsel %vm2847, %v2775, %v2879
      %v2912 = vsel %vm2848, %v2777, %v2880
      %v2913 = vsel %vm2849, %v2779, %v2881
      %v2914 = vsel %vm2850, %v2781, %v2882
      %v2915 = vsel %vm2851, %v2785, %v2883
      %v2916 = vsel %vm2852, %v2787, %v2884
      %v2917 = vsel %vm2853, %v2789, %v2885
      %v2918 = vsel %vm2854, %v2791, %v2886
      %v2919 = vsel %vm2855, %v2795, %v2887
      %v2920 = vsel %vm2856, %v2797, %v2888
      %v2921 = vsel %vm2857, %v2799, %v2889
      %v2922 = vsel %vm2858, %v2801, %v2890
      %v2923 = vsel %vm2859, %v2805, %v2891
      %v2924 = vsel %vm2860, %v2807, %v2892
      %v2925 = vsel %vm2861, %v2809, %v2893
      %v2926 = vsel %vm2862, %v2811, %v2894
      %v2927 = vsel %vm2863, %v2815, %v2895
      %v2928 = vsel %vm2864, %v2817, %v2896
      %v2929 = vsel %vm2865, %v2819, %v2897
      %v2930 = vsel %vm2866, %v2821, %v2898
      %v2931 = vsel %vm2867, %v2825, %v2899
      %v2932 = vsel %vm2868, %v2827, %v2900
      %v2933 = vsel %vm2869, %v2829, %v2901
      %v2934 = vsel %vm2870, %v2831, %v2902
      %v2935 = vsel %vm2871, %v2835, %v2903
      %v2936 = vsel %vm2872, %v2837, %v2904
      %v2937 = vsel %vm2873, %v2839, %v2905
      %v2938 = vsel %vm2874, %v2841, %v2906
      %v2939 = vpack.c.bf16 %v2909, %v2907
      %v2940 = vpack.c.bf16 %v2910, %v2908
      %v2941 = vpack.c.bf16 %v2913, %v2911
      %v2942 = vpack.c.bf16 %v2914, %v2912
      %v2943 = vpack.c.bf16 %v2917, %v2915
      %v2944 = vpack.c.bf16 %v2918, %v2916
      %v2945 = vpack.c.bf16 %v2921, %v2919
      %v2946 = vpack.c.bf16 %v2922, %v2920
      %v2947 = vpack.c.bf16 %v2925, %v2923
      %v2948 = vpack.c.bf16 %v2926, %v2924
      %v2949 = vpack.c.bf16 %v2929, %v2927
      %v2950 = vpack.c.bf16 %v2930, %v2928
      %v2951 = vpack.c.bf16 %v2933, %v2931
      %v2952 = vpack.c.bf16 %v2934, %v2932
      %v2953 = vpack.c.bf16 %v2937, %v2935
      %v2954 = vpack.c.bf16 %v2938, %v2936
      %v2971 = vunpack.c.l.b16 %v2939
      %v2972 = vunpack.c.l.b16 %v2940
      %v2973 = vunpack.c.h.b16 %v2939
      %v2974 = vunpack.c.h.b16 %v2940
      %v2975 = vunpack.c.l.b16 %v2941
      %v2976 = vunpack.c.l.b16 %v2942
      %v2977 = vunpack.c.h.b16 %v2941
      %v2978 = vunpack.c.h.b16 %v2942
      %v2979 = vunpack.c.l.b16 %v2943
      %v2980 = vunpack.c.l.b16 %v2944
      %v2981 = vunpack.c.h.b16 %v2943
      %v2982 = vunpack.c.h.b16 %v2944
      %v2983 = vunpack.c.l.b16 %v2945
      %v2984 = vunpack.c.l.b16 %v2946
      %v2985 = vunpack.c.h.b16 %v2945
      %v2986 = vunpack.c.h.b16 %v2946
      %v2987 = vunpack.c.l.b16 %v2947
      %v2988 = vunpack.c.l.b16 %v2948
      %v2989 = vunpack.c.h.b16 %v2947
      %v2990 = vunpack.c.h.b16 %v2948
      %v2991 = vunpack.c.l.b16 %v2949
      %v2992 = vunpack.c.l.b16 %v2950
      %v2993 = vunpack.c.h.b16 %v2949
      %v2994 = vunpack.c.h.b16 %v2950
      %v2995 = vunpack.c.l.b16 %v2951
      %v2996 = vunpack.c.l.b16 %v2952
      %v2997 = vunpack.c.h.b16 %v2951
      %v2998 = vunpack.c.h.b16 %v2952
      %v2999 = vunpack.c.l.b16 %v2953
      %v3000 = vunpack.c.l.b16 %v2954
      %v3001 = vunpack.c.h.b16 %v2953
      %v3002 = vunpack.c.h.b16 %v2954
      %v3003 = vpack.c.b16 %v2972, %v2971
      %v3004 = vpack.c.b16 %v2974, %v2973
      %v3005 = vpack.c.b16 %v2976, %v2975
      %v3006 = vpack.c.b16 %v2978, %v2977
      %v3007 = vpack.c.b16 %v2980, %v2979
      %v3008 = vpack.c.b16 %v2982, %v2981
      %v3009 = vpack.c.b16 %v2984, %v2983
      %v3010 = vpack.c.b16 %v2986, %v2985
      %v3011 = vpack.c.b16 %v2988, %v2987
      %v3012 = vpack.c.b16 %v2990, %v2989
      %v3013 = vpack.c.b16 %v2992, %v2991
      %v3014 = vpack.c.b16 %v2994, %v2993
      %v3015 = vpack.c.b16 %v2996, %v2995
      %v3016 = vpack.c.b16 %v2998, %v2997
      %v3017 = vpack.c.b16 %v3000, %v2999
      %v3018 = vpack.c.b16 %v3002, %v3001
      %3035 = vst [vmem:[%s515] sm:$0xff] %v3003
      %3036 = vst [vmem:[%s515 + $0x8] sm:$0xff] %v3004
      %3037 = vst [vmem:[%s515 + $0x10] sm:$0xff] %v3005
      %3038 = vst [vmem:[%s515 + $0x18] sm:$0xff] %v3006
      %3039 = vst [vmem:[%s515 + $0x20] sm:$0xff] %v3007
      %3040 = vst [vmem:[%s515 + $0x28] sm:$0xff] %v3008
      %3041 = vst [vmem:[%s515 + $0x30] sm:$0xff] %v3009
      %3042 = vst [vmem:[%s515 + $0x38] sm:$0xff] %v3010
      %3043 = vst [vmem:[%s515 + $0x40] sm:$0xff] %v3011
      %3044 = vst [vmem:[%s515 + $0x48] sm:$0xff] %v3012
      %3045 = vst [vmem:[%s515 + $0x50] sm:$0xff] %v3013
      %3046 = vst [vmem:[%s515 + $0x58] sm:$0xff] %v3014
      %3047 = vst [vmem:[%s515 + $0x60] sm:$0xff] %v3015
      %3048 = vst [vmem:[%s515 + $0x68] sm:$0xff] %v3016
      %3049 = vst [vmem:[%s515 + $0x70] sm:$0xff] %v3017
      %3050 = vst [vmem:[%s515 + $0x78] sm:$0xff] %v3018
      %v3051 = vld [vmem:[%s10] sm:$0xf]
      %v3052 = vld [vmem:[%s10 + $0x4] sm:$0xf]
      %v3053 = vld [vmem:[%s10 + $0x8] sm:$0xf]
      %v3054 = vld [vmem:[%s10 + $0xc] sm:$0xf]
      %v3055 = vld [vmem:[%s10 + $0x10] sm:$0xf]
      %v3056 = vld [vmem:[%s10 + $0x14] sm:$0xf]
      %v3057 = vld [vmem:[%s10 + $0x18] sm:$0xf]
      %v3058 = vld [vmem:[%s10 + $0x1c] sm:$0xf]
      %v3059 = vld [vmem:[%s10 + $0x20] sm:$0xf]
      %v3060 = vld [vmem:[%s10 + $0x24] sm:$0xf]
      %v3061 = vld [vmem:[%s10 + $0x28] sm:$0xf]
      %v3062 = vld [vmem:[%s10 + $0x2c] sm:$0xf]
      %v3063 = vld [vmem:[%s10 + $0x30] sm:$0xf]
      %v3064 = vld [vmem:[%s10 + $0x34] sm:$0xf]
      %v3065 = vld [vmem:[%s10 + $0x38] sm:$0xf]
      %v3066 = vld [vmem:[%s10 + $0x3c] sm:$0xf]
      %v3067 = vld [vmem:[%s10 + $0x40] sm:$0xf]
      %v3068 = vld [vmem:[%s10 + $0x44] sm:$0xf]
      %v3069 = vld [vmem:[%s10 + $0x48] sm:$0xf]
      %v3070 = vld [vmem:[%s10 + $0x4c] sm:$0xf]
      %v3071 = vld [vmem:[%s10 + $0x50] sm:$0xf]
      %v3072 = vld [vmem:[%s10 + $0x54] sm:$0xf]
      %v3073 = vld [vmem:[%s10 + $0x58] sm:$0xf]
      %v3074 = vld [vmem:[%s10 + $0x5c] sm:$0xf]
      %v3075 = vld [vmem:[%s10 + $0x60] sm:$0xf]
      %v3076 = vld [vmem:[%s10 + $0x64] sm:$0xf]
      %v3077 = vld [vmem:[%s10 + $0x68] sm:$0xf]
      %v3078 = vld [vmem:[%s10 + $0x6c] sm:$0xf]
      %v3079 = vld [vmem:[%s10 + $0x70] sm:$0xf]
      %v3080 = vld [vmem:[%s10 + $0x74] sm:$0xf]
      %v3081 = vld [vmem:[%s10 + $0x78] sm:$0xf]
      %v3082 = vld [vmem:[%s10 + $0x7c] sm:$0xf]
      %v3083 = vld [vmem:[%s11] sm:$0x1]
      %v3085 = vlaneseq
      %v3086 = vshrl.u32 %v3085, 7
      %v3087 = vsub.s32 0, %v3086
      %v3088 = vrot.slane %v3083, %v3087
      %v3122 = vunpack.c.l.b16 %v3051
      %v3123 = vunpack.c.l.b16 %v3052
      %v3124 = vunpack.c.l.b16 %v3053
      %v3125 = vunpack.c.l.b16 %v3054
      %v3126 = vunpack.c.l.b16 %v3055
      %v3127 = vunpack.c.l.b16 %v3056
      %v3128 = vunpack.c.l.b16 %v3057
      %v3129 = vunpack.c.l.b16 %v3058
      %v3130 = vunpack.c.l.b16 %v3059
      %v3131 = vunpack.c.l.b16 %v3060
      %v3132 = vunpack.c.l.b16 %v3061
      %v3133 = vunpack.c.l.b16 %v3062
      %v3134 = vunpack.c.l.b16 %v3063
      %v3135 = vunpack.c.l.b16 %v3064
      %v3136 = vunpack.c.l.b16 %v3065
      %v3137 = vunpack.c.l.b16 %v3066
      %v3138 = vunpack.c.l.b16 %v3067
      %v3139 = vunpack.c.l.b16 %v3068
      %v3140 = vunpack.c.l.b16 %v3069
      %v3141 = vunpack.c.l.b16 %v3070
      %v3142 = vunpack.c.l.b16 %v3071
      %v3143 = vunpack.c.l.b16 %v3072
      %v3144 = vunpack.c.l.b16 %v3073
      %v3145 = vunpack.c.l.b16 %v3074
      %v3146 = vunpack.c.l.b16 %v3075
      %v3147 = vunpack.c.l.b16 %v3076
      %v3148 = vunpack.c.l.b16 %v3077
      %v3149 = vunpack.c.l.b16 %v3078
      %v3150 = vunpack.c.l.b16 %v3079
      %v3151 = vunpack.c.l.b16 %v3080
      %v3152 = vunpack.c.l.b16 %v3081
      %v3153 = vunpack.c.l.b16 %v3082
      %v3154 = vpack.c.b16 %v3123, %v3122
      %v3155 = vpack.c.b16 %v3125, %v3124
      %v3156 = vpack.c.b16 %v3127, %v3126
      %v3157 = vpack.c.b16 %v3129, %v3128
      %v3158 = vpack.c.b16 %v3131, %v3130
      %v3159 = vpack.c.b16 %v3133, %v3132
      %v3160 = vpack.c.b16 %v3135, %v3134
      %v3161 = vpack.c.b16 %v3137, %v3136
      %v3162 = vpack.c.b16 %v3139, %v3138
      %v3163 = vpack.c.b16 %v3141, %v3140
      %v3164 = vpack.c.b16 %v3143, %v3142
      %v3165 = vpack.c.b16 %v3145, %v3144
      %v3166 = vpack.c.b16 %v3147, %v3146
      %v3167 = vpack.c.b16 %v3149, %v3148
      %v3168 = vpack.c.b16 %v3151, %v3150
      %v3169 = vpack.c.b16 %v3153, %v3152
      %3186 = vmatprep.subr.bf16.mxu0 0
      %3187 = vmatpush1.bf16.msra.mxu0 %v3154
      %3188 = vmatprep.subr.bf16.mxu0 0
      %3189 = vmatpush1.bf16.msra.mxu0 %v3155
      %3190 = vmatprep.subr.bf16.mxu0 0
      %3191 = vmatpush1.bf16.msra.mxu0 %v3156
      %3192 = vmatprep.subr.bf16.mxu0 0
      %3193 = vmatpush1.bf16.msra.mxu0 %v3157
      %3194 = vmatprep.subr.bf16.mxu0 0
      %3195 = vmatpush1.bf16.msra.mxu0 %v3158
      %3196 = vmatprep.subr.bf16.mxu0 0
      %3197 = vmatpush1.bf16.msra.mxu0 %v3159
      %3198 = vmatprep.subr.bf16.mxu0 0
      %3199 = vmatpush1.bf16.msra.mxu0 %v3160
      %3200 = vmatprep.subr.bf16.mxu0 0
      %3201 = vmatpush1.bf16.msra.mxu0 %v3161
      %3202 = vmatprep.subr.bf16.mxu0 0
      %3203 = vmatpush1.bf16.msra.mxu0 %v3162
      %3204 = vmatprep.subr.bf16.mxu0 0
      %3205 = vmatpush1.bf16.msra.mxu0 %v3163
      %3206 = vmatprep.subr.bf16.mxu0 0
      %3207 = vmatpush1.bf16.msra.mxu0 %v3164
      %3208 = vmatprep.subr.bf16.mxu0 0
      %3209 = vmatpush1.bf16.msra.mxu0 %v3165
      %3210 = vmatprep.subr.bf16.mxu0 0
      %3211 = vmatpush1.bf16.msra.mxu0 %v3166
      %3212 = vmatprep.subr.bf16.mxu0 0
      %3213 = vmatpush1.bf16.msra.mxu0 %v3167
      %3214 = vmatprep.subr.bf16.mxu0 0
      %3215 = vmatpush1.bf16.msra.mxu0 %v3168
      %3216 = vmatprep.subr.bf16.mxu0 0
      %3217 = vmatpush1.bf16.msra.mxu0 %v3169
      %3218 = vmatprep.mubr.bf16.mxu0 %v2940
      %3219 = vmatmul.mubr.bf16.gmra.mrb[0].mxu0 %v2939
      %v3220 = vpop.f32.mrb[0].mxu0
      %v3221 = vadd.f32 %v3088, %v3220
      %v3222 = vpop.f32.mrb[0].mxu0
      %v3223 = vpop.f32.mrb[0].mxu0
      %v3224 = vadd.f32 %v3088, %v3223
      %v3225 = vpop.f32.mrb[0].mxu0
      %3226 = vmatprep.mubr.bf16.mxu0 %v2942
      %3227 = vmatmul.mubr.bf16.gmra.mrb[0].mxu0 %v2941
      %v3228 = vpop.f32.mrb[0].mxu0
      %v3229 = vadd.f32 %v3088, %v3228
      %v3230 = vpop.f32.mrb[0].mxu0
      %v3231 = vpop.f32.mrb[0].mxu0
      %v3232 = vadd.f32 %v3088, %v3231
      %v3233 = vpop.f32.mrb[0].mxu0
      %3234 = vmatprep.mubr.bf16.mxu0 %v2944
      %3235 = vmatmul.mubr.bf16.gmra.mrb[0].mxu0 %v2943
      %v3236 = vpop.f32.mrb[0].mxu0
      %v3237 = vadd.f32 %v3088, %v3236
      %v3238 = vpop.f32.mrb[0].mxu0
      %v3239 = vpop.f32.mrb[0].mxu0
      %v3240 = vadd.f32 %v3088, %v3239
      %v3241 = vpop.f32.mrb[0].mxu0
      %3242 = vmatprep.mubr.bf16.mxu0 %v2946
      %3243 = vmatmul.mubr.bf16.gmra.mrb[0].mxu0 %v2945
      %v3244 = vpop.f32.mrb[0].mxu0
      %v3245 = vadd.f32 %v3088, %v3244
      %v3246 = vpop.f32.mrb[0].mxu0
      %v3247 = vpop.f32.mrb[0].mxu0
      %v3248 = vadd.f32 %v3088, %v3247
      %v3249 = vpop.f32.mrb[0].mxu0
      %3250 = vmatprep.mubr.bf16.mxu0 %v2948
      %3251 = vmatmul.mubr.bf16.gmra.mrb[0].mxu0 %v2947
      %v3252 = vpop.f32.mrb[0].mxu0
      %v3253 = vadd.f32 %v3088, %v3252
      %v3254 = vpop.f32.mrb[0].mxu0
      %v3255 = vpop.f32.mrb[0].mxu0
      %v3256 = vadd.f32 %v3088, %v3255
      %v3257 = vpop.f32.mrb[0].mxu0
      %3258 = vmatprep.mubr.bf16.mxu0 %v2950
      %3259 = vmatmul.mubr.bf16.gmra.mrb[0].mxu0 %v2949
      %v3260 = vpop.f32.mrb[0].mxu0
      %v3261 = vadd.f32 %v3088, %v3260
      %v3262 = vpop.f32.mrb[0].mxu0
      %v3263 = vpop.f32.mrb[0].mxu0
      %v3264 = vadd.f32 %v3088, %v3263
      %v3265 = vpop.f32.mrb[0].mxu0
      %3266 = vmatprep.mubr.bf16.mxu0 %v2952
      %3267 = vmatmul.mubr.bf16.gmra.mrb[0].mxu0 %v2951
      %v3268 = vpop.f32.mrb[0].mxu0
      %v3269 = vadd.f32 %v3088, %v3268
      %v3270 = vpop.f32.mrb[0].mxu0
      %v3271 = vpop.f32.mrb[0].mxu0
      %v3272 = vadd.f32 %v3088, %v3271
      %v3273 = vpop.f32.mrb[0].mxu0
      %3274 = vmatprep.mubr.bf16.mxu0 %v2954
      %3275 = vmatmul.mubr.bf16.gmra.mrb[0].mxu0 %v2953
      %v3276 = vpop.f32.mrb[0].mxu0
      %v3277 = vadd.f32 %v3088, %v3276
      %v3278 = vpop.f32.mrb[0].mxu0
      %v3279 = vpop.f32.mrb[0].mxu0
      %v3280 = vadd.f32 %v3088, %v3279
      %v3281 = vpop.f32.mrb[0].mxu0
      %3282 = vdwg.mxu0
      %v3283 = vpack.c.bf16 %v3224, %v3221
      %v3284 = vpack.c.bf16 %v3232, %v3229
      %v3285 = vpack.c.bf16 %v3240, %v3237
      %v3286 = vpack.c.bf16 %v3248, %v3245
      %v3287 = vpack.c.bf16 %v3256, %v3253
      %v3288 = vpack.c.bf16 %v3264, %v3261
      %v3289 = vpack.c.bf16 %v3272, %v3269
      %v3290 = vpack.c.bf16 %v3280, %v3277
      %v3299 = vunpack.c.l.b16 %v3283
      %v3300 = vunpack.c.h.b16 %v3283
      %v3301 = vunpack.c.l.b16 %v3284
      %v3302 = vunpack.c.h.b16 %v3284
      %v3303 = vunpack.c.l.b16 %v3285
      %v3304 = vunpack.c.h.b16 %v3285
      %v3305 = vunpack.c.l.b16 %v3286
      %v3306 = vunpack.c.h.b16 %v3286
      %v3307 = vunpack.c.l.b16 %v3287
      %v3308 = vunpack.c.h.b16 %v3287
      %v3309 = vunpack.c.l.b16 %v3288
      %v3310 = vunpack.c.h.b16 %v3288
      %v3311 = vunpack.c.l.b16 %v3289
      %v3312 = vunpack.c.h.b16 %v3289
      %v3313 = vunpack.c.l.b16 %v3290
      %v3314 = vunpack.c.h.b16 %v3290
      %v3315 = vpack.c.b16 %v3299, %v3299
      %v3316 = vpack.c.b16 %v3300, %v3300
      %v3317 = vpack.c.b16 %v3301, %v3301
      %v3318 = vpack.c.b16 %v3302, %v3302
      %v3319 = vpack.c.b16 %v3303, %v3303
      %v3320 = vpack.c.b16 %v3304, %v3304
      %v3321 = vpack.c.b16 %v3305, %v3305
      %v3322 = vpack.c.b16 %v3306, %v3306
      %v3323 = vpack.c.b16 %v3307, %v3307
      %v3324 = vpack.c.b16 %v3308, %v3308
      %v3325 = vpack.c.b16 %v3309, %v3309
      %v3326 = vpack.c.b16 %v3310, %v3310
      %v3327 = vpack.c.b16 %v3311, %v3311
      %v3328 = vpack.c.b16 %v3312, %v3312
      %v3329 = vpack.c.b16 %v3313, %v3313
      %v3330 = vpack.c.b16 %v3314, %v3314
      %3347 = vst [vmem:[%s525] sm:$0xf] %v3315
      %3348 = vst [vmem:[%s525 + $0x4] sm:$0xf] %v3316
      %3349 = vst [vmem:[%s525 + $0x8] sm:$0xf] %v3317
      %3350 = vst [vmem:[%s525 + $0xc] sm:$0xf] %v3318
      %3351 = vst [vmem:[%s525 + $0x10] sm:$0xf] %v3319
      %3352 = vst [vmem:[%s525 + $0x14] sm:$0xf] %v3320
      %3353 = vst [vmem:[%s525 + $0x18] sm:$0xf] %v3321
      %3354 = vst [vmem:[%s525 + $0x1c] sm:$0xf] %v3322
      %3355 = vst [vmem:[%s525 + $0x20] sm:$0xf] %v3323
      %3356 = vst [vmem:[%s525 + $0x24] sm:$0xf] %v3324
      %3357 = vst [vmem:[%s525 + $0x28] sm:$0xf] %v3325
      %3358 = vst [vmem:[%s525 + $0x2c] sm:$0xf] %v3326
      %3359 = vst [vmem:[%s525 + $0x30] sm:$0xf] %v3327
      %3360 = vst [vmem:[%s525 + $0x34] sm:$0xf] %v3328
      %3361 = vst [vmem:[%s525 + $0x38] sm:$0xf] %v3329
      %3362 = vst [vmem:[%s525 + $0x3c] sm:$0xf] %v3330
      %s3363 = smul.u32 %s29, 2
      %s3364 = sadd.s32 %s3363, %s30
      %s3365 = smul.u32 16, %s3364
      %p3366 = scmp.lt.s32.totalorder %s3365, 63
      %s3367 = scalar_select %p3366, %s3365, 63
      %s3368 = smul.addr %s3367, 2
      %s3369 = smul.addr %s3368, 4
      %s3370 = scalar_lea.vmem %s12, %s3369
      %s3371 = smul.u32 %s29, 2
      %s3372 = sadd.s32 %s3371, %s30
      %s3373 = smul.u32 16, %s3372
      %p3374 = scmp.lt.s32.totalorder %s3373, 63
      %s3375 = scalar_select %p3374, %s3373, 63
      %s3376 = smul.addr %s3375, 4
      %s3377 = scalar_lea.vmem %s13, %s3376
      // Predicated region
      $region69: #{decoder_forward.3} parent=67 // pred_check
        %p3378 = pneg %p325
      $region70: #{decoder_forward.3} parent=67 // pred_check_branch
        %3380 = sbr.rel (%p3378) target = $region72
      $region71: #{decoder_forward.3} parent=67 // pred_region
        %s3381 = smul.u32 %s29, 2
        %s3382 = sadd.s32 %s3381, %s30
        %s3383 = smul.u32 16, %s3382
      $region72: #{decoder_forward.3} parent=67 // pred_fallthru
        _
      // Predicated region
      $region73: #{decoder_forward.3} parent=67 // pred_check
        %p3384 = pneg %p355
      $region74: #{decoder_forward.3} parent=67 // pred_check_branch
        %3386 = sbr.rel (%p3384) target = $region76
      $region75: #{decoder_forward.3} parent=67 // pred_region
        %s3387 = smul.u32 %s29, 2
        %s3388 = sadd.s32 %s3387, %s30
        %s3389 = smul.u32 16, %s3388
      $region76: #{decoder_forward.3} parent=67 // pred_fallthru
        _
    $region68: #{decoder_forward.3} parent=5 // pred_fallthru
      _
    %p3390 = scmp.le.s32.totalorder 2, %s20
    // Predicated region
    $region77: #{decoder_forward.3} parent=5 // pred_check
      %p3391 = pneg %p3390
    $region78: #{decoder_forward.3} parent=5 // pred_check_branch
      %3393 = sbr.rel (%p3391) target = $region80
    $region79: #{decoder_forward.3} parent=5 // pred_region
      %s3394 = ssub.s32 %s20, 2
      // Predicated region
      $region81: #{decoder_forward.3} parent=79 // pred_check
        %p3395 = pneg %p331
      $region82: #{decoder_forward.3} parent=79 // pred_check_branch
        %3397 = sbr.rel (%p3395) target = $region84
      $region83: #{decoder_forward.3} parent=79 // pred_region
        %s3398 = smul.u32 %s31, 2
        %s3399 = sadd.s32 %s3398, %s32
        %s3400 = smul.u32 16, %s3399
        %p3401 = scmp.lt.s32.totalorder %s3400, 63
        %s3402 = scalar_select %p3401, %s3400, 63
        %s3403 = smul.addr %s3402, 2
        %s3404 = smul.addr %s3403, 4
        %s3405 = scalar_lea.vmem %s12, %s3404
      $region84: #{decoder_forward.3} parent=79 // pred_fallthru
        _
      // Predicated region
      $region85: #{decoder_forward.3} parent=79 // pred_check
        %p3406 = pneg %p361
      $region86: #{decoder_forward.3} parent=79 // pred_check_branch
        %3408 = sbr.rel (%p3406) target = $region88
      $region87: #{decoder_forward.3} parent=79 // pred_region
        %s3409 = smul.u32 %s31, 2
        %s3410 = sadd.s32 %s3409, %s32
        %s3411 = smul.u32 16, %s3410
        %p3412 = scmp.lt.s32.totalorder %s3411, 63
        %s3413 = scalar_select %p3412, %s3411, 63
        %s3414 = smul.addr %s3413, 4
        %s3415 = scalar_lea.vmem %s13, %s3414
      $region88: #{decoder_forward.3} parent=79 // pred_fallthru
        _
    $region80: #{decoder_forward.3} parent=5 // pred_fallthru
      _
  $region6: #{decoder_forward.3} parent=0 // loop_footer
    %s24 = sadd.s32 1, %s20
  $region7: #{decoder_forward.3} parent=0 // loop_footer_branch
    %19 = sbr.rel target = $region3
  $region8: #{decoder_forward.3} parent=0 // loop_exit
    _

</llo_original>
